<compile_context>
chip_gen: v7x
topology: tpu7x:2x2x1
jax: 0.10.0
libtpu: 0.0.40
codegen_flags: <defaults>
</compile_context>

<pallas_src>
import math

import jax
import jax.numpy as jnp
from jax.experimental import pallas as pl
from jax.experimental.pallas import tpu as pltpu


# --------------------------------------------------------------------------- #
# Kernel A: fused strided conv (im2col-free) + bias + BN partial statistics
# --------------------------------------------------------------------------- #
def _make_conv_stats_kernel(k, sw, TR, W_out, Cin, Cout, TMA):
    def kernel(xph_ref, w_ref, b_ref, z_ref, st_ref):
        # xph_ref: (sw, 1, Hp, Wph, Cin)  bf16   -- phase-split padded input, one batch elem
        # w_ref  : (k*k, Cin, Cout)       bf16   -- per-tap weights (resident)
        # b_ref  : (1, Cout)              f32
        # z_ref  : (TMA, Cout)            f32    -- conv output rows for this tile
        # st_ref : (1, 1, 2, Cout)        f32    -- [sum; sum_sq] partials for this tile
        h0 = pl.program_id(1) * TR
        acc = jnp.zeros((TMA, Cout), jnp.float32)
        for ky in range(k):
            for kx in range(k):
                ph = kx % sw          # which W-phase holds column stride_w*ow + kx
                dx = kx // sw         # offset inside that phase
                a = xph_ref[ph, 0, pl.ds(h0 + ky, TR), dx:dx + W_out, :]
                a = a.reshape(TMA, Cin)
                acc = acc + jnp.dot(a, w_ref[ky * k + kx],
                                    preferred_element_type=jnp.float32)
        acc = acc + b_ref[...]                                   # conv bias
        z_ref[...] = acc
        st_ref[0, 0] = jnp.concatenate(
            [jnp.sum(acc, axis=0, keepdims=True),
             jnp.sum(acc * acc, axis=0, keepdims=True)], axis=0)
    return kernel


# --------------------------------------------------------------------------- #
# Kernel B: fused BatchNorm-affine + PReLU epilogue (packed (3, C) params)
# --------------------------------------------------------------------------- #
def _bn_prelu_kernel(z_ref, p_ref, o_ref):
    z = z_ref[...]                               # (TMB, Cout) f32
    y = z * p_ref[0:1, :] + p_ref[1:2, :]        # scale, shift
    o_ref[...] = jnp.where(y > 0.0, y, p_ref[2:3, :] * y)


# --------------------------------------------------------------------------- #
# Module wrapper
# --------------------------------------------------------------------------- #
def subpixel_conv_block(x, params, *, kernel_size=3, scaling_factor=2,
                        stride=(1, 2), eps=1e-5):
    """Forward pass of SubPixelConvolutionalBlock (training-mode BatchNorm)."""
    N, Cin, H, W = x.shape
    w = params["conv_w"]            # (Cout_conv, Cin, k, k)
    b = params["conv_b"]            # (Cout_conv,)
    gamma = params["bn_gamma"]      # (C_bn,)
    beta = params["bn_beta"]        # (C_bn,)
    alpha = params["prelu_a"]       # scalar

    k = kernel_size
    r = scaling_factor
    sh, sw = stride
    # TODO(synk): only stride_h == 1 (the module default) is supported by this kernel path.
    assert sh == 1, "stride_h must be 1"
    pad = k // 2
    Cout = w.shape[0]
    C_bn = Cout // (r * r)

    H_out = (H + 2 * pad - k) // sh + 1
    W_out = (W + 2 * pad - k) // sw + 1
    Mrows = N * H_out * W_out

    # ---- single NCHW -> NHWC transpose at the boundary; zero pad ----
    xh = jnp.transpose(x, (0, 2, 3, 1))
    xp = jnp.pad(xh, ((0, 0), (pad, pad), (pad, pad), (0, 0)))
    Hp, Wp = H + 2 * pad, W + 2 * pad
    Wph = -(-Wp // sw)
    # De-interleave W into `sw` phases (one pass over the input, no k^2 inflation):
    # padded column stride_w*ow + kx lives in phase kx%sw at index ow + kx//sw.
    phases = []
    for p_ in range(sw):
        ph = xp[:, :, p_::sw, :]
        if ph.shape[2] < Wph:
            ph = jnp.pad(ph, ((0, 0), (0, 0), (0, Wph - ph.shape[2]), (0, 0)))
        phases.append(ph)
    xph = jnp.stack(phases, axis=0).astype(jnp.bfloat16)   # (sw, N, Hp, Wph, Cin)

    wt = jnp.transpose(w, (2, 3, 1, 0)).reshape(k * k, Cin, Cout).astype(jnp.bfloat16)
    b2 = b.reshape(1, Cout).astype(jnp.float32)

    # Row tiling over output rows (n, oh); full W_out kept per tile so output blocks
    # are (TR*W_out, Cout) with a lane-dense Cout (multiple of 128).
    TR = 1
    for t in range(1, H_out + 1):
        if H_out % t == 0 and t * W_out <= 512:
            TR = t
    num_h = H_out // TR
    TMA = TR * W_out

    flops = 2 * Mrows * (k * k * Cin) * Cout
    bytes_acc = (xph.size * 2 + wt.size * 2 + b2.size * 4
                 + Mrows * Cout * 4 + N * num_h * 2 * Cout * 4)

    conv_kernel = _make_conv_stats_kernel(k, sw, TR, W_out, Cin, Cout, TMA)
    z, st = pl.pallas_call(
        conv_kernel,
        out_shape=(jax.ShapeDtypeStruct((Mrows, Cout), jnp.float32),
                   jax.ShapeDtypeStruct((N, num_h, 2, Cout), jnp.float32)),
        grid=(N, num_h),
        in_specs=[
            pl.BlockSpec((sw, 1, Hp, Wph, Cin), lambda n, j: (0, n, 0, 0, 0)),
            pl.BlockSpec((k * k, Cin, Cout), lambda n, j: (0, 0, 0)),
            pl.BlockSpec((1, Cout), lambda n, j: (0, 0)),
        ],
        out_specs=(
            pl.BlockSpec((TMA, Cout), lambda n, j: (n * num_h + j, 0)),
            pl.BlockSpec((1, 1, 2, Cout), lambda n, j: (n, j, 0, 0)),
        ),
        compiler_params=pltpu.CompilerParams(
            dimension_semantics=("parallel", "arbitrary")),
        cost_estimate=pl.CostEstimate(flops=flops, transcendentals=0,
                                      bytes_accessed=bytes_acc),
    )(xph, wt, b2)

    # ---- BatchNorm batch statistics (training mode, biased variance), f32, from the
    #      fused partials.  Pixel shuffle maps conv channel c*r^2+q -> BN channel c,
    #      so pool contiguous groups of r^2 conv channels.
    tot = jnp.sum(st, axis=(0, 1))                          # (2, Cout)
    count = jnp.float32(Mrows * r * r)
    s1 = jnp.sum(tot[0].reshape(C_bn, r * r), axis=1)
    s2 = jnp.sum(tot[1].reshape(C_bn, r * r), axis=1)
    mean = s1 / count
    var = s2 / count - mean * mean
    inv = jax.lax.rsqrt(var + eps)
    scale_bn = gamma * inv
    shift_bn = beta - mean * scale_bn
    scale_c = jnp.repeat(scale_bn, r * r)                   # back to conv-channel domain
    shift_c = jnp.repeat(shift_bn, r * r)
    slope_c = jnp.broadcast_to(jnp.asarray(alpha, jnp.float32), (Cout,))
    packed = jnp.stack([scale_c, shift_c, slope_c], axis=0).astype(jnp.float32)  # (3, Cout)

    # ---- fused affine + PReLU: one read + one write of the conv output ----
    TMB = 1
    for t in range(1, Mrows + 1):
        if Mrows % t == 0 and t <= 1024:
            TMB = t
    act = pl.pallas_call(
        _bn_prelu_kernel,
        out_shape=jax.ShapeDtypeStruct((Mrows, Cout), jnp.float32),
        grid=(Mrows // TMB,),
        in_specs=[pl.BlockSpec((TMB, Cout), lambda i: (i, 0)),
                  pl.BlockSpec((3, Cout), lambda i: (0, 0))],
        out_specs=pl.BlockSpec((TMB, Cout), lambda i: (i, 0)),
        compiler_params=pltpu.CompilerParams(dimension_semantics=("parallel",)),
    )(z, packed)

    # ---- pixel shuffle (pure permutation of already-final values) + NCHW boundary ----
    y = act.reshape(N, H_out, W_out, C_bn, r, r)
    y = jnp.transpose(y, (0, 1, 4, 2, 5, 3)).reshape(N, H_out * r, W_out * r, C_bn)
    return jnp.transpose(y, (0, 3, 1, 2))


# --------------------------------------------------------------------------- #
# Pure-JAX reference (same bf16 operands / f32 accumulation for the conv)
# --------------------------------------------------------------------------- #
def reference_forward(x, params, *, kernel_size=3, scaling_factor=2,
                      stride=(1, 2), eps=1e-5):
    r = scaling_factor
    pad = kernel_size // 2
    conv = jax.lax.conv_general_dilated(
        x.astype(jnp.bfloat16), params["conv_w"].astype(jnp.bfloat16),
        window_strides=stride, padding=((pad, pad), (pad, pad)),
        dimension_numbers=("NCHW", "OIHW", "NCHW"),
        preferred_element_type=jnp.float32)
    conv = conv + params["conv_b"][None, :, None, None]
    N, C, Hc, Wc = conv.shape
    C_bn = C // (r * r)
    ps = conv.reshape(N, C_bn, r, r, Hc, Wc)
    ps = jnp.transpose(ps, (0, 1, 4, 2, 5, 3)).reshape(N, C_bn, Hc * r, Wc * r)
    mean = jnp.mean(ps, axis=(0, 2, 3))
    var = jnp.var(ps, axis=(0, 2, 3))
    xn = (ps - mean[None, :, None, None]) * jax.lax.rsqrt(var + eps)[None, :, None, None]
    bn = xn * params["bn_gamma"][None, :, None, None] + params["bn_beta"][None, :, None, None]
    return jnp.where(bn > 0, bn, params["prelu_a"] * bn)


if __name__ == "__main__":
    key = jax.random.PRNGKey(0)
    kw, kb, kg, kbe, kx = jax.random.split(key, 5)

    N, Cin, H, W = 2, 64, 16, 16          # module defaults: in_channels=64
    k, r, C_bn = 3, 2, 64
    Cout = C_bn * r * r                    # conv out channels = 256

    params = {
        "conv_w": jax.random.normal(kw, (Cout, Cin, k, k), jnp.float32) / math.sqrt(Cin * k * k),
        "conv_b": 0.1 * jax.random.normal(kb, (Cout,), jnp.float32),
        "bn_gamma": 1.0 + 0.1 * jax.random.normal(kg, (C_bn,), jnp.float32),
        "bn_beta": 0.1 * jax.random.normal(kbe, (C_bn,), jnp.float32),
        "prelu_a": jnp.float32(0.25),
    }
    x = jax.random.normal(kx, (N, Cin, H, W), jnp.float32)

    out = jax.jit(subpixel_conv_block)(x, params)
    out = jax.block_until_ready(out)

    W_out = (W + 2 * (k // 2) - k) // 2 + 1
    assert out.shape == (N, C_bn, H * r, W_out * r), out.shape
    assert bool(jnp.all(jnp.isfinite(out)))

    ref = jax.block_until_ready(jax.jit(reference_forward)(x, params))
    err = float(jnp.max(jnp.abs(out - ref)))
    assert err < 1e-2, f"max abs err vs reference: {err}"

    print("KERNEL_OK")
</pallas_src>

<mosaic_0001>
module attributes {stable_mosaic.version = 11 : i64} {
  func.func @kernel(%arg0: i32, %arg1: i32, %arg2: memref<2x1x18x9x64xbf16, #tpu.memory_space<vmem>>, %arg3: memref<9x64x256xbf16, #tpu.memory_space<vmem>>, %arg4: memref<1x256xf32, #tpu.memory_space<vmem>>, %arg5: memref<128x256xf32, #tpu.memory_space<vmem>>, %arg6: memref<1x1x2x256xf32, #tpu.memory_space<vmem>>) attributes {dimension_semantics = [#tpu.dimension_semantics<parallel>, #tpu.dimension_semantics<arbitrary>], iteration_bounds = array<i64: 2, 1>, scalar_prefetch = 0 : i64, scratch_operands = 0 : i64, tpu.core_type = #tpu.core_type<tc>, window_params = [{transform_indices = @transform_0, window_bounds = array<i64: 2, 1, 18, 9, 64>}, {pipeline_mode = #tpu.pipeline_mode<synchronous>, transform_indices = @transform_1, window_bounds = array<i64: 9, 64, 256>}, {pipeline_mode = #tpu.pipeline_mode<synchronous>, transform_indices = @transform_2, window_bounds = array<i64: 1, 256>}, {transform_indices = @transform_3, window_bounds = array<i64: 128, 256>}, {transform_indices = @transform_4, window_bounds = array<i64: 1, 1, 2, 256>}]} {
    %c16_i32 = arith.constant 16 : i32
    %0 = arith.muli %arg1, %c16_i32 : i32
    %cst = arith.constant 0.000000e+00 : f32
    %1 = vector.broadcast %cst : f32 to vector<128x256xf32>
    %c0_i32 = arith.constant 0 : i32
    %2 = arith.addi %0, %c0_i32 : i32
    %c0 = arith.constant 0 : index
    %c0_0 = arith.constant 0 : index
    %3 = arith.index_cast %2 : i32 to index
    %c0_1 = arith.constant 0 : index
    %c0_2 = arith.constant 0 : index
    %4 = vector.load %arg2[%c0, %c0_0, %3, %c0_1, %c0_2] : memref<2x1x18x9x64xbf16, #tpu.memory_space<vmem>>, vector<1x1x16x8x64xbf16>
    %5 = vector.shape_cast %4 : vector<1x1x16x8x64xbf16> to vector<16x8x64xbf16>
    %6 = vector.shape_cast %5 : vector<16x8x64xbf16> to vector<128x64xbf16>
    %c0_3 = arith.constant 0 : index
    %c0_4 = arith.constant 0 : index
    %c0_5 = arith.constant 0 : index
    %7 = vector.load %arg3[%c0_3, %c0_4, %c0_5] : memref<9x64x256xbf16, #tpu.memory_space<vmem>>, vector<1x64x256xbf16>
    %8 = vector.shape_cast %7 : vector<1x64x256xbf16> to vector<64x256xbf16>
    %cst_6 = arith.constant dense<0.000000e+00> : vector<128x256xf32>
    %9 = tpu.matmul %6, %8, %cst_6 {dimension_numbers = #tpu.dot_dimension_numbers<[1], [0], [0], [1], [0, 0, 1, 1], [], []>} : vector<128x64xbf16>, vector<64x256xbf16>, vector<128x256xf32> -> vector<128x256xf32>
    %10 = arith.addf %1, %9 : vector<128x256xf32>
    %c0_i32_7 = arith.constant 0 : i32
    %11 = arith.addi %0, %c0_i32_7 : i32
    %c1 = arith.constant 1 : index
    %c0_8 = arith.constant 0 : index
    %12 = arith.index_cast %11 : i32 to index
    %c0_9 = arith.constant 0 : index
    %c0_10 = arith.constant 0 : index
    %13 = vector.load %arg2[%c1, %c0_8, %12, %c0_9, %c0_10] : memref<2x1x18x9x64xbf16, #tpu.memory_space<vmem>>, vector<1x1x16x8x64xbf16>
    %14 = vector.shape_cast %13 : vector<1x1x16x8x64xbf16> to vector<16x8x64xbf16>
    %15 = vector.shape_cast %14 : vector<16x8x64xbf16> to vector<128x64xbf16>
    %c1_11 = arith.constant 1 : index
    %c0_12 = arith.constant 0 : index
    %c0_13 = arith.constant 0 : index
    %16 = vector.load %arg3[%c1_11, %c0_12, %c0_13] : memref<9x64x256xbf16, #tpu.memory_space<vmem>>, vector<1x64x256xbf16>
    %17 = vector.shape_cast %16 : vector<1x64x256xbf16> to vector<64x256xbf16>
    %cst_14 = arith.constant dense<0.000000e+00> : vector<128x256xf32>
    %18 = tpu.matmul %15, %17, %cst_14 {dimension_numbers = #tpu.dot_dimension_numbers<[1], [0], [0], [1], [0, 0, 1, 1], [], []>} : vector<128x64xbf16>, vector<64x256xbf16>, vector<128x256xf32> -> vector<128x256xf32>
    %19 = arith.addf %10, %18 : vector<128x256xf32>
    %c0_i32_15 = arith.constant 0 : i32
    %20 = arith.addi %0, %c0_i32_15 : i32
    %c0_16 = arith.constant 0 : index
    %c0_17 = arith.constant 0 : index
    %21 = arith.index_cast %20 : i32 to index
    %c1_18 = arith.constant 1 : index
    %c0_19 = arith.constant 0 : index
    %22 = vector.load %arg2[%c0_16, %c0_17, %21, %c1_18, %c0_19] : memref<2x1x18x9x64xbf16, #tpu.memory_space<vmem>>, vector<1x1x16x8x64xbf16>
    %23 = vector.shape_cast %22 : vector<1x1x16x8x64xbf16> to vector<16x8x64xbf16>
    %24 = vector.shape_cast %23 : vector<16x8x64xbf16> to vector<128x64xbf16>
    %c2 = arith.constant 2 : index
    %c0_20 = arith.constant 0 : index
    %c0_21 = arith.constant 0 : index
    %25 = vector.load %arg3[%c2, %c0_20, %c0_21] : memref<9x64x256xbf16, #tpu.memory_space<vmem>>, vector<1x64x256xbf16>
    %26 = vector.shape_cast %25 : vector<1x64x256xbf16> to vector<64x256xbf16>
    %cst_22 = arith.constant dense<0.000000e+00> : vector<128x256xf32>
    %27 = tpu.matmul %24, %26, %cst_22 {dimension_numbers = #tpu.dot_dimension_numbers<[1], [0], [0], [1], [0, 0, 1, 1], [], []>} : vector<128x64xbf16>, vector<64x256xbf16>, vector<128x256xf32> -> vector<128x256xf32>
    %28 = arith.addf %19, %27 : vector<128x256xf32>
    %c1_i32 = arith.constant 1 : i32
    %29 = arith.addi %0, %c1_i32 : i32
    %c0_23 = arith.constant 0 : index
    %c0_24 = arith.constant 0 : index
    %30 = arith.index_cast %29 : i32 to index
    %c0_25 = arith.constant 0 : index
    %c0_26 = arith.constant 0 : index
    %31 = vector.load %arg2[%c0_23, %c0_24, %30, %c0_25, %c0_26] : memref<2x1x18x9x64xbf16, #tpu.memory_space<vmem>>, vector<1x1x16x8x64xbf16>
    %32 = vector.shape_cast %31 : vector<1x1x16x8x64xbf16> to vector<16x8x64xbf16>
    %33 = vector.shape_cast %32 : vector<16x8x64xbf16> to vector<128x64xbf16>
    %c3 = arith.constant 3 : index
    %c0_27 = arith.constant 0 : index
    %c0_28 = arith.constant 0 : index
    %34 = vector.load %arg3[%c3, %c0_27, %c0_28] : memref<9x64x256xbf16, #tpu.memory_space<vmem>>, vector<1x64x256xbf16>
    %35 = vector.shape_cast %34 : vector<1x64x256xbf16> to vector<64x256xbf16>
    %cst_29 = arith.constant dense<0.000000e+00> : vector<128x256xf32>
    %36 = tpu.matmul %33, %35, %cst_29 {dimension_numbers = #tpu.dot_dimension_numbers<[1], [0], [0], [1], [0, 0, 1, 1], [], []>} : vector<128x64xbf16>, vector<64x256xbf16>, vector<128x256xf32> -> vector<128x256xf32>
    %37 = arith.addf %28, %36 : vector<128x256xf32>
    %c1_i32_30 = arith.constant 1 : i32
    %38 = arith.addi %0, %c1_i32_30 : i32
    %c1_31 = arith.constant 1 : index
    %c0_32 = arith.constant 0 : index
    %39 = arith.index_cast %38 : i32 to index
    %c0_33 = arith.constant 0 : index
    %c0_34 = arith.constant 0 : index
    %40 = vector.load %arg2[%c1_31, %c0_32, %39, %c0_33, %c0_34] : memref<2x1x18x9x64xbf16, #tpu.memory_space<vmem>>, vector<1x1x16x8x64xbf16>
    %41 = vector.shape_cast %40 : vector<1x1x16x8x64xbf16> to vector<16x8x64xbf16>
    %42 = vector.shape_cast %41 : vector<16x8x64xbf16> to vector<128x64xbf16>
    %c4 = arith.constant 4 : index
    %c0_35 = arith.constant 0 : index
    %c0_36 = arith.constant 0 : index
    %43 = vector.load %arg3[%c4, %c0_35, %c0_36] : memref<9x64x256xbf16, #tpu.memory_space<vmem>>, vector<1x64x256xbf16>
    %44 = vector.shape_cast %43 : vector<1x64x256xbf16> to vector<64x256xbf16>
    %cst_37 = arith.constant dense<0.000000e+00> : vector<128x256xf32>
    %45 = tpu.matmul %42, %44, %cst_37 {dimension_numbers = #tpu.dot_dimension_numbers<[1], [0], [0], [1], [0, 0, 1, 1], [], []>} : vector<128x64xbf16>, vector<64x256xbf16>, vector<128x256xf32> -> vector<128x256xf32>
    %46 = arith.addf %37, %45 : vector<128x256xf32>
    %c1_i32_38 = arith.constant 1 : i32
    %47 = arith.addi %0, %c1_i32_38 : i32
    %c0_39 = arith.constant 0 : index
    %c0_40 = arith.constant 0 : index
    %48 = arith.index_cast %47 : i32 to index
    %c1_41 = arith.constant 1 : index
    %c0_42 = arith.constant 0 : index
    %49 = vector.load %arg2[%c0_39, %c0_40, %48, %c1_41, %c0_42] : memref<2x1x18x9x64xbf16, #tpu.memory_space<vmem>>, vector<1x1x16x8x64xbf16>
    %50 = vector.shape_cast %49 : vector<1x1x16x8x64xbf16> to vector<16x8x64xbf16>
    %51 = vector.shape_cast %50 : vector<16x8x64xbf16> to vector<128x64xbf16>
    %c5 = arith.constant 5 : index
    %c0_43 = arith.constant 0 : index
    %c0_44 = arith.constant 0 : index
    %52 = vector.load %arg3[%c5, %c0_43, %c0_44] : memref<9x64x256xbf16, #tpu.memory_space<vmem>>, vector<1x64x256xbf16>
    %53 = vector.shape_cast %52 : vector<1x64x256xbf16> to vector<64x256xbf16>
    %cst_45 = arith.constant dense<0.000000e+00> : vector<128x256xf32>
    %54 = tpu.matmul %51, %53, %cst_45 {dimension_numbers = #tpu.dot_dimension_numbers<[1], [0], [0], [1], [0, 0, 1, 1], [], []>} : vector<128x64xbf16>, vector<64x256xbf16>, vector<128x256xf32> -> vector<128x256xf32>
    %55 = arith.addf %46, %54 : vector<128x256xf32>
    %c2_i32 = arith.constant 2 : i32
    %56 = arith.addi %0, %c2_i32 : i32
    %c0_46 = arith.constant 0 : index
    %c0_47 = arith.constant 0 : index
    %57 = arith.index_cast %56 : i32 to index
    %c0_48 = arith.constant 0 : index
    %c0_49 = arith.constant 0 : index
    %58 = vector.load %arg2[%c0_46, %c0_47, %57, %c0_48, %c0_49] : memref<2x1x18x9x64xbf16, #tpu.memory_space<vmem>>, vector<1x1x16x8x64xbf16>
    %59 = vector.shape_cast %58 : vector<1x1x16x8x64xbf16> to vector<16x8x64xbf16>
    %60 = vector.shape_cast %59 : vector<16x8x64xbf16> to vector<128x64xbf16>
    %c6 = arith.constant 6 : index
    %c0_50 = arith.constant 0 : index
    %c0_51 = arith.constant 0 : index
    %61 = vector.load %arg3[%c6, %c0_50, %c0_51] : memref<9x64x256xbf16, #tpu.memory_space<vmem>>, vector<1x64x256xbf16>
    %62 = vector.shape_cast %61 : vector<1x64x256xbf16> to vector<64x256xbf16>
    %cst_52 = arith.constant dense<0.000000e+00> : vector<128x256xf32>
    %63 = tpu.matmul %60, %62, %cst_52 {dimension_numbers = #tpu.dot_dimension_numbers<[1], [0], [0], [1], [0, 0, 1, 1], [], []>} : vector<128x64xbf16>, vector<64x256xbf16>, vector<128x256xf32> -> vector<128x256xf32>
    %64 = arith.addf %55, %63 : vector<128x256xf32>
    %c2_i32_53 = arith.constant 2 : i32
    %65 = arith.addi %0, %c2_i32_53 : i32
    %c1_54 = arith.constant 1 : index
    %c0_55 = arith.constant 0 : index
    %66 = arith.index_cast %65 : i32 to index
    %c0_56 = arith.constant 0 : index
    %c0_57 = arith.constant 0 : index
    %67 = vector.load %arg2[%c1_54, %c0_55, %66, %c0_56, %c0_57] : memref<2x1x18x9x64xbf16, #tpu.memory_space<vmem>>, vector<1x1x16x8x64xbf16>
    %68 = vector.shape_cast %67 : vector<1x1x16x8x64xbf16> to vector<16x8x64xbf16>
    %69 = vector.shape_cast %68 : vector<16x8x64xbf16> to vector<128x64xbf16>
    %c7 = arith.constant 7 : index
    %c0_58 = arith.constant 0 : index
    %c0_59 = arith.constant 0 : index
    %70 = vector.load %arg3[%c7, %c0_58, %c0_59] : memref<9x64x256xbf16, #tpu.memory_space<vmem>>, vector<1x64x256xbf16>
    %71 = vector.shape_cast %70 : vector<1x64x256xbf16> to vector<64x256xbf16>
    %cst_60 = arith.constant dense<0.000000e+00> : vector<128x256xf32>
    %72 = tpu.matmul %69, %71, %cst_60 {dimension_numbers = #tpu.dot_dimension_numbers<[1], [0], [0], [1], [0, 0, 1, 1], [], []>} : vector<128x64xbf16>, vector<64x256xbf16>, vector<128x256xf32> -> vector<128x256xf32>
    %73 = arith.addf %64, %72 : vector<128x256xf32>
    %c2_i32_61 = arith.constant 2 : i32
    %74 = arith.addi %0, %c2_i32_61 : i32
    %c0_62 = arith.constant 0 : index
    %c0_63 = arith.constant 0 : index
    %75 = arith.index_cast %74 : i32 to index
    %c1_64 = arith.constant 1 : index
    %c0_65 = arith.constant 0 : index
    %76 = vector.load %arg2[%c0_62, %c0_63, %75, %c1_64, %c0_65] : memref<2x1x18x9x64xbf16, #tpu.memory_space<vmem>>, vector<1x1x16x8x64xbf16>
    %77 = vector.shape_cast %76 : vector<1x1x16x8x64xbf16> to vector<16x8x64xbf16>
    %78 = vector.shape_cast %77 : vector<16x8x64xbf16> to vector<128x64xbf16>
    %c8 = arith.constant 8 : index
    %c0_66 = arith.constant 0 : index
    %c0_67 = arith.constant 0 : index
    %79 = vector.load %arg3[%c8, %c0_66, %c0_67] : memref<9x64x256xbf16, #tpu.memory_space<vmem>>, vector<1x64x256xbf16>
    %80 = vector.shape_cast %79 : vector<1x64x256xbf16> to vector<64x256xbf16>
    %cst_68 = arith.constant dense<0.000000e+00> : vector<128x256xf32>
    %81 = tpu.matmul %78, %80, %cst_68 {dimension_numbers = #tpu.dot_dimension_numbers<[1], [0], [0], [1], [0, 0, 1, 1], [], []>} : vector<128x64xbf16>, vector<64x256xbf16>, vector<128x256xf32> -> vector<128x256xf32>
    %82 = arith.addf %73, %81 : vector<128x256xf32>
    %c0_69 = arith.constant 0 : index
    %c0_70 = arith.constant 0 : index
    %83 = vector.load %arg4[%c0_69, %c0_70] : memref<1x256xf32, #tpu.memory_space<vmem>>, vector<1x256xf32>
    %84 = vector.broadcast %83 : vector<1x256xf32> to vector<128x256xf32>
    %85 = arith.addf %82, %84 : vector<128x256xf32>
    %c0_71 = arith.constant 0 : index
    %c0_72 = arith.constant 0 : index
    %86 = vector.load %arg5[%c0_71, %c0_72] : memref<128x256xf32, #tpu.memory_space<vmem>>, vector<128x256xf32>
    tpu.vector_store %arg5[%c0_71, %c0_72], %85 {strides = array<i32>} : memref<128x256xf32, #tpu.memory_space<vmem>>, vector<128x256xf32>,
    %cst_73 = arith.constant dense<0.000000e+00> : vector<256xf32>
    %87 = vector.multi_reduction <add>, %85, %cst_73 [0] : vector<128x256xf32> to vector<256xf32>
    %88 = vector.shape_cast %87 : vector<256xf32> to vector<1x256xf32>
    %89 = arith.mulf %85, %85 : vector<128x256xf32>
    %cst_74 = arith.constant dense<0.000000e+00> : vector<256xf32>
    %90 = vector.multi_reduction <add>, %89, %cst_74 [0] : vector<128x256xf32> to vector<256xf32>
    %91 = vector.shape_cast %90 : vector<256xf32> to vector<1x256xf32>
    %92 = tpu.concatenate %88, %91 in 0 : vector<1x256xf32>, vector<1x256xf32> -> vector<2x256xf32>
    %c0_75 = arith.constant 0 : index
    %c0_76 = arith.constant 0 : index
    %c0_77 = arith.constant 0 : index
    %c0_78 = arith.constant 0 : index
    %93 = vector.load %arg6[%c0_75, %c0_76, %c0_77, %c0_78] : memref<1x1x2x256xf32, #tpu.memory_space<vmem>>, vector<1x1x2x256xf32>
    %94 = vector.shape_cast %93 : vector<1x1x2x256xf32> to vector<2x256xf32>
    %95 = vector.shape_cast %92 : vector<2x256xf32> to vector<1x1x2x256xf32>
    tpu.vector_store %arg6[%c0_75, %c0_76, %c0_77, %c0_78], %95 {strides = array<i32>} : memref<1x1x2x256xf32, #tpu.memory_space<vmem>>, vector<1x1x2x256xf32>,
    return
  }
  func.func @transform_0(%arg0: i32, %arg1: i32) -> (i32, i32, i32, i32, i32) {
    %c0_i32 = arith.constant 0 : i32
    %c0_i32_0 = arith.constant 0 : i32
    %c0_i32_1 = arith.constant 0 : i32
    %c0_i32_2 = arith.constant 0 : i32
    %c0_i32_3 = arith.constant 0 : i32
    return %c0_i32, %arg0, %c0_i32_0, %c0_i32_1, %c0_i32_2 : i32, i32, i32, i32, i32
  }
  func.func @transform_1(%arg0: i32, %arg1: i32) -> (i32, i32, i32) {
    %c0_i32 = arith.constant 0 : i32
    %c0_i32_0 = arith.constant 0 : i32
    %c0_i32_1 = arith.constant 0 : i32
    %c0_i32_2 = arith.constant 0 : i32
    return %c0_i32, %c0_i32_0, %c0_i32_1 : i32, i32, i32
  }
  func.func @transform_2(%arg0: i32, %arg1: i32) -> (i32, i32) {
    %c0_i32 = arith.constant 0 : i32
    %c0_i32_0 = arith.constant 0 : i32
    %c0_i32_1 = arith.constant 0 : i32
    return %c0_i32, %c0_i32_0 : i32, i32
  }
  func.func @transform_3(%arg0: i32, %arg1: i32) -> (i32, i32) {
    %c1_i32 = arith.constant 1 : i32
    %0 = arith.muli %arg0, %c1_i32 : i32
    %1 = arith.addi %0, %arg1 : i32
    %c0_i32 = arith.constant 0 : i32
    %c0_i32_0 = arith.constant 0 : i32
    return %1, %c0_i32 : i32, i32
  }
  func.func @transform_4(%arg0: i32, %arg1: i32) -> (i32, i32, i32, i32) {
    %c0_i32 = arith.constant 0 : i32
    %c0_i32_0 = arith.constant 0 : i32
    %c0_i32_1 = arith.constant 0 : i32
    return %arg0, %arg1, %c0_i32, %c0_i32_0 : i32, i32, i32, i32
  }
}

module attributes {stable_mosaic.version = 11 : i64} {
  func.func @_bn_prelu_kernel(%arg0: i32, %arg1: memref<256x256xf32, #tpu.memory_space<vmem>>, %arg2: memref<3x256xf32, #tpu.memory_space<vmem>>, %arg3: memref<256x256xf32, #tpu.memory_space<vmem>>) attributes {dimension_semantics = [#tpu.dimension_semantics<parallel>], iteration_bounds = array<i64: 1>, scalar_prefetch = 0 : i64, scratch_operands = 0 : i64, tpu.core_type = #tpu.core_type<tc>, window_params = [{transform_indices = @transform_0, window_bounds = array<i64: 256, 256>}, {pipeline_mode = #tpu.pipeline_mode<synchronous>, transform_indices = @transform_1, window_bounds = array<i64: 3, 256>}, {transform_indices = @transform_2, window_bounds = array<i64: 256, 256>}]} {
    %c0 = arith.constant 0 : index
    %c0_0 = arith.constant 0 : index
    %0 = vector.load %arg1[%c0, %c0_0] : memref<256x256xf32, #tpu.memory_space<vmem>>, vector<256x256xf32>
    %c0_1 = arith.constant 0 : index
    %c0_2 = arith.constant 0 : index
    %1 = vector.load %arg2[%c0_1, %c0_2] : memref<3x256xf32, #tpu.memory_space<vmem>>, vector<1x256xf32>
    %2 = vector.broadcast %1 : vector<1x256xf32> to vector<256x256xf32>
    %3 = arith.mulf %0, %2 : vector<256x256xf32>
    %c1 = arith.constant 1 : index
    %c0_3 = arith.constant 0 : index
    %4 = vector.load %arg2[%c1, %c0_3] : memref<3x256xf32, #tpu.memory_space<vmem>>, vector<1x256xf32>
    %5 = vector.broadcast %4 : vector<1x256xf32> to vector<256x256xf32>
    %6 = arith.addf %3, %5 : vector<256x256xf32>
    %cst = arith.constant 0.000000e+00 : f32
    %7 = vector.broadcast %cst : f32 to vector<256x256xf32>
    %8 = arith.cmpf ogt, %6, %7 : vector<256x256xf32>
    %c2 = arith.constant 2 : index
    %c0_4 = arith.constant 0 : index
    %9 = vector.load %arg2[%c2, %c0_4] : memref<3x256xf32, #tpu.memory_space<vmem>>, vector<1x256xf32>
    %10 = vector.broadcast %9 : vector<1x256xf32> to vector<256x256xf32>
    %11 = arith.mulf %10, %6 : vector<256x256xf32>
    %12 = arith.select %8, %6, %11 : vector<256x256xi1>, vector<256x256xf32>
    %c0_5 = arith.constant 0 : index
    %c0_6 = arith.constant 0 : index
    %13 = vector.load %arg3[%c0_5, %c0_6] : memref<256x256xf32, #tpu.memory_space<vmem>>, vector<256x256xf32>
    tpu.vector_store %arg3[%c0_5, %c0_6], %12 {strides = array<i32>} : memref<256x256xf32, #tpu.memory_space<vmem>>, vector<256x256xf32>,
    return
  }
  func.func @transform_0(%arg0: i32) -> (i32, i32) {
    %c0_i32 = arith.constant 0 : i32
    %c0_i32_0 = arith.constant 0 : i32
    return %arg0, %c0_i32 : i32, i32
  }
  func.func @transform_1(%arg0: i32) -> (i32, i32) {
    %c0_i32 = arith.constant 0 : i32
    %c0_i32_0 = arith.constant 0 : i32
    %c0_i32_1 = arith.constant 0 : i32
    return %c0_i32, %c0_i32_0 : i32, i32
  }
  func.func @transform_2(%arg0: i32) -> (i32, i32) {
    %c0_i32 = arith.constant 0 : i32
    %c0_i32_0 = arith.constant 0 : i32
    return %arg0, %c0_i32 : i32, i32
  }
}

</mosaic_0001>

<llo_original>
// kernel: squeeze.2
$region0: #{squeeze.2}
  %s0 = inlined_call_operand.vmem [shape: f32[256], index: 0, kind: input, shape index: {}]
  %s1 = inlined_call_operand.vmem [shape: f32[64,4], index: 1, kind: output, shape index: {}]
  $region1: #{squeeze.2} parent=0
    #allocation0 [shape = 'u8[4096]{0}', space=vmem, size = 0x1000, scoped, tag = 'scoped mem for input reshape']
    %s3 = sshllo.u32 0, 2
    %v4 = vld [vmem:[%s0] sm:%s3]
    %5 = vst [vmem:[#allocation0] sm:%s3] %v4
    %v6 = vld [vmem:[#allocation0] sm:$0x3]
    %vm7 = vcmask 31744
    %8 = vst.msk [vmem:[%s1] sm:$0x1] %vm7, %v6
    %s9 = scalar_lea.vmem %s1, 31
    %10 = vst.msk [vmem:[%s9] sm:$0x2] %vm7, %v6
    %v11 = vld [vmem:[#allocation0] sm:$0x3]
    %12 = vrot.lane.b32.xlu0 %v11, 124
    %v13 = vpop.permute.xlu0 %12
    %vm14 = vcmask 31744
    %s15 = scalar_lea.vmem %s1, 1
    %16 = vst.msk [vmem:[%s15] sm:$0x1] %vm14, %v13
    %s17 = scalar_lea.vmem %s1, 32
    %18 = vst.msk [vmem:[%s17] sm:$0x2] %vm14, %v13
    %v19 = vld [vmem:[#allocation0] sm:$0x3]
    %20 = vrot.lane.b32.xlu0 %v19, 120
    %v21 = vpop.permute.xlu0 %20
    %vm22 = vcmask 31744
    %s23 = scalar_lea.vmem %s1, 2
    %24 = vst.msk [vmem:[%s23] sm:$0x1] %vm22, %v21
    %s25 = scalar_lea.vmem %s1, 33
    %26 = vst.msk [vmem:[%s25] sm:$0x2] %vm22, %v21
    %v27 = vld [vmem:[#allocation0] sm:$0x3]
    %28 = vrot.lane.b32.xlu0 %v27, 116
    %v29 = vpop.permute.xlu0 %28
    %vm30 = vcmask 31744
    %s31 = scalar_lea.vmem %s1, 3
    %32 = vst.msk [vmem:[%s31] sm:$0x1] %vm30, %v29
    %s33 = scalar_lea.vmem %s1, 34
    %34 = vst.msk [vmem:[%s33] sm:$0x2] %vm30, %v29
    %v35 = vld [vmem:[#allocation0] sm:$0x3]
    %36 = vrot.lane.b32.xlu0 %v35, 112
    %v37 = vpop.permute.xlu0 %36
    %vm38 = vcmask 31744
    %s39 = scalar_lea.vmem %s1, 4
    %40 = vst.msk [vmem:[%s39] sm:$0x1] %vm38, %v37
    %s41 = scalar_lea.vmem %s1, 35
    %42 = vst.msk [vmem:[%s41] sm:$0x2] %vm38, %v37
    %v43 = vld [vmem:[#allocation0] sm:$0x3]
    %44 = vrot.lane.b32.xlu0 %v43, 108
    %v45 = vpop.permute.xlu0 %44
    %vm46 = vcmask 31744
    %s47 = scalar_lea.vmem %s1, 5
    %48 = vst.msk [vmem:[%s47] sm:$0x1] %vm46, %v45
    %s49 = scalar_lea.vmem %s1, 36
    %50 = vst.msk [vmem:[%s49] sm:$0x2] %vm46, %v45
    %v51 = vld [vmem:[#allocation0] sm:$0x3]
    %52 = vrot.lane.b32.xlu0 %v51, 104
    %v53 = vpop.permute.xlu0 %52
    %vm54 = vcmask 31744
    %s55 = scalar_lea.vmem %s1, 6
    %56 = vst.msk [vmem:[%s55] sm:$0x1] %vm54, %v53
    %s57 = scalar_lea.vmem %s1, 37
    %58 = vst.msk [vmem:[%s57] sm:$0x2] %vm54, %v53
    %v59 = vld [vmem:[#allocation0] sm:$0x3]
    %60 = vrot.lane.b32.xlu0 %v59, 100
    %v61 = vpop.permute.xlu0 %60
    %vm62 = vcmask 31744
    %s63 = scalar_lea.vmem %s1, 7
    %64 = vst.msk [vmem:[%s63] sm:$0x1] %vm62, %v61
    %s65 = scalar_lea.vmem %s1, 38
    %66 = vst.msk [vmem:[%s65] sm:$0x2] %vm62, %v61
    %v67 = vld [vmem:[#allocation0] sm:$0x3]
    %68 = vrot.lane.b32.xlu0 %v67, 96
    %v69 = vpop.permute.xlu0 %68
    %vm70 = vcmask 31744
    %s71 = scalar_lea.vmem %s1, 8
    %72 = vst.msk [vmem:[%s71] sm:$0x1] %vm70, %v69
    %s73 = scalar_lea.vmem %s1, 39
    %74 = vst.msk [vmem:[%s73] sm:$0x2] %vm70, %v69
    %v75 = vld [vmem:[#allocation0] sm:$0x3]
    %76 = vrot.lane.b32.xlu0 %v75, 92
    %v77 = vpop.permute.xlu0 %76
    %vm78 = vcmask 31744
    %s79 = scalar_lea.vmem %s1, 9
    %80 = vst.msk [vmem:[%s79] sm:$0x1] %vm78, %v77
    %s81 = scalar_lea.vmem %s1, 40
    %82 = vst.msk [vmem:[%s81] sm:$0x2] %vm78, %v77
    %v83 = vld [vmem:[#allocation0] sm:$0x3]
    %84 = vrot.lane.b32.xlu0 %v83, 88
    %v85 = vpop.permute.xlu0 %84
    %vm86 = vcmask 31744
    %s87 = scalar_lea.vmem %s1, 10
    %88 = vst.msk [vmem:[%s87] sm:$0x1] %vm86, %v85
    %s89 = scalar_lea.vmem %s1, 41
    %90 = vst.msk [vmem:[%s89] sm:$0x2] %vm86, %v85
    %v91 = vld [vmem:[#allocation0] sm:$0x3]
    %92 = vrot.lane.b32.xlu0 %v91, 84
    %v93 = vpop.permute.xlu0 %92
    %vm94 = vcmask 31744
    %s95 = scalar_lea.vmem %s1, 11
    %96 = vst.msk [vmem:[%s95] sm:$0x1] %vm94, %v93
    %s97 = scalar_lea.vmem %s1, 42
    %98 = vst.msk [vmem:[%s97] sm:$0x2] %vm94, %v93
    %v99 = vld [vmem:[#allocation0] sm:$0x3]
    %100 = vrot.lane.b32.xlu0 %v99, 80
    %v101 = vpop.permute.xlu0 %100
    %vm102 = vcmask 31744
    %s103 = scalar_lea.vmem %s1, 12
    %104 = vst.msk [vmem:[%s103] sm:$0x1] %vm102, %v101
    %s105 = scalar_lea.vmem %s1, 43
    %106 = vst.msk [vmem:[%s105] sm:$0x2] %vm102, %v101
    %v107 = vld [vmem:[#allocation0] sm:$0x3]
    %108 = vrot.lane.b32.xlu0 %v107, 76
    %v109 = vpop.permute.xlu0 %108
    %vm110 = vcmask 31744
    %s111 = scalar_lea.vmem %s1, 13
    %112 = vst.msk [vmem:[%s111] sm:$0x1] %vm110, %v109
    %s113 = scalar_lea.vmem %s1, 44
    %114 = vst.msk [vmem:[%s113] sm:$0x2] %vm110, %v109
    %v115 = vld [vmem:[#allocation0] sm:$0x3]
    %116 = vrot.lane.b32.xlu0 %v115, 72
    %v117 = vpop.permute.xlu0 %116
    %vm118 = vcmask 31744
    %s119 = scalar_lea.vmem %s1, 14
    %120 = vst.msk [vmem:[%s119] sm:$0x1] %vm118, %v117
    %s121 = scalar_lea.vmem %s1, 45
    %122 = vst.msk [vmem:[%s121] sm:$0x2] %vm118, %v117
    %v123 = vld [vmem:[#allocation0] sm:$0x3]
    %124 = vrot.lane.b32.xlu0 %v123, 68
    %v125 = vpop.permute.xlu0 %124
    %vm126 = vcmask 31744
    %s127 = scalar_lea.vmem %s1, 15
    %128 = vst.msk [vmem:[%s127] sm:$0x1] %vm126, %v125
    %s129 = scalar_lea.vmem %s1, 46
    %130 = vst.msk [vmem:[%s129] sm:$0x2] %vm126, %v125
    %v131 = vld [vmem:[#allocation0] sm:$0x3]
    %132 = vrot.lane.b32.xlu0 %v131, 64
    %v133 = vpop.permute.xlu0 %132
    %vm134 = vcmask 31744
    %s135 = scalar_lea.vmem %s1, 16
    %136 = vst.msk [vmem:[%s135] sm:$0x1] %vm134, %v133
    %s137 = scalar_lea.vmem %s1, 47
    %138 = vst.msk [vmem:[%s137] sm:$0x2] %vm134, %v133
    %v139 = vld [vmem:[#allocation0] sm:$0x3]
    %140 = vrot.lane.b32.xlu0 %v139, 60
    %v141 = vpop.permute.xlu0 %140
    %vm142 = vcmask 31744
    %s143 = scalar_lea.vmem %s1, 17
    %144 = vst.msk [vmem:[%s143] sm:$0x1] %vm142, %v141
    %s145 = scalar_lea.vmem %s1, 48
    %146 = vst.msk [vmem:[%s145] sm:$0x2] %vm142, %v141
    %v147 = vld [vmem:[#allocation0] sm:$0x3]
    %148 = vrot.lane.b32.xlu0 %v147, 56
    %v149 = vpop.permute.xlu0 %148
    %vm150 = vcmask 31744
    %s151 = scalar_lea.vmem %s1, 18
    %152 = vst.msk [vmem:[%s151] sm:$0x1] %vm150, %v149
    %s153 = scalar_lea.vmem %s1, 49
    %154 = vst.msk [vmem:[%s153] sm:$0x2] %vm150, %v149
    %v155 = vld [vmem:[#allocation0] sm:$0x3]
    %156 = vrot.lane.b32.xlu0 %v155, 52
    %v157 = vpop.permute.xlu0 %156
    %vm158 = vcmask 31744
    %s159 = scalar_lea.vmem %s1, 19
    %160 = vst.msk [vmem:[%s159] sm:$0x1] %vm158, %v157
    %s161 = scalar_lea.vmem %s1, 50
    %162 = vst.msk [vmem:[%s161] sm:$0x2] %vm158, %v157
    %v163 = vld [vmem:[#allocation0] sm:$0x3]
    %164 = vrot.lane.b32.xlu0 %v163, 48
    %v165 = vpop.permute.xlu0 %164
    %vm166 = vcmask 31744
    %s167 = scalar_lea.vmem %s1, 20
    %168 = vst.msk [vmem:[%s167] sm:$0x1] %vm166, %v165
    %s169 = scalar_lea.vmem %s1, 51
    %170 = vst.msk [vmem:[%s169] sm:$0x2] %vm166, %v165
    %v171 = vld [vmem:[#allocation0] sm:$0x3]
    %172 = vrot.lane.b32.xlu0 %v171, 44
    %v173 = vpop.permute.xlu0 %172
    %vm174 = vcmask 31744
    %s175 = scalar_lea.vmem %s1, 21
    %176 = vst.msk [vmem:[%s175] sm:$0x1] %vm174, %v173
    %s177 = scalar_lea.vmem %s1, 52
    %178 = vst.msk [vmem:[%s177] sm:$0x2] %vm174, %v173
    %v179 = vld [vmem:[#allocation0] sm:$0x3]
    %180 = vrot.lane.b32.xlu0 %v179, 40
    %v181 = vpop.permute.xlu0 %180
    %vm182 = vcmask 31744
    %s183 = scalar_lea.vmem %s1, 22
    %184 = vst.msk [vmem:[%s183] sm:$0x1] %vm182, %v181
    %s185 = scalar_lea.vmem %s1, 53
    %186 = vst.msk [vmem:[%s185] sm:$0x2] %vm182, %v181
    %v187 = vld [vmem:[#allocation0] sm:$0x3]
    %188 = vrot.lane.b32.xlu0 %v187, 36
    %v189 = vpop.permute.xlu0 %188
    %vm190 = vcmask 31744
    %s191 = scalar_lea.vmem %s1, 23
    %192 = vst.msk [vmem:[%s191] sm:$0x1] %vm190, %v189
    %s193 = scalar_lea.vmem %s1, 54
    %194 = vst.msk [vmem:[%s193] sm:$0x2] %vm190, %v189
    %v195 = vld [vmem:[#allocation0] sm:$0x3]
    %196 = vrot.lane.b32.xlu0 %v195, 32
    %v197 = vpop.permute.xlu0 %196
    %vm198 = vcmask 31744
    %s199 = scalar_lea.vmem %s1, 24
    %200 = vst.msk [vmem:[%s199] sm:$0x1] %vm198, %v197
    %s201 = scalar_lea.vmem %s1, 55
    %202 = vst.msk [vmem:[%s201] sm:$0x2] %vm198, %v197
    %v203 = vld [vmem:[#allocation0] sm:$0x3]
    %204 = vrot.lane.b32.xlu0 %v203, 28
    %v205 = vpop.permute.xlu0 %204
    %vm206 = vcmask 31744
    %s207 = scalar_lea.vmem %s1, 25
    %208 = vst.msk [vmem:[%s207] sm:$0x1] %vm206, %v205
    %s209 = scalar_lea.vmem %s1, 56
    %210 = vst.msk [vmem:[%s209] sm:$0x2] %vm206, %v205
    %v211 = vld [vmem:[#allocation0] sm:$0x3]
    %212 = vrot.lane.b32.xlu0 %v211, 24
    %v213 = vpop.permute.xlu0 %212
    %vm214 = vcmask 31744
    %s215 = scalar_lea.vmem %s1, 26
    %216 = vst.msk [vmem:[%s215] sm:$0x1] %vm214, %v213
    %s217 = scalar_lea.vmem %s1, 57
    %218 = vst.msk [vmem:[%s217] sm:$0x2] %vm214, %v213
    %v219 = vld [vmem:[#allocation0] sm:$0x3]
    %220 = vrot.lane.b32.xlu0 %v219, 20
    %v221 = vpop.permute.xlu0 %220
    %vm222 = vcmask 31744
    %s223 = scalar_lea.vmem %s1, 27
    %224 = vst.msk [vmem:[%s223] sm:$0x1] %vm222, %v221
    %s225 = scalar_lea.vmem %s1, 58
    %226 = vst.msk [vmem:[%s225] sm:$0x2] %vm222, %v221
    %v227 = vld [vmem:[#allocation0] sm:$0x3]
    %228 = vrot.lane.b32.xlu0 %v227, 16
    %v229 = vpop.permute.xlu0 %228
    %vm230 = vcmask 31744
    %s231 = scalar_lea.vmem %s1, 28
    %232 = vst.msk [vmem:[%s231] sm:$0x1] %vm230, %v229
    %s233 = scalar_lea.vmem %s1, 59
    %234 = vst.msk [vmem:[%s233] sm:$0x2] %vm230, %v229
    %v235 = vld [vmem:[#allocation0] sm:$0x3]
    %236 = vrot.lane.b32.xlu0 %v235, 12
    %v237 = vpop.permute.xlu0 %236
    %vm238 = vcmask 31744
    %s239 = scalar_lea.vmem %s1, 29
    %240 = vst.msk [vmem:[%s239] sm:$0x1] %vm238, %v237
    %s241 = scalar_lea.vmem %s1, 60
    %242 = vst.msk [vmem:[%s241] sm:$0x2] %vm238, %v237
    %v243 = vld [vmem:[#allocation0] sm:$0x3]
    %244 = vrot.lane.b32.xlu0 %v243, 8
    %v245 = vpop.permute.xlu0 %244
    %vm246 = vcmask 31744
    %s247 = scalar_lea.vmem %s1, 30
    %248 = vst.msk [vmem:[%s247] sm:$0x1] %vm246, %v245
    %s249 = scalar_lea.vmem %s1, 61
    %250 = vst.msk [vmem:[%s249] sm:$0x2] %vm246, %v245
    %v251 = vld [vmem:[#allocation0] sm:$0x3]
    %252 = vrot.lane.b32.xlu0 %v251, 4
    %v253 = vpop.permute.xlu0 %252
    %vm254 = vcmask 31744
    %s255 = scalar_lea.vmem %s1, 31
    %256 = vst.msk [vmem:[%s255] sm:$0x1] %vm254, %v253
    %s257 = scalar_lea.vmem %s1, 62
    %258 = vst.msk [vmem:[%s257] sm:$0x2] %vm254, %v253

// kernel: subpixel_conv_block.3
$region0: #{subpixel_conv_block.3}
  #allocation0 [shape = 'u32[]', space=smem, size = 0x4, offset = 0x4, fixed_abs, tag = 'smem constant byte address 0x4 - core index']
  #allocation1 [shape = 'u32[144,128]{1,0:T(1,128)}', space=vmem, size = 0x12000, scoped, tag = 'internal scratch']
  %s0 = inlined_call_operand.vmem [shape: f32[256,256], index: 0, kind: input, shape index: {}]
  %s1 = inlined_call_operand.vmem [shape: f32[3,256], index: 1, kind: input, shape index: {}]
  %s2 = inlined_call_operand.vmem [shape: f32[256,256], index: 2, kind: output, shape index: {}]
  %s3 = sld [smem:[#allocation0]]
  $region18: #{subpixel_conv_block.3} parent=0
    _
  %s5 = ssub.s32 1, %s3
  %s6 = scalar_select 0, %s5, %s3
  // Predicated region
  $region2: #{subpixel_conv_block.3} parent=0 // pred_check
    _
  $region3: #{subpixel_conv_block.3} parent=0 // pred_check_branch
    %8 = sbr.rel (0) target = $region5
  $region4: #{subpixel_conv_block.3} parent=0 // pred_region
    _
  $region5: #{subpixel_conv_block.3} parent=0 // pred_fallthru
    _
  // Predicated region
  $region6: #{subpixel_conv_block.3} parent=0 // pred_check
    _
  $region7: #{subpixel_conv_block.3} parent=0 // pred_check_branch
    %10 = sbr.rel (0) target = $region9
  $region8: #{subpixel_conv_block.3} parent=0 // pred_region
    _
  $region9: #{subpixel_conv_block.3} parent=0 // pred_fallthru
    _
  %v11 = vld [vmem:[%s0] sm:$0xff]
  %v12 = vld [vmem:[%s0 + $0x8] sm:$0xff]
  %v13 = vld [vmem:[%s0 + $0x10] sm:$0xff]
  %v14 = vld [vmem:[%s0 + $0x18] sm:$0xff]
  %v15 = vld [vmem:[%s0 + $0x20] sm:$0xff]
  %v16 = vld [vmem:[%s0 + $0x28] sm:$0xff]
  %v17 = vld [vmem:[%s0 + $0x30] sm:$0xff]
  %v18 = vld [vmem:[%s0 + $0x38] sm:$0xff]
  %v19 = vld [vmem:[%s0 + $0x40] sm:$0xff]
  %v20 = vld [vmem:[%s0 + $0x48] sm:$0xff]
  %v21 = vld [vmem:[%s0 + $0x50] sm:$0xff]
  %v22 = vld [vmem:[%s0 + $0x58] sm:$0xff]
  %v23 = vld [vmem:[%s0 + $0x60] sm:$0xff]
  %v24 = vld [vmem:[%s0 + $0x68] sm:$0xff]
  %v25 = vld [vmem:[%s0 + $0x70] sm:$0xff]
  %v26 = vld [vmem:[%s0 + $0x78] sm:$0xff]
  %v27 = vld [vmem:[%s0 + $0x80] sm:$0xff]
  %v28 = vld [vmem:[%s0 + $0x88] sm:$0xff]
  %v29 = vld [vmem:[%s0 + $0x90] sm:$0xff]
  %v30 = vld [vmem:[%s0 + $0x98] sm:$0xff]
  %v31 = vld [vmem:[%s0 + $0xa0] sm:$0xff]
  %v32 = vld [vmem:[%s0 + $0xa8] sm:$0xff]
  %v33 = vld [vmem:[%s0 + $0xb0] sm:$0xff]
  %v34 = vld [vmem:[%s0 + $0xb8] sm:$0xff]
  %v35 = vld [vmem:[%s0 + $0xc0] sm:$0xff]
  %v36 = vld [vmem:[%s0 + $0xc8] sm:$0xff]
  %v37 = vld [vmem:[%s0 + $0xd0] sm:$0xff]
  %v38 = vld [vmem:[%s0 + $0xd8] sm:$0xff]
  %v39 = vld [vmem:[%s0 + $0xe0] sm:$0xff]
  %v40 = vld [vmem:[%s0 + $0xe8] sm:$0xff]
  %v41 = vld [vmem:[%s0 + $0xf0] sm:$0xff]
  %v42 = vld [vmem:[%s0 + $0xf8] sm:$0xff]
  %v43 = vld [vmem:[%s0 + $0x100] sm:$0xff]
  %v44 = vld [vmem:[%s0 + $0x108] sm:$0xff]
  %v45 = vld [vmem:[%s0 + $0x110] sm:$0xff]
  %v46 = vld [vmem:[%s0 + $0x118] sm:$0xff]
  %v47 = vld [vmem:[%s0 + $0x120] sm:$0xff]
  %v48 = vld [vmem:[%s0 + $0x128] sm:$0xff]
  %v49 = vld [vmem:[%s0 + $0x130] sm:$0xff]
  %v50 = vld [vmem:[%s0 + $0x138] sm:$0xff]
  %v51 = vld [vmem:[%s0 + $0x140] sm:$0xff]
  %v52 = vld [vmem:[%s0 + $0x148] sm:$0xff]
  %v53 = vld [vmem:[%s0 + $0x150] sm:$0xff]
  %v54 = vld [vmem:[%s0 + $0x158] sm:$0xff]
  %v55 = vld [vmem:[%s0 + $0x160] sm:$0xff]
  %v56 = vld [vmem:[%s0 + $0x168] sm:$0xff]
  %v57 = vld [vmem:[%s0 + $0x170] sm:$0xff]
  %v58 = vld [vmem:[%s0 + $0x178] sm:$0xff]
  %v59 = vld [vmem:[%s0 + $0x180] sm:$0xff]
  %v60 = vld [vmem:[%s0 + $0x188] sm:$0xff]
  %v61 = vld [vmem:[%s0 + $0x190] sm:$0xff]
  %v62 = vld [vmem:[%s0 + $0x198] sm:$0xff]
  %v63 = vld [vmem:[%s0 + $0x1a0] sm:$0xff]
  %v64 = vld [vmem:[%s0 + $0x1a8] sm:$0xff]
  %v65 = vld [vmem:[%s0 + $0x1b0] sm:$0xff]
  %v66 = vld [vmem:[%s0 + $0x1b8] sm:$0xff]
  %v67 = vld [vmem:[%s0 + $0x1c0] sm:$0xff]
  %v68 = vld [vmem:[%s0 + $0x1c8] sm:$0xff]
  %v69 = vld [vmem:[%s0 + $0x1d0] sm:$0xff]
  %v70 = vld [vmem:[%s0 + $0x1d8] sm:$0xff]
  %v71 = vld [vmem:[%s0 + $0x1e0] sm:$0xff]
  %v72 = vld [vmem:[%s0 + $0x1e8] sm:$0xff]
  %v73 = vld [vmem:[%s0 + $0x1f0] sm:$0xff]
  %v74 = vld [vmem:[%s0 + $0x1f8] sm:$0xff]
  %v75 = vld [vmem:[%s1] ss:$4 sm:$0x3]
  %v77 = vlaneseq
  %v78 = vshrl.u32 %v77, 7
  %v79 = vsub.s32 0, %v78
  %v80 = vrot.slane %v75, %v79
  %v81 = vlaneseq
  %v82 = vshrl.u32 %v81, 7
  %v83 = vsub.s32 1, %v82
  %v84 = vrot.slane %v75, %v83
  %v87 = vmul.f32 %v11, %v80
  %v88 = vmul.f32 %v12, %v84
  %v89 = vmul.f32 %v13, %v80
  %v90 = vmul.f32 %v14, %v84
  %v91 = vmul.f32 %v15, %v80
  %v92 = vmul.f32 %v16, %v84
  %v93 = vmul.f32 %v17, %v80
  %v94 = vmul.f32 %v18, %v84
  %v95 = vmul.f32 %v19, %v80
  %v96 = vmul.f32 %v20, %v84
  %v97 = vmul.f32 %v21, %v80
  %v98 = vmul.f32 %v22, %v84
  %v99 = vmul.f32 %v23, %v80
  %v100 = vmul.f32 %v24, %v84
  %v101 = vmul.f32 %v25, %v80
  %v102 = vmul.f32 %v26, %v84
  %v103 = vmul.f32 %v27, %v80
  %v104 = vmul.f32 %v28, %v84
  %v105 = vmul.f32 %v29, %v80
  %v106 = vmul.f32 %v30, %v84
  %v107 = vmul.f32 %v31, %v80
  %v108 = vmul.f32 %v32, %v84
  %v109 = vmul.f32 %v33, %v80
  %v110 = vmul.f32 %v34, %v84
  %v111 = vmul.f32 %v35, %v80
  %v112 = vmul.f32 %v36, %v84
  %v113 = vmul.f32 %v37, %v80
  %v114 = vmul.f32 %v38, %v84
  %v115 = vmul.f32 %v39, %v80
  %v116 = vmul.f32 %v40, %v84
  %v117 = vmul.f32 %v41, %v80
  %v118 = vmul.f32 %v42, %v84
  %v119 = vmul.f32 %v43, %v80
  %v120 = vmul.f32 %v44, %v84
  %v121 = vmul.f32 %v45, %v80
  %v122 = vmul.f32 %v46, %v84
  %v123 = vmul.f32 %v47, %v80
  %v124 = vmul.f32 %v48, %v84
  %v125 = vmul.f32 %v49, %v80
  %v126 = vmul.f32 %v50, %v84
  %v127 = vmul.f32 %v51, %v80
  %v128 = vmul.f32 %v52, %v84
  %v129 = vmul.f32 %v53, %v80
  %v130 = vmul.f32 %v54, %v84
  %v131 = vmul.f32 %v55, %v80
  %v132 = vmul.f32 %v56, %v84
  %v133 = vmul.f32 %v57, %v80
  %v134 = vmul.f32 %v58, %v84
  %v135 = vmul.f32 %v59, %v80
  %v136 = vmul.f32 %v60, %v84
  %v137 = vmul.f32 %v61, %v80
  %v138 = vmul.f32 %v62, %v84
  %v139 = vmul.f32 %v63, %v80
  %v140 = vmul.f32 %v64, %v84
  %v141 = vmul.f32 %v65, %v80
  %v142 = vmul.f32 %v66, %v84
  %v143 = vmul.f32 %v67, %v80
  %v144 = vmul.f32 %v68, %v84
  %v145 = vmul.f32 %v69, %v80
  %v146 = vmul.f32 %v70, %v84
  %v147 = vmul.f32 %v71, %v80
  %v148 = vmul.f32 %v72, %v84
  %v149 = vmul.f32 %v73, %v80
  %v150 = vmul.f32 %v74, %v84
  %s151 = scalar_lea.vmem %s1, 1
  %v152 = vld [vmem:[%s151] ss:$4 sm:$0x3]
  %v154 = vlaneseq
  %v155 = vshrl.u32 %v154, 7
  %v156 = vsub.s32 0, %v155
  %v157 = vrot.slane %v152, %v156
  %v158 = vlaneseq
  %v159 = vshrl.u32 %v158, 7
  %v160 = vsub.s32 1, %v159
  %v161 = vrot.slane %v152, %v160
  %v164 = vadd.f32 %v87, %v157
  %v165 = vadd.f32 %v88, %v161
  %v166 = vadd.f32 %v89, %v157
  %v167 = vadd.f32 %v90, %v161
  %v168 = vadd.f32 %v91, %v157
  %v169 = vadd.f32 %v92, %v161
  %v170 = vadd.f32 %v93, %v157
  %v171 = vadd.f32 %v94, %v161
  %v172 = vadd.f32 %v95, %v157
  %v173 = vadd.f32 %v96, %v161
  %v174 = vadd.f32 %v97, %v157
  %v175 = vadd.f32 %v98, %v161
  %v176 = vadd.f32 %v99, %v157
  %v177 = vadd.f32 %v100, %v161
  %v178 = vadd.f32 %v101, %v157
  %v179 = vadd.f32 %v102, %v161
  %v180 = vadd.f32 %v103, %v157
  %v181 = vadd.f32 %v104, %v161
  %v182 = vadd.f32 %v105, %v157
  %v183 = vadd.f32 %v106, %v161
  %v184 = vadd.f32 %v107, %v157
  %v185 = vadd.f32 %v108, %v161
  %v186 = vadd.f32 %v109, %v157
  %v187 = vadd.f32 %v110, %v161
  %v188 = vadd.f32 %v111, %v157
  %v189 = vadd.f32 %v112, %v161
  %v190 = vadd.f32 %v113, %v157
  %v191 = vadd.f32 %v114, %v161
  %v192 = vadd.f32 %v115, %v157
  %v193 = vadd.f32 %v116, %v161
  %v194 = vadd.f32 %v117, %v157
  %v195 = vadd.f32 %v118, %v161
  %v196 = vadd.f32 %v119, %v157
  %v197 = vadd.f32 %v120, %v161
  %v198 = vadd.f32 %v121, %v157
  %v199 = vadd.f32 %v122, %v161
  %v200 = vadd.f32 %v123, %v157
  %v201 = vadd.f32 %v124, %v161
  %v202 = vadd.f32 %v125, %v157
  %v203 = vadd.f32 %v126, %v161
  %v204 = vadd.f32 %v127, %v157
  %v205 = vadd.f32 %v128, %v161
  %v206 = vadd.f32 %v129, %v157
  %v207 = vadd.f32 %v130, %v161
  %v208 = vadd.f32 %v131, %v157
  %v209 = vadd.f32 %v132, %v161
  %v210 = vadd.f32 %v133, %v157
  %v211 = vadd.f32 %v134, %v161
  %v212 = vadd.f32 %v135, %v157
  %v213 = vadd.f32 %v136, %v161
  %v214 = vadd.f32 %v137, %v157
  %v215 = vadd.f32 %v138, %v161
  %v216 = vadd.f32 %v139, %v157
  %v217 = vadd.f32 %v140, %v161
  %v218 = vadd.f32 %v141, %v157
  %v219 = vadd.f32 %v142, %v161
  %v220 = vadd.f32 %v143, %v157
  %v221 = vadd.f32 %v144, %v161
  %v222 = vadd.f32 %v145, %v157
  %v223 = vadd.f32 %v146, %v161
  %v224 = vadd.f32 %v147, %v157
  %v225 = vadd.f32 %v148, %v161
  %v226 = vadd.f32 %v149, %v157
  %v227 = vadd.f32 %v150, %v161
  %vm228 = vcmp.gt.f32.partialorder %v164, 0.0
  %vm229 = vcmp.gt.f32.partialorder %v165, 0.0
  %vm230 = vcmp.gt.f32.partialorder %v166, 0.0
  %vm231 = vcmp.gt.f32.partialorder %v167, 0.0
  %vm232 = vcmp.gt.f32.partialorder %v168, 0.0
  %vm233 = vcmp.gt.f32.partialorder %v169, 0.0
  %vm234 = vcmp.gt.f32.partialorder %v170, 0.0
  %vm235 = vcmp.gt.f32.partialorder %v171, 0.0
  %vm236 = vcmp.gt.f32.partialorder %v172, 0.0
  %vm237 = vcmp.gt.f32.partialorder %v173, 0.0
  %vm238 = vcmp.gt.f32.partialorder %v174, 0.0
  %vm239 = vcmp.gt.f32.partialorder %v175, 0.0
  %vm240 = vcmp.gt.f32.partialorder %v176, 0.0
  %vm241 = vcmp.gt.f32.partialorder %v177, 0.0
  %vm242 = vcmp.gt.f32.partialorder %v178, 0.0
  %vm243 = vcmp.gt.f32.partialorder %v179, 0.0
  %vm244 = vcmp.gt.f32.partialorder %v180, 0.0
  %vm245 = vcmp.gt.f32.partialorder %v181, 0.0
  %vm246 = vcmp.gt.f32.partialorder %v182, 0.0
  %vm247 = vcmp.gt.f32.partialorder %v183, 0.0
  %vm248 = vcmp.gt.f32.partialorder %v184, 0.0
  %vm249 = vcmp.gt.f32.partialorder %v185, 0.0
  %vm250 = vcmp.gt.f32.partialorder %v186, 0.0
  %vm251 = vcmp.gt.f32.partialorder %v187, 0.0
  %vm252 = vcmp.gt.f32.partialorder %v188, 0.0
  %vm253 = vcmp.gt.f32.partialorder %v189, 0.0
  %vm254 = vcmp.gt.f32.partialorder %v190, 0.0
  %vm255 = vcmp.gt.f32.partialorder %v191, 0.0
  %vm256 = vcmp.gt.f32.partialorder %v192, 0.0
  %vm257 = vcmp.gt.f32.partialorder %v193, 0.0
  %vm258 = vcmp.gt.f32.partialorder %v194, 0.0
  %vm259 = vcmp.gt.f32.partialorder %v195, 0.0
  %vm260 = vcmp.gt.f32.partialorder %v196, 0.0
  %vm261 = vcmp.gt.f32.partialorder %v197, 0.0
  %vm262 = vcmp.gt.f32.partialorder %v198, 0.0
  %vm263 = vcmp.gt.f32.partialorder %v199, 0.0
  %vm264 = vcmp.gt.f32.partialorder %v200, 0.0
  %vm265 = vcmp.gt.f32.partialorder %v201, 0.0
  %vm266 = vcmp.gt.f32.partialorder %v202, 0.0
  %vm267 = vcmp.gt.f32.partialorder %v203, 0.0
  %vm268 = vcmp.gt.f32.partialorder %v204, 0.0
  %vm269 = vcmp.gt.f32.partialorder %v205, 0.0
  %vm270 = vcmp.gt.f32.partialorder %v206, 0.0
  %vm271 = vcmp.gt.f32.partialorder %v207, 0.0
  %vm272 = vcmp.gt.f32.partialorder %v208, 0.0
  %vm273 = vcmp.gt.f32.partialorder %v209, 0.0
  %vm274 = vcmp.gt.f32.partialorder %v210, 0.0
  %vm275 = vcmp.gt.f32.partialorder %v211, 0.0
  %vm276 = vcmp.gt.f32.partialorder %v212, 0.0
  %vm277 = vcmp.gt.f32.partialorder %v213, 0.0
  %vm278 = vcmp.gt.f32.partialorder %v214, 0.0
  %vm279 = vcmp.gt.f32.partialorder %v215, 0.0
  %vm280 = vcmp.gt.f32.partialorder %v216, 0.0
  %vm281 = vcmp.gt.f32.partialorder %v217, 0.0
  %vm282 = vcmp.gt.f32.partialorder %v218, 0.0
  %vm283 = vcmp.gt.f32.partialorder %v219, 0.0
  %vm284 = vcmp.gt.f32.partialorder %v220, 0.0
  %vm285 = vcmp.gt.f32.partialorder %v221, 0.0
  %vm286 = vcmp.gt.f32.partialorder %v222, 0.0
  %vm287 = vcmp.gt.f32.partialorder %v223, 0.0
  %vm288 = vcmp.gt.f32.partialorder %v224, 0.0
  %vm289 = vcmp.gt.f32.partialorder %v225, 0.0
  %vm290 = vcmp.gt.f32.partialorder %v226, 0.0
  %vm291 = vcmp.gt.f32.partialorder %v227, 0.0
  %s292 = scalar_lea.vmem %s1, 2
  %v293 = vld [vmem:[%s292] ss:$4 sm:$0x3]
  %v295 = vlaneseq
  %v296 = vshrl.u32 %v295, 7
  %v297 = vsub.s32 0, %v296
  %v298 = vrot.slane %v293, %v297
  %v299 = vlaneseq
  %v300 = vshrl.u32 %v299, 7
  %v301 = vsub.s32 1, %v300
  %v302 = vrot.slane %v293, %v301
  %v305 = vmul.f32 %v298, %v164
  %v306 = vmul.f32 %v302, %v165
  %v307 = vmul.f32 %v298, %v166
  %v308 = vmul.f32 %v302, %v167
  %v309 = vmul.f32 %v298, %v168
  %v310 = vmul.f32 %v302, %v169
  %v311 = vmul.f32 %v298, %v170
  %v312 = vmul.f32 %v302, %v171
  %v313 = vmul.f32 %v298, %v172
  %v314 = vmul.f32 %v302, %v173
  %v315 = vmul.f32 %v298, %v174
  %v316 = vmul.f32 %v302, %v175
  %v317 = vmul.f32 %v298, %v176
  %v318 = vmul.f32 %v302, %v177
  %v319 = vmul.f32 %v298, %v178
  %v320 = vmul.f32 %v302, %v179
  %v321 = vmul.f32 %v298, %v180
  %v322 = vmul.f32 %v302, %v181
  %v323 = vmul.f32 %v298, %v182
  %v324 = vmul.f32 %v302, %v183
  %v325 = vmul.f32 %v298, %v184
  %v326 = vmul.f32 %v302, %v185
  %v327 = vmul.f32 %v298, %v186
  %v328 = vmul.f32 %v302, %v187
  %v329 = vmul.f32 %v298, %v188
  %v330 = vmul.f32 %v302, %v189
  %v331 = vmul.f32 %v298, %v190
  %v332 = vmul.f32 %v302, %v191
  %v333 = vmul.f32 %v298, %v192
  %v334 = vmul.f32 %v302, %v193
  %v335 = vmul.f32 %v298, %v194
  %v336 = vmul.f32 %v302, %v195
  %v337 = vmul.f32 %v298, %v196
  %v338 = vmul.f32 %v302, %v197
  %v339 = vmul.f32 %v298, %v198
  %v340 = vmul.f32 %v302, %v199
  %v341 = vmul.f32 %v298, %v200
  %v342 = vmul.f32 %v302, %v201
  %v343 = vmul.f32 %v298, %v202
  %v344 = vmul.f32 %v302, %v203
  %v345 = vmul.f32 %v298, %v204
  %v346 = vmul.f32 %v302, %v205
  %v347 = vmul.f32 %v298, %v206
  %v348 = vmul.f32 %v302, %v207
  %v349 = vmul.f32 %v298, %v208
  %v350 = vmul.f32 %v302, %v209
  %v351 = vmul.f32 %v298, %v210
  %v352 = vmul.f32 %v302, %v211
  %v353 = vmul.f32 %v298, %v212
  %v354 = vmul.f32 %v302, %v213
  %v355 = vmul.f32 %v298, %v214
  %v356 = vmul.f32 %v302, %v215
  %v357 = vmul.f32 %v298, %v216
  %v358 = vmul.f32 %v302, %v217
  %v359 = vmul.f32 %v298, %v218
  %v360 = vmul.f32 %v302, %v219
  %v361 = vmul.f32 %v298, %v220
  %v362 = vmul.f32 %v302, %v221
  %v363 = vmul.f32 %v298, %v222
  %v364 = vmul.f32 %v302, %v223
  %v365 = vmul.f32 %v298, %v224
  %v366 = vmul.f32 %v302, %v225
  %v367 = vmul.f32 %v298, %v226
  %v368 = vmul.f32 %v302, %v227
  %v369 = vsel %vm228, %v164, %v305
  %v370 = vsel %vm229, %v165, %v306
  %v371 = vsel %vm230, %v166, %v307
  %v372 = vsel %vm231, %v167, %v308
  %v373 = vsel %vm232, %v168, %v309
  %v374 = vsel %vm233, %v169, %v310
  %v375 = vsel %vm234, %v170, %v311
  %v376 = vsel %vm235, %v171, %v312
  %v377 = vsel %vm236, %v172, %v313
  %v378 = vsel %vm237, %v173, %v314
  %v379 = vsel %vm238, %v174, %v315
  %v380 = vsel %vm239, %v175, %v316
  %v381 = vsel %vm240, %v176, %v317
  %v382 = vsel %vm241, %v177, %v318
  %v383 = vsel %vm242, %v178, %v319
  %v384 = vsel %vm243, %v179, %v320
  %v385 = vsel %vm244, %v180, %v321
  %v386 = vsel %vm245, %v181, %v322
  %v387 = vsel %vm246, %v182, %v323
  %v388 = vsel %vm247, %v183, %v324
  %v389 = vsel %vm248, %v184, %v325
  %v390 = vsel %vm249, %v185, %v326
  %v391 = vsel %vm250, %v186, %v327
  %v392 = vsel %vm251, %v187, %v328
  %v393 = vsel %vm252, %v188, %v329
  %v394 = vsel %vm253, %v189, %v330
  %v395 = vsel %vm254, %v190, %v331
  %v396 = vsel %vm255, %v191, %v332
  %v397 = vsel %vm256, %v192, %v333
  %v398 = vsel %vm257, %v193, %v334
  %v399 = vsel %vm258, %v194, %v335
  %v400 = vsel %vm259, %v195, %v336
  %v401 = vsel %vm260, %v196, %v337
  %v402 = vsel %vm261, %v197, %v338
  %v403 = vsel %vm262, %v198, %v339
  %v404 = vsel %vm263, %v199, %v340
  %v405 = vsel %vm264, %v200, %v341
  %v406 = vsel %vm265, %v201, %v342
  %v407 = vsel %vm266, %v202, %v343
  %v408 = vsel %vm267, %v203, %v344
  %v409 = vsel %vm268, %v204, %v345
  %v410 = vsel %vm269, %v205, %v346
  %v411 = vsel %vm270, %v206, %v347
  %v412 = vsel %vm271, %v207, %v348
  %v413 = vsel %vm272, %v208, %v349
  %v414 = vsel %vm273, %v209, %v350
  %v415 = vsel %vm274, %v210, %v351
  %v416 = vsel %vm275, %v211, %v352
  %v417 = vsel %vm276, %v212, %v353
  %v418 = vsel %vm277, %v213, %v354
  %v419 = vsel %vm278, %v214, %v355
  %v420 = vsel %vm279, %v215, %v356
  %v421 = vsel %vm280, %v216, %v357
  %v422 = vsel %vm281, %v217, %v358
  %v423 = vsel %vm282, %v218, %v359
  %v424 = vsel %vm283, %v219, %v360
  %v425 = vsel %vm284, %v220, %v361
  %v426 = vsel %vm285, %v221, %v362
  %v427 = vsel %vm286, %v222, %v363
  %v428 = vsel %vm287, %v223, %v364
  %v429 = vsel %vm288, %v224, %v365
  %v430 = vsel %vm289, %v225, %v366
  %v431 = vsel %vm290, %v226, %v367
  %v432 = vsel %vm291, %v227, %v368
  %433 = vst [vmem:[%s2] sm:$0xff] %v369
  %434 = vst [vmem:[%s2 + $0x8] sm:$0xff] %v370
  %435 = vst [vmem:[%s2 + $0x10] sm:$0xff] %v371
  %436 = vst [vmem:[%s2 + $0x18] sm:$0xff] %v372
  %437 = vst [vmem:[%s2 + $0x20] sm:$0xff] %v373
  %438 = vst [vmem:[%s2 + $0x28] sm:$0xff] %v374
  %439 = vst [vmem:[%s2 + $0x30] sm:$0xff] %v375
  %440 = vst [vmem:[%s2 + $0x38] sm:$0xff] %v376
  %441 = vst [vmem:[%s2 + $0x40] sm:$0xff] %v377
  %442 = vst [vmem:[%s2 + $0x48] sm:$0xff] %v378
  %443 = vst [vmem:[%s2 + $0x50] sm:$0xff] %v379
  %444 = vst [vmem:[%s2 + $0x58] sm:$0xff] %v380
  %445 = vst [vmem:[%s2 + $0x60] sm:$0xff] %v381
  %446 = vst [vmem:[%s2 + $0x68] sm:$0xff] %v382
  %447 = vst [vmem:[%s2 + $0x70] sm:$0xff] %v383
  %448 = vst [vmem:[%s2 + $0x78] sm:$0xff] %v384
  %449 = vst [vmem:[%s2 + $0x80] sm:$0xff] %v385
  %450 = vst [vmem:[%s2 + $0x88] sm:$0xff] %v386
  %451 = vst [vmem:[%s2 + $0x90] sm:$0xff] %v387
  %452 = vst [vmem:[%s2 + $0x98] sm:$0xff] %v388
  %453 = vst [vmem:[%s2 + $0xa0] sm:$0xff] %v389
  %454 = vst [vmem:[%s2 + $0xa8] sm:$0xff] %v390
  %455 = vst [vmem:[%s2 + $0xb0] sm:$0xff] %v391
  %456 = vst [vmem:[%s2 + $0xb8] sm:$0xff] %v392
  %457 = vst [vmem:[%s2 + $0xc0] sm:$0xff] %v393
  %458 = vst [vmem:[%s2 + $0xc8] sm:$0xff] %v394
  %459 = vst [vmem:[%s2 + $0xd0] sm:$0xff] %v395
  %460 = vst [vmem:[%s2 + $0xd8] sm:$0xff] %v396
  %461 = vst [vmem:[%s2 + $0xe0] sm:$0xff] %v397
  %462 = vst [vmem:[%s2 + $0xe8] sm:$0xff] %v398
  %463 = vst [vmem:[%s2 + $0xf0] sm:$0xff] %v399
  %464 = vst [vmem:[%s2 + $0xf8] sm:$0xff] %v400
  %465 = vst [vmem:[%s2 + $0x100] sm:$0xff] %v401
  %466 = vst [vmem:[%s2 + $0x108] sm:$0xff] %v402
  %467 = vst [vmem:[%s2 + $0x110] sm:$0xff] %v403
  %468 = vst [vmem:[%s2 + $0x118] sm:$0xff] %v404
  %469 = vst [vmem:[%s2 + $0x120] sm:$0xff] %v405
  %470 = vst [vmem:[%s2 + $0x128] sm:$0xff] %v406
  %471 = vst [vmem:[%s2 + $0x130] sm:$0xff] %v407
  %472 = vst [vmem:[%s2 + $0x138] sm:$0xff] %v408
  %473 = vst [vmem:[%s2 + $0x140] sm:$0xff] %v409
  %474 = vst [vmem:[%s2 + $0x148] sm:$0xff] %v410
  %475 = vst [vmem:[%s2 + $0x150] sm:$0xff] %v411
  %476 = vst [vmem:[%s2 + $0x158] sm:$0xff] %v412
  %477 = vst [vmem:[%s2 + $0x160] sm:$0xff] %v413
  %478 = vst [vmem:[%s2 + $0x168] sm:$0xff] %v414
  %479 = vst [vmem:[%s2 + $0x170] sm:$0xff] %v415
  %480 = vst [vmem:[%s2 + $0x178] sm:$0xff] %v416
  %481 = vst [vmem:[%s2 + $0x180] sm:$0xff] %v417
  %482 = vst [vmem:[%s2 + $0x188] sm:$0xff] %v418
  %483 = vst [vmem:[%s2 + $0x190] sm:$0xff] %v419
  %484 = vst [vmem:[%s2 + $0x198] sm:$0xff] %v420
  %485 = vst [vmem:[%s2 + $0x1a0] sm:$0xff] %v421
  %486 = vst [vmem:[%s2 + $0x1a8] sm:$0xff] %v422
  %487 = vst [vmem:[%s2 + $0x1b0] sm:$0xff] %v423
  %488 = vst [vmem:[%s2 + $0x1b8] sm:$0xff] %v424
  %489 = vst [vmem:[%s2 + $0x1c0] sm:$0xff] %v425
  %490 = vst [vmem:[%s2 + $0x1c8] sm:$0xff] %v426
  %491 = vst [vmem:[%s2 + $0x1d0] sm:$0xff] %v427
  %492 = vst [vmem:[%s2 + $0x1d8] sm:$0xff] %v428
  %493 = vst [vmem:[%s2 + $0x1e0] sm:$0xff] %v429
  %494 = vst [vmem:[%s2 + $0x1e8] sm:$0xff] %v430
  %495 = vst [vmem:[%s2 + $0x1f0] sm:$0xff] %v431
  %496 = vst [vmem:[%s2 + $0x1f8] sm:$0xff] %v432
  // Predicated region
  $region10: #{subpixel_conv_block.3} parent=0 // pred_check
    _
  $region11: #{subpixel_conv_block.3} parent=0 // pred_check_branch
    %498 = sbr.rel (0) target = $region13
  $region12: #{subpixel_conv_block.3} parent=0 // pred_region
    _
  $region13: #{subpixel_conv_block.3} parent=0 // pred_fallthru
    _
  // Predicated region
  $region14: #{subpixel_conv_block.3} parent=0 // pred_check
    _
  $region15: #{subpixel_conv_block.3} parent=0 // pred_check_branch
    %500 = sbr.rel (0) target = $region17
  $region16: #{subpixel_conv_block.3} parent=0 // pred_region
    _
  $region17: #{subpixel_conv_block.3} parent=0 // pred_fallthru
    _

// kernel: subpixel_conv_block.2
$region0: #{subpixel_conv_block.2}
  #allocation0 [shape = 'u32[]', space=smem, size = 0x4, offset = 0x4, fixed_abs, tag = 'smem constant byte address 0x4 - core index']
  #allocation1 [shape = 'u32[144,128]{1,0:T(1,128)}', space=vmem, size = 0x12000, scoped, tag = 'internal scratch']
  %s0 = inlined_call_operand.vmem [shape: bf16[2,2,18,9,64], index: 0, kind: input, shape index: {}]
  %s1 = inlined_call_operand.vmem [shape: bf16[9,64,256], index: 1, kind: input, shape index: {}]
  %s2 = inlined_call_operand.hbm [shape: f32[1,256], index: 2, kind: input, shape index: {}]
  %s3 = inlined_call_operand.vmem [shape: f32[256,256], index: 3, kind: output, shape index: {0}]
  %s4 = inlined_call_operand.vmem [shape: f32[2,1,2,256], index: 4, kind: output, shape index: {1}]
  %5 = xla_tuple %s3, %s4
  %s6 = sld [smem:[#allocation0]]
  $region98: #{subpixel_conv_block.2} parent=0
    _
  %s8 = ssub.s32 1, %s6
  %s9 = scalar_select 0, %s8, %s6
  $region1: #{subpixel_conv_block.2} parent=0
    #allocation2 [shape = 'u8[294912]{0}', space=vmem, size = 0x48000, scoped, tag = 'input window, operand 0']
    #allocation3 [shape = 'u8[1024]{0}', space=vmem, size = 0x400, scoped, tag = 'input window, operand 2, single buffered']
    #allocation4 [shape = 's32[2]{0}', space=sflag, size = 0x8, scoped, tag = 'scoped memory for subpixel_conv_block.2']
    %10 = vsyncpa [#allocation4], 0
    loop: start=0, step=1, limit=4
    $region2: #{subpixel_conv_block.2} parent=1 // loop_pre_header
      _
    $region3: #{subpixel_conv_block.2} parent=1 // loop_header
      %s12 = sphi 0, %s16
      %p13 = scmp.ge.s32.totalorder %s12, 4
      %s19 = sphi 0, %s31
      %s20 = sphi 0, %s27
      %s21 = sphi 0, %s19
      %s22 = sphi 0, %s20
      %s23 = sphi 0, %s21
      %s24 = sphi 0, %s22
      %s34 = sphi 0, %s36
      %s37 = sphi 0, %s34
      %s38 = sphi 0, %s37
      %s54 = sphi 0, %s38
      %s58 = sphi 0, %s58
      %s60 = sphi 0, %s58
      %s61 = sphi 0, %s60
      %s75 = sphi 0, %s61
      %s79 = sphi 0, %s79
      %s81 = sphi 0, %s79
      %s82 = sphi 0, %s81
      %s96 = sphi 0, %s82
      %s104 = sphi 0, %s106
      %s107 = sphi 0, %s104
      %s108 = sphi 0, %s107
      %s124 = sphi 0, %s108
      %s132 = sphi 0, %s134
      %s135 = sphi 0, %s132
      %s136 = sphi 0, %s135
      %s152 = sphi 0, %s136
    $region4: #{subpixel_conv_block.2} parent=1 // loop_header_branch
      %15 = sbr.rel (%p13) target = $region8
    $region5: #{subpixel_conv_block.2} parent=1 // loop_body
      %s17 = ssub.s32 %s12, 1
      %s18 = ssub.s32 %s12, 2
      %s25 = sadd.s32 1, %s20
      %p26 = scmp.ge.s32.totalorder %s25, 1
      %s27 = scalar_select %p26, 0, %s25
      %s28 = sadd.s32 1, %s19
      %s29 = scalar_select %p26, %s28, %s19
      %p30 = scmp.ge.s32.totalorder %s29, 2
      %s31 = scalar_select %p30, 0, %s29
      %s32 = ssub.s32 %s19, %s31
      %p33 = scmp.eq.s32.totalorder %s32, 0
      %s35 = sadd.s32 %s34, 1
      %s36 = scalar_select %p33, %s34, %s35
      %p39 = pneg %p33
      %p40 = scmp.eq.s32.totalorder %s12, 1
      %p41 = por %p39, %p40
      %p42 = scmp.ne.s32.totalorder %s34, %s37
      %p43 = scmp.eq.s32.totalorder %s12, 0
      %p44 = por %p42, %p43
      %p45 = scmp.ne.s32.totalorder %s34, %s37
      %p46 = scmp.eq.s32.totalorder %s17, 1
      %p47 = por %p45, %p46
      %p48 = scmp.ne.s32.totalorder %s37, %s38
      %p49 = scmp.eq.s32.totalorder %s17, 0
      %p50 = por %p48, %p49
      %p51 = scmp.ne.s32.totalorder %s37, %s38
      %p52 = scmp.eq.s32.totalorder %s18, 1
      %p53 = por %p51, %p52
      %p55 = scmp.ne.s32.totalorder %s38, %s54
      %p56 = scmp.eq.s32.totalorder %s18, 0
      %p57 = por %p55, %p56
      %s59 = sadd.s32 %s58, 1
      %p62 = scmp.eq.s32.totalorder %s12, 1
      %p63 = scmp.ne.s32.totalorder %s58, %s60
      %p64 = scmp.eq.s32.totalorder %s12, 0
      %p65 = por %p63, %p64
      %p66 = scmp.ne.s32.totalorder %s58, %s60
      %p67 = scmp.eq.s32.totalorder %s17, 1
      %p68 = por %p66, %p67
      %p69 = scmp.ne.s32.totalorder %s60, %s61
      %p70 = scmp.eq.s32.totalorder %s17, 0
      %p71 = por %p69, %p70
      %p72 = scmp.ne.s32.totalorder %s60, %s61
      %p73 = scmp.eq.s32.totalorder %s18, 1
      %p74 = por %p72, %p73
      %p76 = scmp.ne.s32.totalorder %s61, %s75
      %p77 = scmp.eq.s32.totalorder %s18, 0
      %p78 = por %p76, %p77
      %s80 = sadd.s32 %s79, 1
      %p83 = scmp.eq.s32.totalorder %s12, 1
      %p84 = scmp.ne.s32.totalorder %s79, %s81
      %p85 = scmp.eq.s32.totalorder %s12, 0
      %p86 = por %p84, %p85
      %p87 = scmp.ne.s32.totalorder %s79, %s81
      %p88 = scmp.eq.s32.totalorder %s17, 1
      %p89 = por %p87, %p88
      %p90 = scmp.ne.s32.totalorder %s81, %s82
      %p91 = scmp.eq.s32.totalorder %s17, 0
      %p92 = por %p90, %p91
      %p93 = scmp.ne.s32.totalorder %s81, %s82
      %p94 = scmp.eq.s32.totalorder %s18, 1
      %p95 = por %p93, %p94
      %p97 = scmp.ne.s32.totalorder %s82, %s96
      %p98 = scmp.eq.s32.totalorder %s18, 0
      %p99 = por %p97, %p98
      %s100 = sadd.s32 %s19, %s20
      %s101 = sadd.s32 %s31, %s27
      %s102 = ssub.s32 %s100, %s101
      %p103 = scmp.eq.s32.totalorder %s102, 0
      %s105 = sadd.s32 %s104, 1
      %s106 = scalar_select %p103, %s104, %s105
      %p109 = pneg %p103
      %p110 = scmp.eq.s32.totalorder %s12, 1
      %p111 = por %p109, %p110
      %p112 = scmp.ne.s32.totalorder %s104, %s107
      %p113 = scmp.eq.s32.totalorder %s12, 0
      %p114 = por %p112, %p113
      %p115 = scmp.ne.s32.totalorder %s104, %s107
      %p116 = scmp.eq.s32.totalorder %s17, 1
      %p117 = por %p115, %p116
      %p118 = scmp.ne.s32.totalorder %s107, %s108
      %p119 = scmp.eq.s32.totalorder %s17, 0
      %p120 = por %p118, %p119
      %p121 = scmp.ne.s32.totalorder %s107, %s108
      %p122 = scmp.eq.s32.totalorder %s18, 1
      %p123 = por %p121, %p122
      %p125 = scmp.ne.s32.totalorder %s108, %s124
      %p126 = scmp.eq.s32.totalorder %s18, 0
      %p127 = por %p125, %p126
      %s128 = ssub.s32 %s19, %s31
      %s129 = ssub.s32 %s20, %s27
      %s130 = sor.u32 %s128, %s129
      %p131 = scmp.eq.s32.totalorder %s130, 0
      %s133 = sadd.s32 %s132, 1
      %s134 = scalar_select %p131, %s132, %s133
      %p137 = pneg %p131
      %p138 = scmp.eq.s32.totalorder %s12, 1
      %p139 = por %p137, %p138
      %p140 = scmp.ne.s32.totalorder %s132, %s135
      %p141 = scmp.eq.s32.totalorder %s12, 0
      %p142 = por %p140, %p141
      %p143 = scmp.ne.s32.totalorder %s132, %s135
      %p144 = scmp.eq.s32.totalorder %s17, 1
      %p145 = por %p143, %p144
      %p146 = scmp.ne.s32.totalorder %s135, %s136
      %p147 = scmp.eq.s32.totalorder %s17, 0
      %p148 = por %p146, %p147
      %p149 = scmp.ne.s32.totalorder %s135, %s136
      %p150 = scmp.eq.s32.totalorder %s18, 1
      %p151 = por %p149, %p150
      %p153 = scmp.ne.s32.totalorder %s136, %s152
      %p154 = scmp.eq.s32.totalorder %s18, 0
      %p155 = por %p153, %p154
      %p156 = scmp.le.s32.totalorder 1, %s12
      %p157 = scmp.lt.s32.totalorder %s12, 3
      %p158 = pnand %p156, %p157
      %p159 = pneg %p158
      // Predicated region
      $region9: #{subpixel_conv_block.2} parent=5 // pred_check
        _
      $region10: #{subpixel_conv_block.2} parent=5 // pred_check_branch
        %161 = sbr.rel (%p158) target = $region12
      $region11: #{subpixel_conv_block.2} parent=5 // pred_region
        %s162 = ssub.s32 %s12, 1
        // Predicated region
        $region13: #{subpixel_conv_block.2} parent=11 // pred_check
          %p163 = pneg %p71
        $region14: #{subpixel_conv_block.2} parent=11 // pred_check_branch
          %165 = sbr.rel (%p163) target = $region16
        $region15: #{subpixel_conv_block.2} parent=11 // pred_region
          _
        $region16: #{subpixel_conv_block.2} parent=11 // pred_fallthru
          _
        // Predicated region
        $region17: #{subpixel_conv_block.2} parent=11 // pred_check
          %p166 = pneg %p92
        $region18: #{subpixel_conv_block.2} parent=11 // pred_check_branch
          %168 = sbr.rel (%p166) target = $region20
        $region19: #{subpixel_conv_block.2} parent=11 // pred_region
          %s170 = ssub.s32 32, 32
          %171 = vsyncadd [#allocation4], %s170
          %s173 = sshll.u32 [#allocation3], 4
          %s174 = int_to_ptr.vmem [resolvable:$true] %s173
          %176 = dma.hbm_to_vmem [thread:$0]  %s2, 32, %s174, [#allocation4]
        $region20: #{subpixel_conv_block.2} parent=11 // pred_fallthru
          _
      $region12: #{subpixel_conv_block.2} parent=5 // pred_fallthru
        _
      %p177 = scmp.lt.s32.totalorder %s12, 2
      // Predicated region
      $region21: #{subpixel_conv_block.2} parent=5 // pred_check
        %p178 = pneg %p177
      $region22: #{subpixel_conv_block.2} parent=5 // pred_check_branch
        %180 = sbr.rel (%p178) target = $region24
      $region23: #{subpixel_conv_block.2} parent=5 // pred_region
        // Predicated region
        $region25: #{subpixel_conv_block.2} parent=23 // pred_check
          %p181 = pneg %p44
        $region26: #{subpixel_conv_block.2} parent=23 // pred_check_branch
          %183 = sbr.rel (%p181) target = $region28
        $region27: #{subpixel_conv_block.2} parent=23 // pred_region
          %s184 = sand.u32 %s34, 1
          %s185 = sand.u32 %s34, 1
          %s186 = smul.addr %s185, 288
          %s187 = scalar_lea.vmem [#allocation2], %s186
          %s188 = smul.addr %s19, 36
          %s189 = smul.addr %s188, 4
          %s190 = scalar_lea.vmem %s0, %s189
          // Predicated region
          $region29: #{subpixel_conv_block.2} parent=27 // pred_check
            _
          $region30: #{subpixel_conv_block.2} parent=27 // pred_check_branch
            %192 = sbr.rel (0) target = $region32
          $region31: #{subpixel_conv_block.2} parent=27 // pred_region
            // Predicated region
            $region33: #{subpixel_conv_block.2} parent=31 // pred_check
              _
            $region34: #{subpixel_conv_block.2} parent=31 // pred_check_branch
              %194 = sbr.rel target = $region36
            $region35: #{subpixel_conv_block.2} parent=31 // pred_region
              // Predicated region
              $region48: #{subpixel_conv_block.2} parent=35 // pred_check
                _
              $region49: #{subpixel_conv_block.2} parent=35 // pred_check_branch
                %351 = sbr.rel (0) target = $region51
              $region50: #{subpixel_conv_block.2} parent=35 // pred_region
                loop: start=0, step=1, limit=1
                $region52: #{subpixel_conv_block.2} parent=50 // loop_pre_header
                  _
                $region53: #{subpixel_conv_block.2} parent=50 // loop_header
                  %s353 = sphi 0, %s357
                  %p354 = scmp.ge.s32.totalorder %s353, 1
                  %s358 = sphi %s190, %s190
                  %s359 = sphi %s187, %s187
                $region54: #{subpixel_conv_block.2} parent=50 // loop_header_branch
                  %356 = sbr.rel (%p354) target = $region58
                $region55: #{subpixel_conv_block.2} parent=50 // loop_body
                  _
                $region56: #{subpixel_conv_block.2} parent=50 // loop_footer
                  %s357 = sadd.s32 1, %s353
                $region57: #{subpixel_conv_block.2} parent=50 // loop_footer_branch
                  %352 = sbr.rel target = $region53
                $region58: #{subpixel_conv_block.2} parent=50 // loop_exit
                  _
                loop: start=0, step=1, limit=1
                $region59: #{subpixel_conv_block.2} parent=50 // loop_pre_header
                  _
                $region60: #{subpixel_conv_block.2} parent=50 // loop_header
                  %s362 = sphi 0, %s366
                  %p363 = scmp.ge.s32.totalorder %s362, 1
                  %s367 = sphi %s190, %s190
                  %s368 = sphi %s187, %s187
                $region61: #{subpixel_conv_block.2} parent=50 // loop_header_branch
                  %365 = sbr.rel (%p363) target = $region65
                $region62: #{subpixel_conv_block.2} parent=50 // loop_body
                  %v369 = vld [vmem:[%s367] sm:$0xf]
                  %370 = vst [vmem:[%s368] sm:$0xf] %v369
                  %v371 = vld [vmem:[%s367 + $0x4] sm:$0xf]
                  %372 = vst [vmem:[%s368 + $0x4] sm:$0xf] %v371
                  %v373 = vld [vmem:[%s367 + $0x8] sm:$0xf]
                  %374 = vst [vmem:[%s368 + $0x8] sm:$0xf] %v373
                  %v375 = vld [vmem:[%s367 + $0xc] sm:$0xf]
                  %376 = vst [vmem:[%s368 + $0xc] sm:$0xf] %v375
                  %v377 = vld [vmem:[%s367 + $0x10] sm:$0xf]
                  %378 = vst [vmem:[%s368 + $0x10] sm:$0xf] %v377
                  %v379 = vld [vmem:[%s367 + $0x14] sm:$0xf]
                  %380 = vst [vmem:[%s368 + $0x14] sm:$0xf] %v379
                  %v381 = vld [vmem:[%s367 + $0x18] sm:$0xf]
                  %382 = vst [vmem:[%s368 + $0x18] sm:$0xf] %v381
                  %v383 = vld [vmem:[%s367 + $0x1c] sm:$0xf]
                  %384 = vst [vmem:[%s368 + $0x1c] sm:$0xf] %v383
                  %v385 = vld [vmem:[%s367 + $0x20] sm:$0xf]
                  %386 = vst [vmem:[%s368 + $0x20] sm:$0xf] %v385
                  %v387 = vld [vmem:[%s367 + $0x24] sm:$0xf]
                  %388 = vst [vmem:[%s368 + $0x24] sm:$0xf] %v387
                  %v389 = vld [vmem:[%s367 + $0x28] sm:$0xf]
                  %390 = vst [vmem:[%s368 + $0x28] sm:$0xf] %v389
                  %v391 = vld [vmem:[%s367 + $0x2c] sm:$0xf]
                  %392 = vst [vmem:[%s368 + $0x2c] sm:$0xf] %v391
                  %v393 = vld [vmem:[%s367 + $0x30] sm:$0xf]
                  %394 = vst [vmem:[%s368 + $0x30] sm:$0xf] %v393
                  %v395 = vld [vmem:[%s367 + $0x34] sm:$0xf]
                  %396 = vst [vmem:[%s368 + $0x34] sm:$0xf] %v395
                  %v397 = vld [vmem:[%s367 + $0x38] sm:$0xf]
                  %398 = vst [vmem:[%s368 + $0x38] sm:$0xf] %v397
                  %v399 = vld [vmem:[%s367 + $0x3c] sm:$0xf]
                  %400 = vst [vmem:[%s368 + $0x3c] sm:$0xf] %v399
                  %v401 = vld [vmem:[%s367 + $0x40] sm:$0xf]
                  %402 = vst [vmem:[%s368 + $0x40] sm:$0xf] %v401
                  %v403 = vld [vmem:[%s367 + $0x44] sm:$0xf]
                  %404 = vst [vmem:[%s368 + $0x44] sm:$0xf] %v403
                  %v405 = vld [vmem:[%s367 + $0x48] sm:$0xf]
                  %406 = vst [vmem:[%s368 + $0x48] sm:$0xf] %v405
                  %v407 = vld [vmem:[%s367 + $0x4c] sm:$0xf]
                  %408 = vst [vmem:[%s368 + $0x4c] sm:$0xf] %v407
                  %v409 = vld [vmem:[%s367 + $0x50] sm:$0xf]
                  %410 = vst [vmem:[%s368 + $0x50] sm:$0xf] %v409
                  %v411 = vld [vmem:[%s367 + $0x54] sm:$0xf]
                  %412 = vst [vmem:[%s368 + $0x54] sm:$0xf] %v411
                  %v413 = vld [vmem:[%s367 + $0x58] sm:$0xf]
                  %414 = vst [vmem:[%s368 + $0x58] sm:$0xf] %v413
                  %v415 = vld [vmem:[%s367 + $0x5c] sm:$0xf]
                  %416 = vst [vmem:[%s368 + $0x5c] sm:$0xf] %v415
                  %v417 = vld [vmem:[%s367 + $0x60] sm:$0xf]
                  %418 = vst [vmem:[%s368 + $0x60] sm:$0xf] %v417
                  %v419 = vld [vmem:[%s367 + $0x64] sm:$0xf]
                  %420 = vst [vmem:[%s368 + $0x64] sm:$0xf] %v419
                  %v421 = vld [vmem:[%s367 + $0x68] sm:$0xf]
                  %422 = vst [vmem:[%s368 + $0x68] sm:$0xf] %v421
                  %v423 = vld [vmem:[%s367 + $0x6c] sm:$0xf]
                  %424 = vst [vmem:[%s368 + $0x6c] sm:$0xf] %v423
                  %v425 = vld [vmem:[%s367 + $0x70] sm:$0xf]
                  %426 = vst [vmem:[%s368 + $0x70] sm:$0xf] %v425
                  %v427 = vld [vmem:[%s367 + $0x74] sm:$0xf]
                  %428 = vst [vmem:[%s368 + $0x74] sm:$0xf] %v427
                  %v429 = vld [vmem:[%s367 + $0x78] sm:$0xf]
                  %430 = vst [vmem:[%s368 + $0x78] sm:$0xf] %v429
                  %v431 = vld [vmem:[%s367 + $0x7c] sm:$0xf]
                  %432 = vst [vmem:[%s368 + $0x7c] sm:$0xf] %v431
                  %v433 = vld [vmem:[%s367 + $0x80] sm:$0xf]
                  %434 = vst [vmem:[%s368 + $0x80] sm:$0xf] %v433
                  %v435 = vld [vmem:[%s367 + $0x84] sm:$0xf]
                  %436 = vst [vmem:[%s368 + $0x84] sm:$0xf] %v435
                  %v437 = vld [vmem:[%s367 + $0x88] sm:$0xf]
                  %438 = vst [vmem:[%s368 + $0x88] sm:$0xf] %v437
                  %v439 = vld [vmem:[%s367 + $0x8c] sm:$0xf]
                  %440 = vst [vmem:[%s368 + $0x8c] sm:$0xf] %v439
                  %v441 = vld [vmem:[%s367 + $0x120] sm:$0xf]
                  %442 = vst [vmem:[%s368 + $0x90] sm:$0xf] %v441
                  %v443 = vld [vmem:[%s367 + $0x124] sm:$0xf]
                  %444 = vst [vmem:[%s368 + $0x94] sm:$0xf] %v443
                  %v445 = vld [vmem:[%s367 + $0x128] sm:$0xf]
                  %446 = vst [vmem:[%s368 + $0x98] sm:$0xf] %v445
                  %v447 = vld [vmem:[%s367 + $0x12c] sm:$0xf]
                  %448 = vst [vmem:[%s368 + $0x9c] sm:$0xf] %v447
                  %v449 = vld [vmem:[%s367 + $0x130] sm:$0xf]
                  %450 = vst [vmem:[%s368 + $0xa0] sm:$0xf] %v449
                  %v451 = vld [vmem:[%s367 + $0x134] sm:$0xf]
                  %452 = vst [vmem:[%s368 + $0xa4] sm:$0xf] %v451
                  %v453 = vld [vmem:[%s367 + $0x138] sm:$0xf]
                  %454 = vst [vmem:[%s368 + $0xa8] sm:$0xf] %v453
                  %v455 = vld [vmem:[%s367 + $0x13c] sm:$0xf]
                  %456 = vst [vmem:[%s368 + $0xac] sm:$0xf] %v455
                  %v457 = vld [vmem:[%s367 + $0x140] sm:$0xf]
                  %458 = vst [vmem:[%s368 + $0xb0] sm:$0xf] %v457
                  %v459 = vld [vmem:[%s367 + $0x144] sm:$0xf]
                  %460 = vst [vmem:[%s368 + $0xb4] sm:$0xf] %v459
                  %v461 = vld [vmem:[%s367 + $0x148] sm:$0xf]
                  %462 = vst [vmem:[%s368 + $0xb8] sm:$0xf] %v461
                  %v463 = vld [vmem:[%s367 + $0x14c] sm:$0xf]
                  %464 = vst [vmem:[%s368 + $0xbc] sm:$0xf] %v463
                  %v465 = vld [vmem:[%s367 + $0x150] sm:$0xf]
                  %466 = vst [vmem:[%s368 + $0xc0] sm:$0xf] %v465
                  %v467 = vld [vmem:[%s367 + $0x154] sm:$0xf]
                  %468 = vst [vmem:[%s368 + $0xc4] sm:$0xf] %v467
                  %v469 = vld [vmem:[%s367 + $0x158] sm:$0xf]
                  %470 = vst [vmem:[%s368 + $0xc8] sm:$0xf] %v469
                  %v471 = vld [vmem:[%s367 + $0x15c] sm:$0xf]
                  %472 = vst [vmem:[%s368 + $0xcc] sm:$0xf] %v471
                  %v473 = vld [vmem:[%s367 + $0x160] sm:$0xf]
                  %474 = vst [vmem:[%s368 + $0xd0] sm:$0xf] %v473
                  %v475 = vld [vmem:[%s367 + $0x164] sm:$0xf]
                  %476 = vst [vmem:[%s368 + $0xd4] sm:$0xf] %v475
                  %v477 = vld [vmem:[%s367 + $0x168] sm:$0xf]
                  %478 = vst [vmem:[%s368 + $0xd8] sm:$0xf] %v477
                  %v479 = vld [vmem:[%s367 + $0x16c] sm:$0xf]
                  %480 = vst [vmem:[%s368 + $0xdc] sm:$0xf] %v479
                  %v481 = vld [vmem:[%s367 + $0x170] sm:$0xf]
                  %482 = vst [vmem:[%s368 + $0xe0] sm:$0xf] %v481
                  %v483 = vld [vmem:[%s367 + $0x174] sm:$0xf]
                  %484 = vst [vmem:[%s368 + $0xe4] sm:$0xf] %v483
                  %v485 = vld [vmem:[%s367 + $0x178] sm:$0xf]
                  %486 = vst [vmem:[%s368 + $0xe8] sm:$0xf] %v485
                  %v487 = vld [vmem:[%s367 + $0x17c] sm:$0xf]
                  %488 = vst [vmem:[%s368 + $0xec] sm:$0xf] %v487
                  %v489 = vld [vmem:[%s367 + $0x180] sm:$0xf]
                  %490 = vst [vmem:[%s368 + $0xf0] sm:$0xf] %v489
                  %v491 = vld [vmem:[%s367 + $0x184] sm:$0xf]
                  %492 = vst [vmem:[%s368 + $0xf4] sm:$0xf] %v491
                  %v493 = vld [vmem:[%s367 + $0x188] sm:$0xf]
                  %494 = vst [vmem:[%s368 + $0xf8] sm:$0xf] %v493
                  %v495 = vld [vmem:[%s367 + $0x18c] sm:$0xf]
                  %496 = vst [vmem:[%s368 + $0xfc] sm:$0xf] %v495
                  %v497 = vld [vmem:[%s367 + $0x190] sm:$0xf]
                  %498 = vst [vmem:[%s368 + $0x100] sm:$0xf] %v497
                  %v499 = vld [vmem:[%s367 + $0x194] sm:$0xf]
                  %500 = vst [vmem:[%s368 + $0x104] sm:$0xf] %v499
                  %v501 = vld [vmem:[%s367 + $0x198] sm:$0xf]
                  %502 = vst [vmem:[%s368 + $0x108] sm:$0xf] %v501
                  %v503 = vld [vmem:[%s367 + $0x19c] sm:$0xf]
                  %504 = vst [vmem:[%s368 + $0x10c] sm:$0xf] %v503
                  %v505 = vld [vmem:[%s367 + $0x1a0] sm:$0xf]
                  %506 = vst [vmem:[%s368 + $0x110] sm:$0xf] %v505
                  %v507 = vld [vmem:[%s367 + $0x1a4] sm:$0xf]
                  %508 = vst [vmem:[%s368 + $0x114] sm:$0xf] %v507
                  %v509 = vld [vmem:[%s367 + $0x1a8] sm:$0xf]
                  %510 = vst [vmem:[%s368 + $0x118] sm:$0xf] %v509
                  %v511 = vld [vmem:[%s367 + $0x1ac] sm:$0xf]
                  %512 = vst [vmem:[%s368 + $0x11c] sm:$0xf] %v511
                $region63: #{subpixel_conv_block.2} parent=50 // loop_footer
                  %s366 = sadd.s32 1, %s362
                $region64: #{subpixel_conv_block.2} parent=50 // loop_footer_branch
                  %361 = sbr.rel target = $region60
                $region65: #{subpixel_conv_block.2} parent=50 // loop_exit
                  _
              $region51: #{subpixel_conv_block.2} parent=35 // pred_fallthru
                _
            $region36: #{subpixel_conv_block.2} parent=31 // pred_fallthru
              _
            // Predicated region
            $region37: #{subpixel_conv_block.2} parent=31 // pred_check
              _
            $region38: #{subpixel_conv_block.2} parent=31 // pred_check_branch
              %196 = sbr.rel (0) target = $region40
            $region39: #{subpixel_conv_block.2} parent=31 // pred_region
              loop: start=0, step=1, limit=1
              $region41: #{subpixel_conv_block.2} parent=39 // loop_pre_header
                _
              $region42: #{subpixel_conv_block.2} parent=39 // loop_header
                %s199 = sphi 0, %s203
                %p200 = scmp.ge.s32.totalorder %s199, 1
                %s204 = sphi %s190, %s190
                %s205 = sphi %s187, %s187
              $region43: #{subpixel_conv_block.2} parent=39 // loop_header_branch
                %202 = sbr.rel (%p200) target = $region47
              $region44: #{subpixel_conv_block.2} parent=39 // loop_body
                %v206 = vld [vmem:[%s204] sm:$0xf]
                %207 = vst [vmem:[%s205] sm:$0xf] %v206
                %v208 = vld [vmem:[%s204 + $0x4] sm:$0xf]
                %209 = vst [vmem:[%s205 + $0x4] sm:$0xf] %v208
                %v210 = vld [vmem:[%s204 + $0x8] sm:$0xf]
                %211 = vst [vmem:[%s205 + $0x8] sm:$0xf] %v210
                %v212 = vld [vmem:[%s204 + $0xc] sm:$0xf]
                %213 = vst [vmem:[%s205 + $0xc] sm:$0xf] %v212
                %v214 = vld [vmem:[%s204 + $0x10] sm:$0xf]
                %215 = vst [vmem:[%s205 + $0x10] sm:$0xf] %v214
                %v216 = vld [vmem:[%s204 + $0x14] sm:$0xf]
                %217 = vst [vmem:[%s205 + $0x14] sm:$0xf] %v216
                %v218 = vld [vmem:[%s204 + $0x18] sm:$0xf]
                %219 = vst [vmem:[%s205 + $0x18] sm:$0xf] %v218
                %v220 = vld [vmem:[%s204 + $0x1c] sm:$0xf]
                %221 = vst [vmem:[%s205 + $0x1c] sm:$0xf] %v220
                %v222 = vld [vmem:[%s204 + $0x20] sm:$0xf]
                %223 = vst [vmem:[%s205 + $0x20] sm:$0xf] %v222
                %v224 = vld [vmem:[%s204 + $0x24] sm:$0xf]
                %225 = vst [vmem:[%s205 + $0x24] sm:$0xf] %v224
                %v226 = vld [vmem:[%s204 + $0x28] sm:$0xf]
                %227 = vst [vmem:[%s205 + $0x28] sm:$0xf] %v226
                %v228 = vld [vmem:[%s204 + $0x2c] sm:$0xf]
                %229 = vst [vmem:[%s205 + $0x2c] sm:$0xf] %v228
                %v230 = vld [vmem:[%s204 + $0x30] sm:$0xf]
                %231 = vst [vmem:[%s205 + $0x30] sm:$0xf] %v230
                %v232 = vld [vmem:[%s204 + $0x34] sm:$0xf]
                %233 = vst [vmem:[%s205 + $0x34] sm:$0xf] %v232
                %v234 = vld [vmem:[%s204 + $0x38] sm:$0xf]
                %235 = vst [vmem:[%s205 + $0x38] sm:$0xf] %v234
                %v236 = vld [vmem:[%s204 + $0x3c] sm:$0xf]
                %237 = vst [vmem:[%s205 + $0x3c] sm:$0xf] %v236
                %v238 = vld [vmem:[%s204 + $0x40] sm:$0xf]
                %239 = vst [vmem:[%s205 + $0x40] sm:$0xf] %v238
                %v240 = vld [vmem:[%s204 + $0x44] sm:$0xf]
                %241 = vst [vmem:[%s205 + $0x44] sm:$0xf] %v240
                %v242 = vld [vmem:[%s204 + $0x48] sm:$0xf]
                %243 = vst [vmem:[%s205 + $0x48] sm:$0xf] %v242
                %v244 = vld [vmem:[%s204 + $0x4c] sm:$0xf]
                %245 = vst [vmem:[%s205 + $0x4c] sm:$0xf] %v244
                %v246 = vld [vmem:[%s204 + $0x50] sm:$0xf]
                %247 = vst [vmem:[%s205 + $0x50] sm:$0xf] %v246
                %v248 = vld [vmem:[%s204 + $0x54] sm:$0xf]
                %249 = vst [vmem:[%s205 + $0x54] sm:$0xf] %v248
                %v250 = vld [vmem:[%s204 + $0x58] sm:$0xf]
                %251 = vst [vmem:[%s205 + $0x58] sm:$0xf] %v250
                %v252 = vld [vmem:[%s204 + $0x5c] sm:$0xf]
                %253 = vst [vmem:[%s205 + $0x5c] sm:$0xf] %v252
                %v254 = vld [vmem:[%s204 + $0x60] sm:$0xf]
                %255 = vst [vmem:[%s205 + $0x60] sm:$0xf] %v254
                %v256 = vld [vmem:[%s204 + $0x64] sm:$0xf]
                %257 = vst [vmem:[%s205 + $0x64] sm:$0xf] %v256
                %v258 = vld [vmem:[%s204 + $0x68] sm:$0xf]
                %259 = vst [vmem:[%s205 + $0x68] sm:$0xf] %v258
                %v260 = vld [vmem:[%s204 + $0x6c] sm:$0xf]
                %261 = vst [vmem:[%s205 + $0x6c] sm:$0xf] %v260
                %v262 = vld [vmem:[%s204 + $0x70] sm:$0xf]
                %263 = vst [vmem:[%s205 + $0x70] sm:$0xf] %v262
                %v264 = vld [vmem:[%s204 + $0x74] sm:$0xf]
                %265 = vst [vmem:[%s205 + $0x74] sm:$0xf] %v264
                %v266 = vld [vmem:[%s204 + $0x78] sm:$0xf]
                %267 = vst [vmem:[%s205 + $0x78] sm:$0xf] %v266
                %v268 = vld [vmem:[%s204 + $0x7c] sm:$0xf]
                %269 = vst [vmem:[%s205 + $0x7c] sm:$0xf] %v268
                %v270 = vld [vmem:[%s204 + $0x80] sm:$0xf]
                %271 = vst [vmem:[%s205 + $0x80] sm:$0xf] %v270
                %v272 = vld [vmem:[%s204 + $0x84] sm:$0xf]
                %273 = vst [vmem:[%s205 + $0x84] sm:$0xf] %v272
                %v274 = vld [vmem:[%s204 + $0x88] sm:$0xf]
                %275 = vst [vmem:[%s205 + $0x88] sm:$0xf] %v274
                %v276 = vld [vmem:[%s204 + $0x8c] sm:$0xf]
                %277 = vst [vmem:[%s205 + $0x8c] sm:$0xf] %v276
                %v278 = vld [vmem:[%s204 + $0x120] sm:$0xf]
                %279 = vst [vmem:[%s205 + $0x90] sm:$0xf] %v278
                %v280 = vld [vmem:[%s204 + $0x124] sm:$0xf]
                %281 = vst [vmem:[%s205 + $0x94] sm:$0xf] %v280
                %v282 = vld [vmem:[%s204 + $0x128] sm:$0xf]
                %283 = vst [vmem:[%s205 + $0x98] sm:$0xf] %v282
                %v284 = vld [vmem:[%s204 + $0x12c] sm:$0xf]
                %285 = vst [vmem:[%s205 + $0x9c] sm:$0xf] %v284
                %v286 = vld [vmem:[%s204 + $0x130] sm:$0xf]
                %287 = vst [vmem:[%s205 + $0xa0] sm:$0xf] %v286
                %v288 = vld [vmem:[%s204 + $0x134] sm:$0xf]
                %289 = vst [vmem:[%s205 + $0xa4] sm:$0xf] %v288
                %v290 = vld [vmem:[%s204 + $0x138] sm:$0xf]
                %291 = vst [vmem:[%s205 + $0xa8] sm:$0xf] %v290
                %v292 = vld [vmem:[%s204 + $0x13c] sm:$0xf]
                %293 = vst [vmem:[%s205 + $0xac] sm:$0xf] %v292
                %v294 = vld [vmem:[%s204 + $0x140] sm:$0xf]
                %295 = vst [vmem:[%s205 + $0xb0] sm:$0xf] %v294
                %v296 = vld [vmem:[%s204 + $0x144] sm:$0xf]
                %297 = vst [vmem:[%s205 + $0xb4] sm:$0xf] %v296
                %v298 = vld [vmem:[%s204 + $0x148] sm:$0xf]
                %299 = vst [vmem:[%s205 + $0xb8] sm:$0xf] %v298
                %v300 = vld [vmem:[%s204 + $0x14c] sm:$0xf]
                %301 = vst [vmem:[%s205 + $0xbc] sm:$0xf] %v300
                %v302 = vld [vmem:[%s204 + $0x150] sm:$0xf]
                %303 = vst [vmem:[%s205 + $0xc0] sm:$0xf] %v302
                %v304 = vld [vmem:[%s204 + $0x154] sm:$0xf]
                %305 = vst [vmem:[%s205 + $0xc4] sm:$0xf] %v304
                %v306 = vld [vmem:[%s204 + $0x158] sm:$0xf]
                %307 = vst [vmem:[%s205 + $0xc8] sm:$0xf] %v306
                %v308 = vld [vmem:[%s204 + $0x15c] sm:$0xf]
                %309 = vst [vmem:[%s205 + $0xcc] sm:$0xf] %v308
                %v310 = vld [vmem:[%s204 + $0x160] sm:$0xf]
                %311 = vst [vmem:[%s205 + $0xd0] sm:$0xf] %v310
                %v312 = vld [vmem:[%s204 + $0x164] sm:$0xf]
                %313 = vst [vmem:[%s205 + $0xd4] sm:$0xf] %v312
                %v314 = vld [vmem:[%s204 + $0x168] sm:$0xf]
                %315 = vst [vmem:[%s205 + $0xd8] sm:$0xf] %v314
                %v316 = vld [vmem:[%s204 + $0x16c] sm:$0xf]
                %317 = vst [vmem:[%s205 + $0xdc] sm:$0xf] %v316
                %v318 = vld [vmem:[%s204 + $0x170] sm:$0xf]
                %319 = vst [vmem:[%s205 + $0xe0] sm:$0xf] %v318
                %v320 = vld [vmem:[%s204 + $0x174] sm:$0xf]
                %321 = vst [vmem:[%s205 + $0xe4] sm:$0xf] %v320
                %v322 = vld [vmem:[%s204 + $0x178] sm:$0xf]
                %323 = vst [vmem:[%s205 + $0xe8] sm:$0xf] %v322
                %v324 = vld [vmem:[%s204 + $0x17c] sm:$0xf]
                %325 = vst [vmem:[%s205 + $0xec] sm:$0xf] %v324
                %v326 = vld [vmem:[%s204 + $0x180] sm:$0xf]
                %327 = vst [vmem:[%s205 + $0xf0] sm:$0xf] %v326
                %v328 = vld [vmem:[%s204 + $0x184] sm:$0xf]
                %329 = vst [vmem:[%s205 + $0xf4] sm:$0xf] %v328
                %v330 = vld [vmem:[%s204 + $0x188] sm:$0xf]
                %331 = vst [vmem:[%s205 + $0xf8] sm:$0xf] %v330
                %v332 = vld [vmem:[%s204 + $0x18c] sm:$0xf]
                %333 = vst [vmem:[%s205 + $0xfc] sm:$0xf] %v332
                %v334 = vld [vmem:[%s204 + $0x190] sm:$0xf]
                %335 = vst [vmem:[%s205 + $0x100] sm:$0xf] %v334
                %v336 = vld [vmem:[%s204 + $0x194] sm:$0xf]
                %337 = vst [vmem:[%s205 + $0x104] sm:$0xf] %v336
                %v338 = vld [vmem:[%s204 + $0x198] sm:$0xf]
                %339 = vst [vmem:[%s205 + $0x108] sm:$0xf] %v338
                %v340 = vld [vmem:[%s204 + $0x19c] sm:$0xf]
                %341 = vst [vmem:[%s205 + $0x10c] sm:$0xf] %v340
                %v342 = vld [vmem:[%s204 + $0x1a0] sm:$0xf]
                %343 = vst [vmem:[%s205 + $0x110] sm:$0xf] %v342
                %v344 = vld [vmem:[%s204 + $0x1a4] sm:$0xf]
                %345 = vst [vmem:[%s205 + $0x114] sm:$0xf] %v344
                %v346 = vld [vmem:[%s204 + $0x1a8] sm:$0xf]
                %347 = vst [vmem:[%s205 + $0x118] sm:$0xf] %v346
                %v348 = vld [vmem:[%s204 + $0x1ac] sm:$0xf]
                %349 = vst [vmem:[%s205 + $0x11c] sm:$0xf] %v348
              $region45: #{subpixel_conv_block.2} parent=39 // loop_footer
                %s203 = sadd.s32 1, %s199
              $region46: #{subpixel_conv_block.2} parent=39 // loop_footer_branch
                %198 = sbr.rel target = $region42
              $region47: #{subpixel_conv_block.2} parent=39 // loop_exit
                _
            $region40: #{subpixel_conv_block.2} parent=31 // pred_fallthru
              _
          $region32: #{subpixel_conv_block.2} parent=27 // pred_fallthru
            _
          %513 = vnop
        $region28: #{subpixel_conv_block.2} parent=23 // pred_fallthru
          _
      $region24: #{subpixel_conv_block.2} parent=5 // pred_fallthru
        _
      %p514 = scmp.le.s32.totalorder 1, %s12
      %p515 = scmp.lt.s32.totalorder %s12, 3
      %p516 = pnand %p514, %p515
      %p517 = pneg %p516
      // Predicated region
      $region66: #{subpixel_conv_block.2} parent=5 // pred_check
        _
      $region67: #{subpixel_conv_block.2} parent=5 // pred_check_branch
        %519 = sbr.rel (%p516) target = $region69
      $region68: #{subpixel_conv_block.2} parent=5 // pred_region
        %s520 = ssub.s32 %s12, 1
        %s521 = sand.u32 %s37, 1
        %s522 = sand.u32 %s37, 1
        %s523 = smul.addr %s522, 288
        %s524 = scalar_lea.vmem [#allocation2], %s523
        // Predicated region
        $region70: #{subpixel_conv_block.2} parent=68 // pred_check
          %p525 = pneg %p50
        $region71: #{subpixel_conv_block.2} parent=68 // pred_check_branch
          %527 = sbr.rel (%p525) target = $region73
        $region72: #{subpixel_conv_block.2} parent=68 // pred_region
          _
        $region73: #{subpixel_conv_block.2} parent=68 // pred_fallthru
          _
        // Predicated region
        $region74: #{subpixel_conv_block.2} parent=68 // pred_check
          %p528 = pneg %p92
        $region75: #{subpixel_conv_block.2} parent=68 // pred_check_branch
          %530 = sbr.rel (%p528) target = $region77
        $region76: #{subpixel_conv_block.2} parent=68 // pred_region
          %531 = dma.done [#allocation4], 32
        $region77: #{subpixel_conv_block.2} parent=68 // pred_fallthru
          _
        %s532 = sand.u32 %s37, 1
        %s533 = sand.u32 %s37, 1
        %s534 = smul.addr %s533, 288
        %s535 = scalar_lea.vmem [#allocation2], %s534
        %p536 = pneg %p50
        %p537 = pneg %p47
        %p538 = pneg %p71
        %p539 = pneg %p68
        %p540 = pneg %p92
        %p541 = pneg %p89
        %p542 = pneg %p120
        %p543 = pneg %p117
        %s544 = sadd.s32 %s21, %s22
        %s545 = smul.u32 16, %s544
        %p546 = scmp.lt.s32.totalorder %s545, 31
        %s547 = scalar_select %p546, %s545, 31
        %s548 = smul.addr %s547, 2
        %s549 = smul.addr %s548, 8
        %s550 = scalar_lea.vmem %s3, %s549
        %p551 = pneg %p148
        %p552 = pneg %p145
        %p553 = scmp.lt.s32.totalorder %s21, 1
        %s554 = scalar_select %p553, %s21, 1
        %p555 = scmp.lt.s32.totalorder %s22, 0
        %s556 = scalar_select %p555, %s22, 0
        %s557 = smul.addr %s556, 2
        %s558 = smul.addr %s554, 2
        %s559 = sadd.s32 %s557, %s558
        %s560 = smul.addr %s559, 2
        %s561 = scalar_lea.vmem %s4, %s560
        %s562 = sadd.s32 %s21, %s22
        %s563 = smul.u32 16, %s562
        %p564 = scmp.lt.s32.totalorder %s563, 31
        %s565 = scalar_select %p564, %s563, 31
        %s566 = smul.addr %s565, 2
        %s567 = smul.addr %s566, 8
        %s568 = scalar_lea.vmem %s3, %s567
        %s569 = sadd.s32 %s21, %s22
        %s570 = smul.u32 16, %s569
        %p571 = scmp.lt.s32.totalorder %s21, 1
        %s572 = scalar_select %p571, %s21, 1
        %p573 = scmp.lt.s32.totalorder %s22, 0
        %s574 = scalar_select %p573, %s22, 0
        %s575 = smul.addr %s574, 2
        %s576 = smul.addr %s572, 2
        %s577 = sadd.s32 %s575, %s576
        %s578 = smul.addr %s577, 2
        %s579 = scalar_lea.vmem %s4, %s578
        %s581 = smul.u32 %s22, 16
        %s582 = smul.u32 %s581, 2
        %s583 = smul.addr %s582, 4
        %s584 = scalar_lea.vmem %s524, %s583 [#allocation2]
        %v585 = vld [vmem:[%s584] sm:$0xf]
        %v586 = vld [vmem:[%s584 + $0x8] sm:$0xf]
        %v587 = vld [vmem:[%s584 + $0x10] sm:$0xf]
        %v588 = vld [vmem:[%s584 + $0x18] sm:$0xf]
        %v589 = vld [vmem:[%s584 + $0x20] sm:$0xf]
        %v590 = vld [vmem:[%s584 + $0x28] sm:$0xf]
        %v591 = vld [vmem:[%s584 + $0x30] sm:$0xf]
        %v592 = vld [vmem:[%s584 + $0x38] sm:$0xf]
        %v593 = vld [vmem:[%s584 + $0x40] sm:$0xf]
        %v594 = vld [vmem:[%s584 + $0x48] sm:$0xf]
        %v595 = vld [vmem:[%s584 + $0x50] sm:$0xf]
        %v596 = vld [vmem:[%s584 + $0x58] sm:$0xf]
        %v597 = vld [vmem:[%s584 + $0x60] sm:$0xf]
        %v598 = vld [vmem:[%s584 + $0x68] sm:$0xf]
        %v599 = vld [vmem:[%s584 + $0x70] sm:$0xf]
        %v600 = vld [vmem:[%s584 + $0x78] sm:$0xf]
        %v601 = vld [vmem:[%s1] sm:$0xff]
        %v602 = vld [vmem:[%s1 + $0x8] sm:$0xff]
        %v603 = vld [vmem:[%s1 + $0x10] sm:$0xff]
        %v604 = vld [vmem:[%s1 + $0x18] sm:$0xff]
        %v605 = vld [vmem:[%s1 + $0x20] sm:$0xff]
        %v606 = vld [vmem:[%s1 + $0x28] sm:$0xff]
        %v607 = vld [vmem:[%s1 + $0x30] sm:$0xff]
        %v608 = vld [vmem:[%s1 + $0x38] sm:$0xff]
        %s609 = sadd.s32 %s582, 36
        %s610 = smul.addr %s609, 4
        %s611 = scalar_lea.vmem %s524, %s610 [#allocation2]
        %v612 = vld [vmem:[%s611] sm:$0xf]
        %v613 = vld [vmem:[%s611 + $0x8] sm:$0xf]
        %v614 = vld [vmem:[%s611 + $0x10] sm:$0xf]
        %v615 = vld [vmem:[%s611 + $0x18] sm:$0xf]
        %v616 = vld [vmem:[%s611 + $0x20] sm:$0xf]
        %v617 = vld [vmem:[%s611 + $0x28] sm:$0xf]
        %v618 = vld [vmem:[%s611 + $0x30] sm:$0xf]
        %v619 = vld [vmem:[%s611 + $0x38] sm:$0xf]
        %v620 = vld [vmem:[%s611 + $0x40] sm:$0xf]
        %v621 = vld [vmem:[%s611 + $0x48] sm:$0xf]
        %v622 = vld [vmem:[%s611 + $0x50] sm:$0xf]
        %v623 = vld [vmem:[%s611 + $0x58] sm:$0xf]
        %v624 = vld [vmem:[%s611 + $0x60] sm:$0xf]
        %v625 = vld [vmem:[%s611 + $0x68] sm:$0xf]
        %v626 = vld [vmem:[%s611 + $0x70] sm:$0xf]
        %v627 = vld [vmem:[%s611 + $0x78] sm:$0xf]
        %s628 = scalar_lea.vmem %s1, 64
        %v629 = vld [vmem:[%s628] sm:$0xff]
        %v630 = vld [vmem:[%s628 + $0x8] sm:$0xff]
        %v631 = vld [vmem:[%s628 + $0x10] sm:$0xff]
        %v632 = vld [vmem:[%s628 + $0x18] sm:$0xff]
        %v633 = vld [vmem:[%s628 + $0x20] sm:$0xff]
        %v634 = vld [vmem:[%s628 + $0x28] sm:$0xff]
        %v635 = vld [vmem:[%s628 + $0x30] sm:$0xff]
        %v636 = vld [vmem:[%s628 + $0x38] sm:$0xff]
        %v653 = vunpack.c.l.b16 %v612
        %v654 = vunpack.c.l.b16 %v613
        %v655 = vunpack.c.l.b16 %v614
        %v656 = vunpack.c.l.b16 %v615
        %v657 = vunpack.c.l.b16 %v616
        %v658 = vunpack.c.l.b16 %v617
        %v659 = vunpack.c.l.b16 %v618
        %v660 = vunpack.c.l.b16 %v619
        %v661 = vunpack.c.l.b16 %v620
        %v662 = vunpack.c.l.b16 %v621
        %v663 = vunpack.c.l.b16 %v622
        %v664 = vunpack.c.l.b16 %v623
        %v665 = vunpack.c.l.b16 %v624
        %v666 = vunpack.c.l.b16 %v625
        %v667 = vunpack.c.l.b16 %v626
        %v668 = vunpack.c.l.b16 %v627
        %v669 = vpack.c.b16 %v654, %v653
        %v670 = vpack.c.b16 %v656, %v655
        %v671 = vpack.c.b16 %v658, %v657
        %v672 = vpack.c.b16 %v660, %v659
        %v673 = vpack.c.b16 %v662, %v661
        %v674 = vpack.c.b16 %v664, %v663
        %v675 = vpack.c.b16 %v666, %v665
        %v676 = vpack.c.b16 %v668, %v667
        %v685 = vunpack.c.l.b16 %v629
        %v686 = vunpack.c.h.b16 %v629
        %v687 = vunpack.c.l.b16 %v630
        %v688 = vunpack.c.h.b16 %v630
        %v689 = vunpack.c.l.b16 %v631
        %v690 = vunpack.c.h.b16 %v631
        %v691 = vunpack.c.l.b16 %v632
        %v692 = vunpack.c.h.b16 %v632
        %v693 = vunpack.c.l.b16 %v633
        %v694 = vunpack.c.h.b16 %v633
        %v695 = vunpack.c.l.b16 %v634
        %v696 = vunpack.c.h.b16 %v634
        %v697 = vunpack.c.l.b16 %v635
        %v698 = vunpack.c.h.b16 %v635
        %v699 = vunpack.c.l.b16 %v636
        %v700 = vunpack.c.h.b16 %v636
        %v701 = vpack.c.b16 %v687, %v685
        %v702 = vpack.c.b16 %v688, %v686
        %v703 = vpack.c.b16 %v691, %v689
        %v704 = vpack.c.b16 %v692, %v690
        %v705 = vpack.c.b16 %v695, %v693
        %v706 = vpack.c.b16 %v696, %v694
        %v707 = vpack.c.b16 %v699, %v697
        %v708 = vpack.c.b16 %v700, %v698
        %vm717 = vcmask 523264
        %v719 = vsel %vm717, %v669, 0
        %v722 = vsel %vm717, %v670, 0
        %v725 = vsel %vm717, %v671, 0
        %v728 = vsel %vm717, %v672, 0
        %v731 = vsel %vm717, %v673, 0
        %v734 = vsel %vm717, %v674, 0
        %v737 = vsel %vm717, %v675, 0
        %v740 = vsel %vm717, %v676, 0
        %742 = vmatprep.subr.bf16.mxu0 %v702
        %743 = vmatpush1.bf16.msra.mxu0 %v701
        %744 = vmatprep.subr.bf16.mxu0 %v704
        %745 = vmatpush1.bf16.msra.mxu0 %v703
        %746 = vmatprep.subr.bf16.mxu0 %v706
        %747 = vmatpush1.bf16.msra.mxu0 %v705
        %748 = vmatprep.subr.bf16.mxu0 %v708
        %749 = vmatpush1.bf16.msra.mxu0 %v707
        %750 = vmatprep.subr.bf16.mxu0 0
        %751 = vmatpush1.bf16.msra.mxu0 0
        %752 = vmatprep.subr.bf16.mxu0 0
        %753 = vmatpush1.bf16.msra.mxu0 0
        %754 = vmatprep.subr.bf16.mxu0 0
        %755 = vmatpush1.bf16.msra.mxu0 0
        %756 = vmatprep.subr.bf16.mxu0 0
        %757 = vmatpush1.bf16.msra.mxu0 0
        %758 = vmatprep.subr.bf16.mxu0 0
        %759 = vmatpush1.bf16.msra.mxu0 0
        %760 = vmatprep.subr.bf16.mxu0 0
        %761 = vmatpush1.bf16.msra.mxu0 0
        %762 = vmatprep.subr.bf16.mxu0 0
        %763 = vmatpush1.bf16.msra.mxu0 0
        %764 = vmatprep.subr.bf16.mxu0 0
        %765 = vmatpush1.bf16.msra.mxu0 0
        %766 = vmatprep.subr.bf16.mxu0 0
        %767 = vmatpush1.bf16.msra.mxu0 0
        %768 = vmatprep.subr.bf16.mxu0 0
        %769 = vmatpush1.bf16.msra.mxu0 0
        %770 = vmatprep.subr.bf16.mxu0 0
        %771 = vmatpush1.bf16.msra.mxu0 0
        %772 = vmatprep.subr.bf16.mxu0 0
        %773 = vmatpush1.bf16.msra.mxu0 0
        %774 = vmatprep.mubr.bf16.mxu0 0
        %775 = vmatmul.mubr.bf16.gmra.mrb[0].mxu0 %v719
        %v776 = vpop.f32.mrb[0].mxu0
        %v777 = vadd.f32 0.0, %v776
        %v778 = vpop.f32.mrb[0].mxu0
        %v779 = vadd.f32 0.0, %v778
        %v780 = vpop.f32.mrb[0].mxu0
        %v781 = vadd.f32 0.0, %v780
        %v782 = vpop.f32.mrb[0].mxu0
        %v783 = vadd.f32 0.0, %v782
        %784 = vmatprep.mubr.bf16.mxu0 0
        %785 = vmatmul.mubr.bf16.gmra.mrb[0].mxu0 %v722
        %v786 = vpop.f32.mrb[0].mxu0
        %v787 = vadd.f32 0.0, %v786
        %v788 = vpop.f32.mrb[0].mxu0
        %v789 = vadd.f32 0.0, %v788
        %v790 = vpop.f32.mrb[0].mxu0
        %v791 = vadd.f32 0.0, %v790
        %v792 = vpop.f32.mrb[0].mxu0
        %v793 = vadd.f32 0.0, %v792
        %794 = vmatprep.mubr.bf16.mxu0 0
        %795 = vmatmul.mubr.bf16.gmra.mrb[0].mxu0 %v725
        %v796 = vpop.f32.mrb[0].mxu0
        %v797 = vadd.f32 0.0, %v796
        %v798 = vpop.f32.mrb[0].mxu0
        %v799 = vadd.f32 0.0, %v798
        %v800 = vpop.f32.mrb[0].mxu0
        %v801 = vadd.f32 0.0, %v800
        %v802 = vpop.f32.mrb[0].mxu0
        %v803 = vadd.f32 0.0, %v802
        %804 = vmatprep.mubr.bf16.mxu0 0
        %805 = vmatmul.mubr.bf16.gmra.mrb[0].mxu0 %v728
        %v806 = vpop.f32.mrb[0].mxu0
        %v807 = vadd.f32 0.0, %v806
        %v808 = vpop.f32.mrb[0].mxu0
        %v809 = vadd.f32 0.0, %v808
        %v810 = vpop.f32.mrb[0].mxu0
        %v811 = vadd.f32 0.0, %v810
        %v812 = vpop.f32.mrb[0].mxu0
        %v813 = vadd.f32 0.0, %v812
        %814 = vmatprep.mubr.bf16.mxu0 0
        %815 = vmatmul.mubr.bf16.gmra.mrb[0].mxu0 %v731
        %v816 = vpop.f32.mrb[0].mxu0
        %v817 = vadd.f32 0.0, %v816
        %v818 = vpop.f32.mrb[0].mxu0
        %v819 = vadd.f32 0.0, %v818
        %v820 = vpop.f32.mrb[0].mxu0
        %v821 = vadd.f32 0.0, %v820
        %v822 = vpop.f32.mrb[0].mxu0
        %v823 = vadd.f32 0.0, %v822
        %824 = vmatprep.mubr.bf16.mxu0 0
        %825 = vmatmul.mubr.bf16.gmra.mrb[0].mxu0 %v734
        %v826 = vpop.f32.mrb[0].mxu0
        %v827 = vadd.f32 0.0, %v826
        %v828 = vpop.f32.mrb[0].mxu0
        %v829 = vadd.f32 0.0, %v828
        %v830 = vpop.f32.mrb[0].mxu0
        %v831 = vadd.f32 0.0, %v830
        %v832 = vpop.f32.mrb[0].mxu0
        %v833 = vadd.f32 0.0, %v832
        %834 = vmatprep.mubr.bf16.mxu0 0
        %835 = vmatmul.mubr.bf16.gmra.mrb[0].mxu0 %v737
        %v836 = vpop.f32.mrb[0].mxu0
        %v837 = vadd.f32 0.0, %v836
        %v838 = vpop.f32.mrb[0].mxu0
        %v839 = vadd.f32 0.0, %v838
        %v840 = vpop.f32.mrb[0].mxu0
        %v841 = vadd.f32 0.0, %v840
        %v842 = vpop.f32.mrb[0].mxu0
        %v843 = vadd.f32 0.0, %v842
        %844 = vmatprep.mubr.bf16.mxu0 0
        %845 = vmatmul.mubr.bf16.gmra.mrb[0].mxu0 %v740
        %v846 = vpop.f32.mrb[0].mxu0
        %v847 = vadd.f32 0.0, %v846
        %v848 = vpop.f32.mrb[0].mxu0
        %v849 = vadd.f32 0.0, %v848
        %v850 = vpop.f32.mrb[0].mxu0
        %v851 = vadd.f32 0.0, %v850
        %v852 = vpop.f32.mrb[0].mxu0
        %v853 = vadd.f32 0.0, %v852
        %854 = vdwg.mxu0
        %v871 = vunpack.c.l.b16 %v585
        %v872 = vunpack.c.l.b16 %v586
        %v873 = vunpack.c.l.b16 %v587
        %v874 = vunpack.c.l.b16 %v588
        %v875 = vunpack.c.l.b16 %v589
        %v876 = vunpack.c.l.b16 %v590
        %v877 = vunpack.c.l.b16 %v591
        %v878 = vunpack.c.l.b16 %v592
        %v879 = vunpack.c.l.b16 %v593
        %v880 = vunpack.c.l.b16 %v594
        %v881 = vunpack.c.l.b16 %v595
        %v882 = vunpack.c.l.b16 %v596
        %v883 = vunpack.c.l.b16 %v597
        %v884 = vunpack.c.l.b16 %v598
        %v885 = vunpack.c.l.b16 %v599
        %v886 = vunpack.c.l.b16 %v600
        %v887 = vpack.c.b16 %v872, %v871
        %v888 = vpack.c.b16 %v874, %v873
        %v889 = vpack.c.b16 %v876, %v875
        %v890 = vpack.c.b16 %v878, %v877
        %v891 = vpack.c.b16 %v880, %v879
        %v892 = vpack.c.b16 %v882, %v881
        %v893 = vpack.c.b16 %v884, %v883
        %v894 = vpack.c.b16 %v886, %v885
        %v903 = vunpack.c.l.b16 %v601
        %v904 = vunpack.c.h.b16 %v601
        %v905 = vunpack.c.l.b16 %v602
        %v906 = vunpack.c.h.b16 %v602
        %v907 = vunpack.c.l.b16 %v603
        %v908 = vunpack.c.h.b16 %v603
        %v909 = vunpack.c.l.b16 %v604
        %v910 = vunpack.c.h.b16 %v604
        %v911 = vunpack.c.l.b16 %v605
        %v912 = vunpack.c.h.b16 %v605
        %v913 = vunpack.c.l.b16 %v606
        %v914 = vunpack.c.h.b16 %v606
        %v915 = vunpack.c.l.b16 %v607
        %v916 = vunpack.c.h.b16 %v607
        %v917 = vunpack.c.l.b16 %v608
        %v918 = vunpack.c.h.b16 %v608
        %v919 = vpack.c.b16 %v905, %v903
        %v920 = vpack.c.b16 %v906, %v904
        %v921 = vpack.c.b16 %v909, %v907
        %v922 = vpack.c.b16 %v910, %v908
        %v923 = vpack.c.b16 %v913, %v911
        %v924 = vpack.c.b16 %v914, %v912
        %v925 = vpack.c.b16 %v917, %v915
        %v926 = vpack.c.b16 %v918, %v916
        %v936 = vsel %vm717, %v887, 0
        %v939 = vsel %vm717, %v888, 0
        %v942 = vsel %vm717, %v889, 0
        %v945 = vsel %vm717, %v890, 0
        %v948 = vsel %vm717, %v891, 0
        %v951 = vsel %vm717, %v892, 0
        %v954 = vsel %vm717, %v893, 0
        %v957 = vsel %vm717, %v894, 0
        %959 = vmatprep.subr.bf16.mxu0 %v920
        %960 = vmatpush1.bf16.msra.mxu0 %v919
        %961 = vmatprep.subr.bf16.mxu0 %v922
        %962 = vmatpush1.bf16.msra.mxu0 %v921
        %963 = vmatprep.subr.bf16.mxu0 %v924
        %964 = vmatpush1.bf16.msra.mxu0 %v923
        %965 = vmatprep.subr.bf16.mxu0 %v926
        %966 = vmatpush1.bf16.msra.mxu0 %v925
        %967 = vmatprep.subr.bf16.mxu0 0
        %968 = vmatpush1.bf16.msra.mxu0 0
        %969 = vmatprep.subr.bf16.mxu0 0
        %970 = vmatpush1.bf16.msra.mxu0 0
        %971 = vmatprep.subr.bf16.mxu0 0
        %972 = vmatpush1.bf16.msra.mxu0 0
        %973 = vmatprep.subr.bf16.mxu0 0
        %974 = vmatpush1.bf16.msra.mxu0 0
        %975 = vmatprep.subr.bf16.mxu0 0
        %976 = vmatpush1.bf16.msra.mxu0 0
        %977 = vmatprep.subr.bf16.mxu0 0
        %978 = vmatpush1.bf16.msra.mxu0 0
        %979 = vmatprep.subr.bf16.mxu0 0
        %980 = vmatpush1.bf16.msra.mxu0 0
        %981 = vmatprep.subr.bf16.mxu0 0
        %982 = vmatpush1.bf16.msra.mxu0 0
        %983 = vmatprep.subr.bf16.mxu0 0
        %984 = vmatpush1.bf16.msra.mxu0 0
        %985 = vmatprep.subr.bf16.mxu0 0
        %986 = vmatpush1.bf16.msra.mxu0 0
        %987 = vmatprep.subr.bf16.mxu0 0
        %988 = vmatpush1.bf16.msra.mxu0 0
        %989 = vmatprep.subr.bf16.mxu0 0
        %990 = vmatpush1.bf16.msra.mxu0 0
        %991 = vmatprep.mubr.bf16.mxu0 0
        %992 = vmatmul.mubr.bf16.gmra.mrb[0].mxu0 %v936
        %v993 = vpop.f32.mrb[0].mxu0
        %v994 = vadd.f32 %v777, %v993
        %v995 = vpop.f32.mrb[0].mxu0
        %v996 = vadd.f32 %v779, %v995
        %v997 = vpop.f32.mrb[0].mxu0
        %v998 = vadd.f32 %v781, %v997
        %v999 = vpop.f32.mrb[0].mxu0
        %v1000 = vadd.f32 %v783, %v999
        %1001 = vmatprep.mubr.bf16.mxu0 0
        %1002 = vmatmul.mubr.bf16.gmra.mrb[0].mxu0 %v939
        %v1003 = vpop.f32.mrb[0].mxu0
        %v1004 = vadd.f32 %v787, %v1003
        %v1005 = vpop.f32.mrb[0].mxu0
        %v1006 = vadd.f32 %v789, %v1005
        %v1007 = vpop.f32.mrb[0].mxu0
        %v1008 = vadd.f32 %v791, %v1007
        %v1009 = vpop.f32.mrb[0].mxu0
        %v1010 = vadd.f32 %v793, %v1009
        %1011 = vmatprep.mubr.bf16.mxu0 0
        %1012 = vmatmul.mubr.bf16.gmra.mrb[0].mxu0 %v942
        %v1013 = vpop.f32.mrb[0].mxu0
        %v1014 = vadd.f32 %v797, %v1013
        %v1015 = vpop.f32.mrb[0].mxu0
        %v1016 = vadd.f32 %v799, %v1015
        %v1017 = vpop.f32.mrb[0].mxu0
        %v1018 = vadd.f32 %v801, %v1017
        %v1019 = vpop.f32.mrb[0].mxu0
        %v1020 = vadd.f32 %v803, %v1019
        %1021 = vmatprep.mubr.bf16.mxu0 0
        %1022 = vmatmul.mubr.bf16.gmra.mrb[0].mxu0 %v945
        %v1023 = vpop.f32.mrb[0].mxu0
        %v1024 = vadd.f32 %v807, %v1023
        %v1025 = vpop.f32.mrb[0].mxu0
        %v1026 = vadd.f32 %v809, %v1025
        %v1027 = vpop.f32.mrb[0].mxu0
        %v1028 = vadd.f32 %v811, %v1027
        %v1029 = vpop.f32.mrb[0].mxu0
        %v1030 = vadd.f32 %v813, %v1029
        %1031 = vmatprep.mubr.bf16.mxu0 0
        %1032 = vmatmul.mubr.bf16.gmra.mrb[0].mxu0 %v948
        %v1033 = vpop.f32.mrb[0].mxu0
        %v1034 = vadd.f32 %v817, %v1033
        %v1035 = vpop.f32.mrb[0].mxu0
        %v1036 = vadd.f32 %v819, %v1035
        %v1037 = vpop.f32.mrb[0].mxu0
        %v1038 = vadd.f32 %v821, %v1037
        %v1039 = vpop.f32.mrb[0].mxu0
        %v1040 = vadd.f32 %v823, %v1039
        %1041 = vmatprep.mubr.bf16.mxu0 0
        %1042 = vmatmul.mubr.bf16.gmra.mrb[0].mxu0 %v951
        %v1043 = vpop.f32.mrb[0].mxu0
        %v1044 = vadd.f32 %v827, %v1043
        %v1045 = vpop.f32.mrb[0].mxu0
        %v1046 = vadd.f32 %v829, %v1045
        %v1047 = vpop.f32.mrb[0].mxu0
        %v1048 = vadd.f32 %v831, %v1047
        %v1049 = vpop.f32.mrb[0].mxu0
        %v1050 = vadd.f32 %v833, %v1049
        %1051 = vmatprep.mubr.bf16.mxu0 0
        %1052 = vmatmul.mubr.bf16.gmra.mrb[0].mxu0 %v954
        %v1053 = vpop.f32.mrb[0].mxu0
        %v1054 = vadd.f32 %v837, %v1053
        %v1055 = vpop.f32.mrb[0].mxu0
        %v1056 = vadd.f32 %v839, %v1055
        %v1057 = vpop.f32.mrb[0].mxu0
        %v1058 = vadd.f32 %v841, %v1057
        %v1059 = vpop.f32.mrb[0].mxu0
        %v1060 = vadd.f32 %v843, %v1059
        %1061 = vmatprep.mubr.bf16.mxu0 0
        %1062 = vmatmul.mubr.bf16.gmra.mrb[0].mxu0 %v957
        %v1063 = vpop.f32.mrb[0].mxu0
        %v1064 = vadd.f32 %v847, %v1063
        %v1065 = vpop.f32.mrb[0].mxu0
        %v1066 = vadd.f32 %v849, %v1065
        %v1067 = vpop.f32.mrb[0].mxu0
        %v1068 = vadd.f32 %v851, %v1067
        %v1069 = vpop.f32.mrb[0].mxu0
        %v1070 = vadd.f32 %v853, %v1069
        %1071 = vdwg.mxu0
        %v1072 = vld [vmem:[%s584] sm:$0xf]
        %v1073 = vld [vmem:[%s584 + $0x4] sm:$0x1]
        %v1074 = vld [vmem:[%s584 + $0x8] sm:$0xf]
        %v1075 = vld [vmem:[%s584 + $0xc] sm:$0x1]
        %v1076 = vld [vmem:[%s584 + $0x10] sm:$0xf]
        %v1077 = vld [vmem:[%s584 + $0x14] sm:$0x1]
        %v1078 = vld [vmem:[%s584 + $0x18] sm:$0xf]
        %v1079 = vld [vmem:[%s584 + $0x1c] sm:$0x1]
        %v1080 = vld [vmem:[%s584 + $0x20] sm:$0xf]
        %v1081 = vld [vmem:[%s584 + $0x24] sm:$0x1]
        %v1082 = vld [vmem:[%s584 + $0x28] sm:$0xf]
        %v1083 = vld [vmem:[%s584 + $0x2c] sm:$0x1]
        %v1084 = vld [vmem:[%s584 + $0x30] sm:$0xf]
        %v1085 = vld [vmem:[%s584 + $0x34] sm:$0x1]
        %v1086 = vld [vmem:[%s584 + $0x38] sm:$0xf]
        %v1087 = vld [vmem:[%s584 + $0x3c] sm:$0x1]
        %v1088 = vld [vmem:[%s584 + $0x40] sm:$0xf]
        %v1089 = vld [vmem:[%s584 + $0x44] sm:$0x1]
        %v1090 = vld [vmem:[%s584 + $0x48] sm:$0xf]
        %v1091 = vld [vmem:[%s584 + $0x4c] sm:$0x1]
        %v1092 = vld [vmem:[%s584 + $0x50] sm:$0xf]
        %v1093 = vld [vmem:[%s584 + $0x54] sm:$0x1]
        %v1094 = vld [vmem:[%s584 + $0x58] sm:$0xf]
        %v1095 = vld [vmem:[%s584 + $0x5c] sm:$0x1]
        %v1096 = vld [vmem:[%s584 + $0x60] sm:$0xf]
        %v1097 = vld [vmem:[%s584 + $0x64] sm:$0x1]
        %v1098 = vld [vmem:[%s584 + $0x68] sm:$0xf]
        %v1099 = vld [vmem:[%s584 + $0x6c] sm:$0x1]
        %v1100 = vld [vmem:[%s584 + $0x70] sm:$0xf]
        %v1101 = vld [vmem:[%s584 + $0x74] sm:$0x1]
        %v1102 = vld [vmem:[%s584 + $0x78] sm:$0xf]
        %v1103 = vld [vmem:[%s584 + $0x7c] sm:$0x1]
        %vm1104 = vsmask.f32 3328
        %vm1105 = vsmask.f32 7440
        %vm1106 = vmor %vm1104, %vm1105
        %v1108 = vshrl.u32 %v1072, 16
        %v1110 = vrot.slane %v1108, 4
        %v1111 = vshll.u32 %v1072, 16
        %v1113 = vrot.slane %v1111, 5
        %v1114 = vor.u32 %v1110, %v1113
        %v1115 = vrot.slane %v1114, 4
        %v1117 = vshll.u32 %v1073, 16
        %v1119 = vrot.slane %v1117, 5
        %v1120 = vsel %vm1106, %v1115, %v1119
        %v1122 = vshrl.u32 %v1074, 16
        %v1124 = vrot.slane %v1122, 4
        %v1125 = vshll.u32 %v1074, 16
        %v1127 = vrot.slane %v1125, 5
        %v1128 = vor.u32 %v1124, %v1127
        %v1129 = vrot.slane %v1128, 4
        %v1131 = vshll.u32 %v1075, 16
        %v1133 = vrot.slane %v1131, 5
        %v1134 = vsel %vm1106, %v1129, %v1133
        %v1136 = vshrl.u32 %v1076, 16
        %v1138 = vrot.slane %v1136, 4
        %v1139 = vshll.u32 %v1076, 16
        %v1141 = vrot.slane %v1139, 5
        %v1142 = vor.u32 %v1138, %v1141
        %v1143 = vrot.slane %v1142, 4
        %v1145 = vshll.u32 %v1077, 16
        %v1147 = vrot.slane %v1145, 5
        %v1148 = vsel %vm1106, %v1143, %v1147
        %v1150 = vshrl.u32 %v1078, 16
        %v1152 = vrot.slane %v1150, 4
        %v1153 = vshll.u32 %v1078, 16
        %v1155 = vrot.slane %v1153, 5
        %v1156 = vor.u32 %v1152, %v1155
        %v1157 = vrot.slane %v1156, 4
        %v1159 = vshll.u32 %v1079, 16
        %v1161 = vrot.slane %v1159, 5
        %v1162 = vsel %vm1106, %v1157, %v1161
        %v1164 = vshrl.u32 %v1080, 16
        %v1166 = vrot.slane %v1164, 4
        %v1167 = vshll.u32 %v1080, 16
        %v1169 = vrot.slane %v1167, 5
        %v1170 = vor.u32 %v1166, %v1169
        %v1171 = vrot.slane %v1170, 4
        %v1173 = vshll.u32 %v1081, 16
        %v1175 = vrot.slane %v1173, 5
        %v1176 = vsel %vm1106, %v1171, %v1175
        %v1178 = vshrl.u32 %v1082, 16
        %v1180 = vrot.slane %v1178, 4
        %v1181 = vshll.u32 %v1082, 16
        %v1183 = vrot.slane %v1181, 5
        %v1184 = vor.u32 %v1180, %v1183
        %v1185 = vrot.slane %v1184, 4
        %v1187 = vshll.u32 %v1083, 16
        %v1189 = vrot.slane %v1187, 5
        %v1190 = vsel %vm1106, %v1185, %v1189
        %v1192 = vshrl.u32 %v1084, 16
        %v1194 = vrot.slane %v1192, 4
        %v1195 = vshll.u32 %v1084, 16
        %v1197 = vrot.slane %v1195, 5
        %v1198 = vor.u32 %v1194, %v1197
        %v1199 = vrot.slane %v1198, 4
        %v1201 = vshll.u32 %v1085, 16
        %v1203 = vrot.slane %v1201, 5
        %v1204 = vsel %vm1106, %v1199, %v1203
        %v1206 = vshrl.u32 %v1086, 16
        %v1208 = vrot.slane %v1206, 4
        %v1209 = vshll.u32 %v1086, 16
        %v1211 = vrot.slane %v1209, 5
        %v1212 = vor.u32 %v1208, %v1211
        %v1213 = vrot.slane %v1212, 4
        %v1215 = vshll.u32 %v1087, 16
        %v1217 = vrot.slane %v1215, 5
        %v1218 = vsel %vm1106, %v1213, %v1217
        %v1220 = vshrl.u32 %v1088, 16
        %v1222 = vrot.slane %v1220, 4
        %v1223 = vshll.u32 %v1088, 16
        %v1225 = vrot.slane %v1223, 5
        %v1226 = vor.u32 %v1222, %v1225
        %v1227 = vrot.slane %v1226, 4
        %v1229 = vshll.u32 %v1089, 16
        %v1231 = vrot.slane %v1229, 5
        %v1232 = vsel %vm1106, %v1227, %v1231
        %v1234 = vshrl.u32 %v1090, 16
        %v1236 = vrot.slane %v1234, 4
        %v1237 = vshll.u32 %v1090, 16
        %v1239 = vrot.slane %v1237, 5
        %v1240 = vor.u32 %v1236, %v1239
        %v1241 = vrot.slane %v1240, 4
        %v1243 = vshll.u32 %v1091, 16
        %v1245 = vrot.slane %v1243, 5
        %v1246 = vsel %vm1106, %v1241, %v1245
        %v1248 = vshrl.u32 %v1092, 16
        %v1250 = vrot.slane %v1248, 4
        %v1251 = vshll.u32 %v1092, 16
        %v1253 = vrot.slane %v1251, 5
        %v1254 = vor.u32 %v1250, %v1253
        %v1255 = vrot.slane %v1254, 4
        %v1257 = vshll.u32 %v1093, 16
        %v1259 = vrot.slane %v1257, 5
        %v1260 = vsel %vm1106, %v1255, %v1259
        %v1262 = vshrl.u32 %v1094, 16
        %v1264 = vrot.slane %v1262, 4
        %v1265 = vshll.u32 %v1094, 16
        %v1267 = vrot.slane %v1265, 5
        %v1268 = vor.u32 %v1264, %v1267
        %v1269 = vrot.slane %v1268, 4
        %v1271 = vshll.u32 %v1095, 16
        %v1273 = vrot.slane %v1271, 5
        %v1274 = vsel %vm1106, %v1269, %v1273
        %v1276 = vshrl.u32 %v1096, 16
        %v1278 = vrot.slane %v1276, 4
        %v1279 = vshll.u32 %v1096, 16
        %v1281 = vrot.slane %v1279, 5
        %v1282 = vor.u32 %v1278, %v1281
        %v1283 = vrot.slane %v1282, 4
        %v1285 = vshll.u32 %v1097, 16
        %v1287 = vrot.slane %v1285, 5
        %v1288 = vsel %vm1106, %v1283, %v1287
        %v1290 = vshrl.u32 %v1098, 16
        %v1292 = vrot.slane %v1290, 4
        %v1293 = vshll.u32 %v1098, 16
        %v1295 = vrot.slane %v1293, 5
        %v1296 = vor.u32 %v1292, %v1295
        %v1297 = vrot.slane %v1296, 4
        %v1299 = vshll.u32 %v1099, 16
        %v1301 = vrot.slane %v1299, 5
        %v1302 = vsel %vm1106, %v1297, %v1301
        %v1304 = vshrl.u32 %v1100, 16
        %v1306 = vrot.slane %v1304, 4
        %v1307 = vshll.u32 %v1100, 16
        %v1309 = vrot.slane %v1307, 5
        %v1310 = vor.u32 %v1306, %v1309
        %v1311 = vrot.slane %v1310, 4
        %v1313 = vshll.u32 %v1101, 16
        %v1315 = vrot.slane %v1313, 5
        %v1316 = vsel %vm1106, %v1311, %v1315
        %v1318 = vshrl.u32 %v1102, 16
        %v1320 = vrot.slane %v1318, 4
        %v1321 = vshll.u32 %v1102, 16
        %v1323 = vrot.slane %v1321, 5
        %v1324 = vor.u32 %v1320, %v1323
        %v1325 = vrot.slane %v1324, 4
        %v1327 = vshll.u32 %v1103, 16
        %v1329 = vrot.slane %v1327, 5
        %v1330 = vsel %vm1106, %v1325, %v1329
        %s1331 = scalar_lea.vmem %s1, 128
        %v1332 = vld [vmem:[%s1331] sm:$0xff]
        %v1333 = vld [vmem:[%s1331 + $0x8] sm:$0xff]
        %v1334 = vld [vmem:[%s1331 + $0x10] sm:$0xff]
        %v1335 = vld [vmem:[%s1331 + $0x18] sm:$0xff]
        %v1336 = vld [vmem:[%s1331 + $0x20] sm:$0xff]
        %v1337 = vld [vmem:[%s1331 + $0x28] sm:$0xff]
        %v1338 = vld [vmem:[%s1331 + $0x30] sm:$0xff]
        %v1339 = vld [vmem:[%s1331 + $0x38] sm:$0xff]
        %v1340 = vunpack.c.l.b16 %v1120
        %v1341 = vunpack.c.l.b16 %v1134
        %v1342 = vunpack.c.l.b16 %v1148
        %v1343 = vunpack.c.l.b16 %v1162
        %v1344 = vunpack.c.l.b16 %v1176
        %v1345 = vunpack.c.l.b16 %v1190
        %v1346 = vunpack.c.l.b16 %v1204
        %v1347 = vunpack.c.l.b16 %v1218
        %v1348 = vunpack.c.l.b16 %v1232
        %v1349 = vunpack.c.l.b16 %v1246
        %v1350 = vunpack.c.l.b16 %v1260
        %v1351 = vunpack.c.l.b16 %v1274
        %v1352 = vunpack.c.l.b16 %v1288
        %v1353 = vunpack.c.l.b16 %v1302
        %v1354 = vunpack.c.l.b16 %v1316
        %v1355 = vunpack.c.l.b16 %v1330
        %v1356 = vpack.c.b16 %v1341, %v1340
        %v1357 = vpack.c.b16 %v1343, %v1342
        %v1358 = vpack.c.b16 %v1345, %v1344
        %v1359 = vpack.c.b16 %v1347, %v1346
        %v1360 = vpack.c.b16 %v1349, %v1348
        %v1361 = vpack.c.b16 %v1351, %v1350
        %v1362 = vpack.c.b16 %v1353, %v1352
        %v1363 = vpack.c.b16 %v1355, %v1354
        %v1372 = vunpack.c.l.b16 %v1332
        %v1373 = vunpack.c.h.b16 %v1332
        %v1374 = vunpack.c.l.b16 %v1333
        %v1375 = vunpack.c.h.b16 %v1333
        %v1376 = vunpack.c.l.b16 %v1334
        %v1377 = vunpack.c.h.b16 %v1334
        %v1378 = vunpack.c.l.b16 %v1335
        %v1379 = vunpack.c.h.b16 %v1335
        %v1380 = vunpack.c.l.b16 %v1336
        %v1381 = vunpack.c.h.b16 %v1336
        %v1382 = vunpack.c.l.b16 %v1337
        %v1383 = vunpack.c.h.b16 %v1337
        %v1384 = vunpack.c.l.b16 %v1338
        %v1385 = vunpack.c.h.b16 %v1338
        %v1386 = vunpack.c.l.b16 %v1339
        %v1387 = vunpack.c.h.b16 %v1339
        %v1388 = vpack.c.b16 %v1374, %v1372
        %v1389 = vpack.c.b16 %v1375, %v1373
        %v1390 = vpack.c.b16 %v1378, %v1376
        %v1391 = vpack.c.b16 %v1379, %v1377
        %v1392 = vpack.c.b16 %v1382, %v1380
        %v1393 = vpack.c.b16 %v1383, %v1381
        %v1394 = vpack.c.b16 %v1386, %v1384
        %v1395 = vpack.c.b16 %v1387, %v1385
        %v1405 = vsel %vm717, %v1356, 0
        %v1408 = vsel %vm717, %v1357, 0
        %v1411 = vsel %vm717, %v1358, 0
        %v1414 = vsel %vm717, %v1359, 0
        %v1417 = vsel %vm717, %v1360, 0
        %v1420 = vsel %vm717, %v1361, 0
        %v1423 = vsel %vm717, %v1362, 0
        %v1426 = vsel %vm717, %v1363, 0
        %1428 = vmatprep.subr.bf16.mxu0 %v1389
        %1429 = vmatpush1.bf16.msra.mxu0 %v1388
        %1430 = vmatprep.subr.bf16.mxu0 %v1391
        %1431 = vmatpush1.bf16.msra.mxu0 %v1390
        %1432 = vmatprep.subr.bf16.mxu0 %v1393
        %1433 = vmatpush1.bf16.msra.mxu0 %v1392
        %1434 = vmatprep.subr.bf16.mxu0 %v1395
        %1435 = vmatpush1.bf16.msra.mxu0 %v1394
        %1436 = vmatprep.subr.bf16.mxu0 0
        %1437 = vmatpush1.bf16.msra.mxu0 0
        %1438 = vmatprep.subr.bf16.mxu0 0
        %1439 = vmatpush1.bf16.msra.mxu0 0
        %1440 = vmatprep.subr.bf16.mxu0 0
        %1441 = vmatpush1.bf16.msra.mxu0 0
        %1442 = vmatprep.subr.bf16.mxu0 0
        %1443 = vmatpush1.bf16.msra.mxu0 0
        %1444 = vmatprep.subr.bf16.mxu0 0
        %1445 = vmatpush1.bf16.msra.mxu0 0
        %1446 = vmatprep.subr.bf16.mxu0 0
        %1447 = vmatpush1.bf16.msra.mxu0 0
        %1448 = vmatprep.subr.bf16.mxu0 0
        %1449 = vmatpush1.bf16.msra.mxu0 0
        %1450 = vmatprep.subr.bf16.mxu0 0
        %1451 = vmatpush1.bf16.msra.mxu0 0
        %1452 = vmatprep.subr.bf16.mxu0 0
        %1453 = vmatpush1.bf16.msra.mxu0 0
        %1454 = vmatprep.subr.bf16.mxu0 0
        %1455 = vmatpush1.bf16.msra.mxu0 0
        %1456 = vmatprep.subr.bf16.mxu0 0
        %1457 = vmatpush1.bf16.msra.mxu0 0
        %1458 = vmatprep.subr.bf16.mxu0 0
        %1459 = vmatpush1.bf16.msra.mxu0 0
        %1460 = vmatprep.mubr.bf16.mxu0 0
        %1461 = vmatmul.mubr.bf16.gmra.mrb[0].mxu0 %v1405
        %v1462 = vpop.f32.mrb[0].mxu0
        %v1463 = vadd.f32 0.0, %v1462
        %v1464 = vpop.f32.mrb[0].mxu0
        %v1465 = vadd.f32 0.0, %v1464
        %v1466 = vpop.f32.mrb[0].mxu0
        %v1467 = vadd.f32 0.0, %v1466
        %v1468 = vpop.f32.mrb[0].mxu0
        %v1469 = vadd.f32 0.0, %v1468
        %1470 = vmatprep.mubr.bf16.mxu0 0
        %1471 = vmatmul.mubr.bf16.gmra.mrb[0].mxu0 %v1408
        %v1472 = vpop.f32.mrb[0].mxu0
        %v1473 = vadd.f32 0.0, %v1472
        %v1474 = vpop.f32.mrb[0].mxu0
        %v1475 = vadd.f32 0.0, %v1474
        %v1476 = vpop.f32.mrb[0].mxu0
        %v1477 = vadd.f32 0.0, %v1476
        %v1478 = vpop.f32.mrb[0].mxu0
        %v1479 = vadd.f32 0.0, %v1478
        %1480 = vmatprep.mubr.bf16.mxu0 0
        %1481 = vmatmul.mubr.bf16.gmra.mrb[0].mxu0 %v1411
        %v1482 = vpop.f32.mrb[0].mxu0
        %v1483 = vadd.f32 0.0, %v1482
        %v1484 = vpop.f32.mrb[0].mxu0
        %v1485 = vadd.f32 0.0, %v1484
        %v1486 = vpop.f32.mrb[0].mxu0
        %v1487 = vadd.f32 0.0, %v1486
        %v1488 = vpop.f32.mrb[0].mxu0
        %v1489 = vadd.f32 0.0, %v1488
        %1490 = vmatprep.mubr.bf16.mxu0 0
        %1491 = vmatmul.mubr.bf16.gmra.mrb[0].mxu0 %v1414
        %v1492 = vpop.f32.mrb[0].mxu0
        %v1493 = vadd.f32 0.0, %v1492
        %v1494 = vpop.f32.mrb[0].mxu0
        %v1495 = vadd.f32 0.0, %v1494
        %v1496 = vpop.f32.mrb[0].mxu0
        %v1497 = vadd.f32 0.0, %v1496
        %v1498 = vpop.f32.mrb[0].mxu0
        %v1499 = vadd.f32 0.0, %v1498
        %1500 = vmatprep.mubr.bf16.mxu0 0
        %1501 = vmatmul.mubr.bf16.gmra.mrb[0].mxu0 %v1417
        %v1502 = vpop.f32.mrb[0].mxu0
        %v1503 = vadd.f32 0.0, %v1502
        %v1504 = vpop.f32.mrb[0].mxu0
        %v1505 = vadd.f32 0.0, %v1504
        %v1506 = vpop.f32.mrb[0].mxu0
        %v1507 = vadd.f32 0.0, %v1506
        %v1508 = vpop.f32.mrb[0].mxu0
        %v1509 = vadd.f32 0.0, %v1508
        %1510 = vmatprep.mubr.bf16.mxu0 0
        %1511 = vmatmul.mubr.bf16.gmra.mrb[0].mxu0 %v1420
        %v1512 = vpop.f32.mrb[0].mxu0
        %v1513 = vadd.f32 0.0, %v1512
        %v1514 = vpop.f32.mrb[0].mxu0
        %v1515 = vadd.f32 0.0, %v1514
        %v1516 = vpop.f32.mrb[0].mxu0
        %v1517 = vadd.f32 0.0, %v1516
        %v1518 = vpop.f32.mrb[0].mxu0
        %v1519 = vadd.f32 0.0, %v1518
        %1520 = vmatprep.mubr.bf16.mxu0 0
        %1521 = vmatmul.mubr.bf16.gmra.mrb[0].mxu0 %v1423
        %v1522 = vpop.f32.mrb[0].mxu0
        %v1523 = vadd.f32 0.0, %v1522
        %v1524 = vpop.f32.mrb[0].mxu0
        %v1525 = vadd.f32 0.0, %v1524
        %v1526 = vpop.f32.mrb[0].mxu0
        %v1527 = vadd.f32 0.0, %v1526
        %v1528 = vpop.f32.mrb[0].mxu0
        %v1529 = vadd.f32 0.0, %v1528
        %1530 = vmatprep.mubr.bf16.mxu0 0
        %1531 = vmatmul.mubr.bf16.gmra.mrb[0].mxu0 %v1426
        %v1532 = vpop.f32.mrb[0].mxu0
        %v1533 = vadd.f32 0.0, %v1532
        %v1534 = vpop.f32.mrb[0].mxu0
        %v1535 = vadd.f32 0.0, %v1534
        %v1536 = vpop.f32.mrb[0].mxu0
        %v1537 = vadd.f32 0.0, %v1536
        %v1538 = vpop.f32.mrb[0].mxu0
        %v1539 = vadd.f32 0.0, %v1538
        %1540 = vdwg.mxu0
        %v1541 = vadd.f32 %v994, %v1463
        %v1542 = vadd.f32 %v996, %v1465
        %v1543 = vadd.f32 %v998, %v1467
        %v1544 = vadd.f32 %v1000, %v1469
        %v1545 = vadd.f32 %v1004, %v1473
        %v1546 = vadd.f32 %v1006, %v1475
        %v1547 = vadd.f32 %v1008, %v1477
        %v1548 = vadd.f32 %v1010, %v1479
        %v1549 = vadd.f32 %v1014, %v1483
        %v1550 = vadd.f32 %v1016, %v1485
        %v1551 = vadd.f32 %v1018, %v1487
        %v1552 = vadd.f32 %v1020, %v1489
        %v1553 = vadd.f32 %v1024, %v1493
        %v1554 = vadd.f32 %v1026, %v1495
        %v1555 = vadd.f32 %v1028, %v1497
        %v1556 = vadd.f32 %v1030, %v1499
        %v1557 = vadd.f32 %v1034, %v1503
        %v1558 = vadd.f32 %v1036, %v1505
        %v1559 = vadd.f32 %v1038, %v1507
        %v1560 = vadd.f32 %v1040, %v1509
        %v1561 = vadd.f32 %v1044, %v1513
        %v1562 = vadd.f32 %v1046, %v1515
        %v1563 = vadd.f32 %v1048, %v1517
        %v1564 = vadd.f32 %v1050, %v1519
        %v1565 = vadd.f32 %v1054, %v1523
        %v1566 = vadd.f32 %v1056, %v1525
        %v1567 = vadd.f32 %v1058, %v1527
        %v1568 = vadd.f32 %v1060, %v1529
        %v1569 = vadd.f32 %v1064, %v1533
        %v1570 = vadd.f32 %v1066, %v1535
        %v1571 = vadd.f32 %v1068, %v1537
        %v1572 = vadd.f32 %v1070, %v1539
        %s1573 = sadd.s32 %s581, 1
        %s1574 = smul.u32 %s1573, 2
        %s1575 = smul.addr %s1574, 4
        %s1576 = scalar_lea.vmem %s524, %s1575 [#allocation2]
        %v1577 = vld [vmem:[%s1576] sm:$0xf]
        %v1578 = vld [vmem:[%s1576 + $0x8] sm:$0xf]
        %v1579 = vld [vmem:[%s1576 + $0x10] sm:$0xf]
        %v1580 = vld [vmem:[%s1576 + $0x18] sm:$0xf]
        %v1581 = vld [vmem:[%s1576 + $0x20] sm:$0xf]
        %v1582 = vld [vmem:[%s1576 + $0x28] sm:$0xf]
        %v1583 = vld [vmem:[%s1576 + $0x30] sm:$0xf]
        %v1584 = vld [vmem:[%s1576 + $0x38] sm:$0xf]
        %v1585 = vld [vmem:[%s1576 + $0x40] sm:$0xf]
        %v1586 = vld [vmem:[%s1576 + $0x48] sm:$0xf]
        %v1587 = vld [vmem:[%s1576 + $0x50] sm:$0xf]
        %v1588 = vld [vmem:[%s1576 + $0x58] sm:$0xf]
        %v1589 = vld [vmem:[%s1576 + $0x60] sm:$0xf]
        %v1590 = vld [vmem:[%s1576 + $0x68] sm:$0xf]
        %v1591 = vld [vmem:[%s1576 + $0x70] sm:$0xf]
        %v1592 = vld [vmem:[%s1576 + $0x78] sm:$0xf]
        %s1593 = scalar_lea.vmem %s1, 192
        %v1594 = vld [vmem:[%s1593] sm:$0xff]
        %v1595 = vld [vmem:[%s1593 + $0x8] sm:$0xff]
        %v1596 = vld [vmem:[%s1593 + $0x10] sm:$0xff]
        %v1597 = vld [vmem:[%s1593 + $0x18] sm:$0xff]
        %v1598 = vld [vmem:[%s1593 + $0x20] sm:$0xff]
        %v1599 = vld [vmem:[%s1593 + $0x28] sm:$0xff]
        %v1600 = vld [vmem:[%s1593 + $0x30] sm:$0xff]
        %v1601 = vld [vmem:[%s1593 + $0x38] sm:$0xff]
        %v1618 = vunpack.c.l.b16 %v1577
        %v1619 = vunpack.c.l.b16 %v1578
        %v1620 = vunpack.c.l.b16 %v1579
        %v1621 = vunpack.c.l.b16 %v1580
        %v1622 = vunpack.c.l.b16 %v1581
        %v1623 = vunpack.c.l.b16 %v1582
        %v1624 = vunpack.c.l.b16 %v1583
        %v1625 = vunpack.c.l.b16 %v1584
        %v1626 = vunpack.c.l.b16 %v1585
        %v1627 = vunpack.c.l.b16 %v1586
        %v1628 = vunpack.c.l.b16 %v1587
        %v1629 = vunpack.c.l.b16 %v1588
        %v1630 = vunpack.c.l.b16 %v1589
        %v1631 = vunpack.c.l.b16 %v1590
        %v1632 = vunpack.c.l.b16 %v1591
        %v1633 = vunpack.c.l.b16 %v1592
        %v1634 = vpack.c.b16 %v1619, %v1618
        %v1635 = vpack.c.b16 %v1621, %v1620
        %v1636 = vpack.c.b16 %v1623, %v1622
        %v1637 = vpack.c.b16 %v1625, %v1624
        %v1638 = vpack.c.b16 %v1627, %v1626
        %v1639 = vpack.c.b16 %v1629, %v1628
        %v1640 = vpack.c.b16 %v1631, %v1630
        %v1641 = vpack.c.b16 %v1633, %v1632
        %v1650 = vunpack.c.l.b16 %v1594
        %v1651 = vunpack.c.h.b16 %v1594
        %v1652 = vunpack.c.l.b16 %v1595
        %v1653 = vunpack.c.h.b16 %v1595
        %v1654 = vunpack.c.l.b16 %v1596
        %v1655 = vunpack.c.h.b16 %v1596
        %v1656 = vunpack.c.l.b16 %v1597
        %v1657 = vunpack.c.h.b16 %v1597
        %v1658 = vunpack.c.l.b16 %v1598
        %v1659 = vunpack.c.h.b16 %v1598
        %v1660 = vunpack.c.l.b16 %v1599
        %v1661 = vunpack.c.h.b16 %v1599
        %v1662 = vunpack.c.l.b16 %v1600
        %v1663 = vunpack.c.h.b16 %v1600
        %v1664 = vunpack.c.l.b16 %v1601
        %v1665 = vunpack.c.h.b16 %v1601
        %v1666 = vpack.c.b16 %v1652, %v1650
        %v1667 = vpack.c.b16 %v1653, %v1651
        %v1668 = vpack.c.b16 %v1656, %v1654
        %v1669 = vpack.c.b16 %v1657, %v1655
        %v1670 = vpack.c.b16 %v1660, %v1658
        %v1671 = vpack.c.b16 %v1661, %v1659
        %v1672 = vpack.c.b16 %v1664, %v1662
        %v1673 = vpack.c.b16 %v1665, %v1663
        %v1683 = vsel %vm717, %v1634, 0
        %v1686 = vsel %vm717, %v1635, 0
        %v1689 = vsel %vm717, %v1636, 0
        %v1692 = vsel %vm717, %v1637, 0
        %v1695 = vsel %vm717, %v1638, 0
        %v1698 = vsel %vm717, %v1639, 0
        %v1701 = vsel %vm717, %v1640, 0
        %v1704 = vsel %vm717, %v1641, 0
        %1706 = vmatprep.subr.bf16.mxu0 %v1667
        %1707 = vmatpush1.bf16.msra.mxu0 %v1666
        %1708 = vmatprep.subr.bf16.mxu0 %v1669
        %1709 = vmatpush1.bf16.msra.mxu0 %v1668
        %1710 = vmatprep.subr.bf16.mxu0 %v1671
        %1711 = vmatpush1.bf16.msra.mxu0 %v1670
        %1712 = vmatprep.subr.bf16.mxu0 %v1673
        %1713 = vmatpush1.bf16.msra.mxu0 %v1672
        %1714 = vmatprep.subr.bf16.mxu0 0
        %1715 = vmatpush1.bf16.msra.mxu0 0
        %1716 = vmatprep.subr.bf16.mxu0 0
        %1717 = vmatpush1.bf16.msra.mxu0 0
        %1718 = vmatprep.subr.bf16.mxu0 0
        %1719 = vmatpush1.bf16.msra.mxu0 0
        %1720 = vmatprep.subr.bf16.mxu0 0
        %1721 = vmatpush1.bf16.msra.mxu0 0
        %1722 = vmatprep.subr.bf16.mxu0 0
        %1723 = vmatpush1.bf16.msra.mxu0 0
        %1724 = vmatprep.subr.bf16.mxu0 0
        %1725 = vmatpush1.bf16.msra.mxu0 0
        %1726 = vmatprep.subr.bf16.mxu0 0
        %1727 = vmatpush1.bf16.msra.mxu0 0
        %1728 = vmatprep.subr.bf16.mxu0 0
        %1729 = vmatpush1.bf16.msra.mxu0 0
        %1730 = vmatprep.subr.bf16.mxu0 0
        %1731 = vmatpush1.bf16.msra.mxu0 0
        %1732 = vmatprep.subr.bf16.mxu0 0
        %1733 = vmatpush1.bf16.msra.mxu0 0
        %1734 = vmatprep.subr.bf16.mxu0 0
        %1735 = vmatpush1.bf16.msra.mxu0 0
        %1736 = vmatprep.subr.bf16.mxu0 0
        %1737 = vmatpush1.bf16.msra.mxu0 0
        %1738 = vmatprep.mubr.bf16.mxu0 0
        %1739 = vmatmul.mubr.bf16.gmra.mrb[0].mxu0 %v1683
        %v1740 = vpop.f32.mrb[0].mxu0
        %v1741 = vadd.f32 0.0, %v1740
        %v1742 = vpop.f32.mrb[0].mxu0
        %v1743 = vadd.f32 0.0, %v1742
        %v1744 = vpop.f32.mrb[0].mxu0
        %v1745 = vadd.f32 0.0, %v1744
        %v1746 = vpop.f32.mrb[0].mxu0
        %v1747 = vadd.f32 0.0, %v1746
        %1748 = vmatprep.mubr.bf16.mxu0 0
        %1749 = vmatmul.mubr.bf16.gmra.mrb[0].mxu0 %v1686
        %v1750 = vpop.f32.mrb[0].mxu0
        %v1751 = vadd.f32 0.0, %v1750
        %v1752 = vpop.f32.mrb[0].mxu0
        %v1753 = vadd.f32 0.0, %v1752
        %v1754 = vpop.f32.mrb[0].mxu0
        %v1755 = vadd.f32 0.0, %v1754
        %v1756 = vpop.f32.mrb[0].mxu0
        %v1757 = vadd.f32 0.0, %v1756
        %1758 = vmatprep.mubr.bf16.mxu0 0
        %1759 = vmatmul.mubr.bf16.gmra.mrb[0].mxu0 %v1689
        %v1760 = vpop.f32.mrb[0].mxu0
        %v1761 = vadd.f32 0.0, %v1760
        %v1762 = vpop.f32.mrb[0].mxu0
        %v1763 = vadd.f32 0.0, %v1762
        %v1764 = vpop.f32.mrb[0].mxu0
        %v1765 = vadd.f32 0.0, %v1764
        %v1766 = vpop.f32.mrb[0].mxu0
        %v1767 = vadd.f32 0.0, %v1766
        %1768 = vmatprep.mubr.bf16.mxu0 0
        %1769 = vmatmul.mubr.bf16.gmra.mrb[0].mxu0 %v1692
        %v1770 = vpop.f32.mrb[0].mxu0
        %v1771 = vadd.f32 0.0, %v1770
        %v1772 = vpop.f32.mrb[0].mxu0
        %v1773 = vadd.f32 0.0, %v1772
        %v1774 = vpop.f32.mrb[0].mxu0
        %v1775 = vadd.f32 0.0, %v1774
        %v1776 = vpop.f32.mrb[0].mxu0
        %v1777 = vadd.f32 0.0, %v1776
        %1778 = vmatprep.mubr.bf16.mxu0 0
        %1779 = vmatmul.mubr.bf16.gmra.mrb[0].mxu0 %v1695
        %v1780 = vpop.f32.mrb[0].mxu0
        %v1781 = vadd.f32 0.0, %v1780
        %v1782 = vpop.f32.mrb[0].mxu0
        %v1783 = vadd.f32 0.0, %v1782
        %v1784 = vpop.f32.mrb[0].mxu0
        %v1785 = vadd.f32 0.0, %v1784
        %v1786 = vpop.f32.mrb[0].mxu0
        %v1787 = vadd.f32 0.0, %v1786
        %1788 = vmatprep.mubr.bf16.mxu0 0
        %1789 = vmatmul.mubr.bf16.gmra.mrb[0].mxu0 %v1698
        %v1790 = vpop.f32.mrb[0].mxu0
        %v1791 = vadd.f32 0.0, %v1790
        %v1792 = vpop.f32.mrb[0].mxu0
        %v1793 = vadd.f32 0.0, %v1792
        %v1794 = vpop.f32.mrb[0].mxu0
        %v1795 = vadd.f32 0.0, %v1794
        %v1796 = vpop.f32.mrb[0].mxu0
        %v1797 = vadd.f32 0.0, %v1796
        %1798 = vmatprep.mubr.bf16.mxu0 0
        %1799 = vmatmul.mubr.bf16.gmra.mrb[0].mxu0 %v1701
        %v1800 = vpop.f32.mrb[0].mxu0
        %v1801 = vadd.f32 0.0, %v1800
        %v1802 = vpop.f32.mrb[0].mxu0
        %v1803 = vadd.f32 0.0, %v1802
        %v1804 = vpop.f32.mrb[0].mxu0
        %v1805 = vadd.f32 0.0, %v1804
        %v1806 = vpop.f32.mrb[0].mxu0
        %v1807 = vadd.f32 0.0, %v1806
        %1808 = vmatprep.mubr.bf16.mxu0 0
        %1809 = vmatmul.mubr.bf16.gmra.mrb[0].mxu0 %v1704
        %v1810 = vpop.f32.mrb[0].mxu0
        %v1811 = vadd.f32 0.0, %v1810
        %v1812 = vpop.f32.mrb[0].mxu0
        %v1813 = vadd.f32 0.0, %v1812
        %v1814 = vpop.f32.mrb[0].mxu0
        %v1815 = vadd.f32 0.0, %v1814
        %v1816 = vpop.f32.mrb[0].mxu0
        %v1817 = vadd.f32 0.0, %v1816
        %1818 = vdwg.mxu0
        %v1819 = vadd.f32 %v1541, %v1741
        %v1820 = vadd.f32 %v1542, %v1743
        %v1821 = vadd.f32 %v1543, %v1745
        %v1822 = vadd.f32 %v1544, %v1747
        %v1823 = vadd.f32 %v1545, %v1751
        %v1824 = vadd.f32 %v1546, %v1753
        %v1825 = vadd.f32 %v1547, %v1755
        %v1826 = vadd.f32 %v1548, %v1757
        %v1827 = vadd.f32 %v1549, %v1761
        %v1828 = vadd.f32 %v1550, %v1763
        %v1829 = vadd.f32 %v1551, %v1765
        %v1830 = vadd.f32 %v1552, %v1767
        %v1831 = vadd.f32 %v1553, %v1771
        %v1832 = vadd.f32 %v1554, %v1773
        %v1833 = vadd.f32 %v1555, %v1775
        %v1834 = vadd.f32 %v1556, %v1777
        %v1835 = vadd.f32 %v1557, %v1781
        %v1836 = vadd.f32 %v1558, %v1783
        %v1837 = vadd.f32 %v1559, %v1785
        %v1838 = vadd.f32 %v1560, %v1787
        %v1839 = vadd.f32 %v1561, %v1791
        %v1840 = vadd.f32 %v1562, %v1793
        %v1841 = vadd.f32 %v1563, %v1795
        %v1842 = vadd.f32 %v1564, %v1797
        %v1843 = vadd.f32 %v1565, %v1801
        %v1844 = vadd.f32 %v1566, %v1803
        %v1845 = vadd.f32 %v1567, %v1805
        %v1846 = vadd.f32 %v1568, %v1807
        %v1847 = vadd.f32 %v1569, %v1811
        %v1848 = vadd.f32 %v1570, %v1813
        %v1849 = vadd.f32 %v1571, %v1815
        %v1850 = vadd.f32 %v1572, %v1817
        %s1851 = sadd.s32 %s1574, 36
        %s1852 = smul.addr %s1851, 4
        %s1853 = scalar_lea.vmem %s524, %s1852 [#allocation2]
        %v1854 = vld [vmem:[%s1853] sm:$0xf]
        %v1855 = vld [vmem:[%s1853 + $0x8] sm:$0xf]
        %v1856 = vld [vmem:[%s1853 + $0x10] sm:$0xf]
        %v1857 = vld [vmem:[%s1853 + $0x18] sm:$0xf]
        %v1858 = vld [vmem:[%s1853 + $0x20] sm:$0xf]
        %v1859 = vld [vmem:[%s1853 + $0x28] sm:$0xf]
        %v1860 = vld [vmem:[%s1853 + $0x30] sm:$0xf]
        %v1861 = vld [vmem:[%s1853 + $0x38] sm:$0xf]
        %v1862 = vld [vmem:[%s1853 + $0x40] sm:$0xf]
        %v1863 = vld [vmem:[%s1853 + $0x48] sm:$0xf]
        %v1864 = vld [vmem:[%s1853 + $0x50] sm:$0xf]
        %v1865 = vld [vmem:[%s1853 + $0x58] sm:$0xf]
        %v1866 = vld [vmem:[%s1853 + $0x60] sm:$0xf]
        %v1867 = vld [vmem:[%s1853 + $0x68] sm:$0xf]
        %v1868 = vld [vmem:[%s1853 + $0x70] sm:$0xf]
        %v1869 = vld [vmem:[%s1853 + $0x78] sm:$0xf]
        %s1870 = scalar_lea.vmem %s1, 256
        %v1871 = vld [vmem:[%s1870] sm:$0xff]
        %v1872 = vld [vmem:[%s1870 + $0x8] sm:$0xff]
        %v1873 = vld [vmem:[%s1870 + $0x10] sm:$0xff]
        %v1874 = vld [vmem:[%s1870 + $0x18] sm:$0xff]
        %v1875 = vld [vmem:[%s1870 + $0x20] sm:$0xff]
        %v1876 = vld [vmem:[%s1870 + $0x28] sm:$0xff]
        %v1877 = vld [vmem:[%s1870 + $0x30] sm:$0xff]
        %v1878 = vld [vmem:[%s1870 + $0x38] sm:$0xff]
        %v1895 = vunpack.c.l.b16 %v1854
        %v1896 = vunpack.c.l.b16 %v1855
        %v1897 = vunpack.c.l.b16 %v1856
        %v1898 = vunpack.c.l.b16 %v1857
        %v1899 = vunpack.c.l.b16 %v1858
        %v1900 = vunpack.c.l.b16 %v1859
        %v1901 = vunpack.c.l.b16 %v1860
        %v1902 = vunpack.c.l.b16 %v1861
        %v1903 = vunpack.c.l.b16 %v1862
        %v1904 = vunpack.c.l.b16 %v1863
        %v1905 = vunpack.c.l.b16 %v1864
        %v1906 = vunpack.c.l.b16 %v1865
        %v1907 = vunpack.c.l.b16 %v1866
        %v1908 = vunpack.c.l.b16 %v1867
        %v1909 = vunpack.c.l.b16 %v1868
        %v1910 = vunpack.c.l.b16 %v1869
        %v1911 = vpack.c.b16 %v1896, %v1895
        %v1912 = vpack.c.b16 %v1898, %v1897
        %v1913 = vpack.c.b16 %v1900, %v1899
        %v1914 = vpack.c.b16 %v1902, %v1901
        %v1915 = vpack.c.b16 %v1904, %v1903
        %v1916 = vpack.c.b16 %v1906, %v1905
        %v1917 = vpack.c.b16 %v1908, %v1907
        %v1918 = vpack.c.b16 %v1910, %v1909
        %v1927 = vunpack.c.l.b16 %v1871
        %v1928 = vunpack.c.h.b16 %v1871
        %v1929 = vunpack.c.l.b16 %v1872
        %v1930 = vunpack.c.h.b16 %v1872
        %v1931 = vunpack.c.l.b16 %v1873
        %v1932 = vunpack.c.h.b16 %v1873
        %v1933 = vunpack.c.l.b16 %v1874
        %v1934 = vunpack.c.h.b16 %v1874
        %v1935 = vunpack.c.l.b16 %v1875
        %v1936 = vunpack.c.h.b16 %v1875
        %v1937 = vunpack.c.l.b16 %v1876
        %v1938 = vunpack.c.h.b16 %v1876
        %v1939 = vunpack.c.l.b16 %v1877
        %v1940 = vunpack.c.h.b16 %v1877
        %v1941 = vunpack.c.l.b16 %v1878
        %v1942 = vunpack.c.h.b16 %v1878
        %v1943 = vpack.c.b16 %v1929, %v1927
        %v1944 = vpack.c.b16 %v1930, %v1928
        %v1945 = vpack.c.b16 %v1933, %v1931
        %v1946 = vpack.c.b16 %v1934, %v1932
        %v1947 = vpack.c.b16 %v1937, %v1935
        %v1948 = vpack.c.b16 %v1938, %v1936
        %v1949 = vpack.c.b16 %v1941, %v1939
        %v1950 = vpack.c.b16 %v1942, %v1940
        %v1960 = vsel %vm717, %v1911, 0
        %v1963 = vsel %vm717, %v1912, 0
        %v1966 = vsel %vm717, %v1913, 0
        %v1969 = vsel %vm717, %v1914, 0
        %v1972 = vsel %vm717, %v1915, 0
        %v1975 = vsel %vm717, %v1916, 0
        %v1978 = vsel %vm717, %v1917, 0
        %v1981 = vsel %vm717, %v1918, 0
        %1983 = vmatprep.subr.bf16.mxu0 %v1944
        %1984 = vmatpush1.bf16.msra.mxu0 %v1943
        %1985 = vmatprep.subr.bf16.mxu0 %v1946
        %1986 = vmatpush1.bf16.msra.mxu0 %v1945
        %1987 = vmatprep.subr.bf16.mxu0 %v1948
        %1988 = vmatpush1.bf16.msra.mxu0 %v1947
        %1989 = vmatprep.subr.bf16.mxu0 %v1950
        %1990 = vmatpush1.bf16.msra.mxu0 %v1949
        %1991 = vmatprep.subr.bf16.mxu0 0
        %1992 = vmatpush1.bf16.msra.mxu0 0
        %1993 = vmatprep.subr.bf16.mxu0 0
        %1994 = vmatpush1.bf16.msra.mxu0 0
        %1995 = vmatprep.subr.bf16.mxu0 0
        %1996 = vmatpush1.bf16.msra.mxu0 0
        %1997 = vmatprep.subr.bf16.mxu0 0
        %1998 = vmatpush1.bf16.msra.mxu0 0
        %1999 = vmatprep.subr.bf16.mxu0 0
        %2000 = vmatpush1.bf16.msra.mxu0 0
        %2001 = vmatprep.subr.bf16.mxu0 0
        %2002 = vmatpush1.bf16.msra.mxu0 0
        %2003 = vmatprep.subr.bf16.mxu0 0
        %2004 = vmatpush1.bf16.msra.mxu0 0
        %2005 = vmatprep.subr.bf16.mxu0 0
        %2006 = vmatpush1.bf16.msra.mxu0 0
        %2007 = vmatprep.subr.bf16.mxu0 0
        %2008 = vmatpush1.bf16.msra.mxu0 0
        %2009 = vmatprep.subr.bf16.mxu0 0
        %2010 = vmatpush1.bf16.msra.mxu0 0
        %2011 = vmatprep.subr.bf16.mxu0 0
        %2012 = vmatpush1.bf16.msra.mxu0 0
        %2013 = vmatprep.subr.bf16.mxu0 0
        %2014 = vmatpush1.bf16.msra.mxu0 0
        %2015 = vmatprep.mubr.bf16.mxu0 0
        %2016 = vmatmul.mubr.bf16.gmra.mrb[0].mxu0 %v1960
        %v2017 = vpop.f32.mrb[0].mxu0
        %v2018 = vadd.f32 0.0, %v2017
        %v2019 = vpop.f32.mrb[0].mxu0
        %v2020 = vadd.f32 0.0, %v2019
        %v2021 = vpop.f32.mrb[0].mxu0
        %v2022 = vadd.f32 0.0, %v2021
        %v2023 = vpop.f32.mrb[0].mxu0
        %v2024 = vadd.f32 0.0, %v2023
        %2025 = vmatprep.mubr.bf16.mxu0 0
        %2026 = vmatmul.mubr.bf16.gmra.mrb[0].mxu0 %v1963
        %v2027 = vpop.f32.mrb[0].mxu0
        %v2028 = vadd.f32 0.0, %v2027
        %v2029 = vpop.f32.mrb[0].mxu0
        %v2030 = vadd.f32 0.0, %v2029
        %v2031 = vpop.f32.mrb[0].mxu0
        %v2032 = vadd.f32 0.0, %v2031
        %v2033 = vpop.f32.mrb[0].mxu0
        %v2034 = vadd.f32 0.0, %v2033
        %2035 = vmatprep.mubr.bf16.mxu0 0
        %2036 = vmatmul.mubr.bf16.gmra.mrb[0].mxu0 %v1966
        %v2037 = vpop.f32.mrb[0].mxu0
        %v2038 = vadd.f32 0.0, %v2037
        %v2039 = vpop.f32.mrb[0].mxu0
        %v2040 = vadd.f32 0.0, %v2039
        %v2041 = vpop.f32.mrb[0].mxu0
        %v2042 = vadd.f32 0.0, %v2041
        %v2043 = vpop.f32.mrb[0].mxu0
        %v2044 = vadd.f32 0.0, %v2043
        %2045 = vmatprep.mubr.bf16.mxu0 0
        %2046 = vmatmul.mubr.bf16.gmra.mrb[0].mxu0 %v1969
        %v2047 = vpop.f32.mrb[0].mxu0
        %v2048 = vadd.f32 0.0, %v2047
        %v2049 = vpop.f32.mrb[0].mxu0
        %v2050 = vadd.f32 0.0, %v2049
        %v2051 = vpop.f32.mrb[0].mxu0
        %v2052 = vadd.f32 0.0, %v2051
        %v2053 = vpop.f32.mrb[0].mxu0
        %v2054 = vadd.f32 0.0, %v2053
        %2055 = vmatprep.mubr.bf16.mxu0 0
        %2056 = vmatmul.mubr.bf16.gmra.mrb[0].mxu0 %v1972
        %v2057 = vpop.f32.mrb[0].mxu0
        %v2058 = vadd.f32 0.0, %v2057
        %v2059 = vpop.f32.mrb[0].mxu0
        %v2060 = vadd.f32 0.0, %v2059
        %v2061 = vpop.f32.mrb[0].mxu0
        %v2062 = vadd.f32 0.0, %v2061
        %v2063 = vpop.f32.mrb[0].mxu0
        %v2064 = vadd.f32 0.0, %v2063
        %2065 = vmatprep.mubr.bf16.mxu0 0
        %2066 = vmatmul.mubr.bf16.gmra.mrb[0].mxu0 %v1975
        %v2067 = vpop.f32.mrb[0].mxu0
        %v2068 = vadd.f32 0.0, %v2067
        %v2069 = vpop.f32.mrb[0].mxu0
        %v2070 = vadd.f32 0.0, %v2069
        %v2071 = vpop.f32.mrb[0].mxu0
        %v2072 = vadd.f32 0.0, %v2071
        %v2073 = vpop.f32.mrb[0].mxu0
        %v2074 = vadd.f32 0.0, %v2073
        %2075 = vmatprep.mubr.bf16.mxu0 0
        %2076 = vmatmul.mubr.bf16.gmra.mrb[0].mxu0 %v1978
        %v2077 = vpop.f32.mrb[0].mxu0
        %v2078 = vadd.f32 0.0, %v2077
        %v2079 = vpop.f32.mrb[0].mxu0
        %v2080 = vadd.f32 0.0, %v2079
        %v2081 = vpop.f32.mrb[0].mxu0
        %v2082 = vadd.f32 0.0, %v2081
        %v2083 = vpop.f32.mrb[0].mxu0
        %v2084 = vadd.f32 0.0, %v2083
        %2085 = vmatprep.mubr.bf16.mxu0 0
        %2086 = vmatmul.mubr.bf16.gmra.mrb[0].mxu0 %v1981
        %v2087 = vpop.f32.mrb[0].mxu0
        %v2088 = vadd.f32 0.0, %v2087
        %v2089 = vpop.f32.mrb[0].mxu0
        %v2090 = vadd.f32 0.0, %v2089
        %v2091 = vpop.f32.mrb[0].mxu0
        %v2092 = vadd.f32 0.0, %v2091
        %v2093 = vpop.f32.mrb[0].mxu0
        %v2094 = vadd.f32 0.0, %v2093
        %2095 = vdwg.mxu0
        %v2096 = vadd.f32 %v1819, %v2018
        %v2097 = vadd.f32 %v1820, %v2020
        %v2098 = vadd.f32 %v1821, %v2022
        %v2099 = vadd.f32 %v1822, %v2024
        %v2100 = vadd.f32 %v1823, %v2028
        %v2101 = vadd.f32 %v1824, %v2030
        %v2102 = vadd.f32 %v1825, %v2032
        %v2103 = vadd.f32 %v1826, %v2034
        %v2104 = vadd.f32 %v1827, %v2038
        %v2105 = vadd.f32 %v1828, %v2040
        %v2106 = vadd.f32 %v1829, %v2042
        %v2107 = vadd.f32 %v1830, %v2044
        %v2108 = vadd.f32 %v1831, %v2048
        %v2109 = vadd.f32 %v1832, %v2050
        %v2110 = vadd.f32 %v1833, %v2052
        %v2111 = vadd.f32 %v1834, %v2054
        %v2112 = vadd.f32 %v1835, %v2058
        %v2113 = vadd.f32 %v1836, %v2060
        %v2114 = vadd.f32 %v1837, %v2062
        %v2115 = vadd.f32 %v1838, %v2064
        %v2116 = vadd.f32 %v1839, %v2068
        %v2117 = vadd.f32 %v1840, %v2070
        %v2118 = vadd.f32 %v1841, %v2072
        %v2119 = vadd.f32 %v1842, %v2074
        %v2120 = vadd.f32 %v1843, %v2078
        %v2121 = vadd.f32 %v1844, %v2080
        %v2122 = vadd.f32 %v1845, %v2082
        %v2123 = vadd.f32 %v1846, %v2084
        %v2124 = vadd.f32 %v1847, %v2088
        %v2125 = vadd.f32 %v1848, %v2090
        %v2126 = vadd.f32 %v1849, %v2092
        %v2127 = vadd.f32 %v1850, %v2094
        %v2128 = vld [vmem:[%s1576] sm:$0xf]
        %v2129 = vld [vmem:[%s1576 + $0x4] sm:$0x1]
        %v2130 = vld [vmem:[%s1576 + $0x8] sm:$0xf]
        %v2131 = vld [vmem:[%s1576 + $0xc] sm:$0x1]
        %v2132 = vld [vmem:[%s1576 + $0x10] sm:$0xf]
        %v2133 = vld [vmem:[%s1576 + $0x14] sm:$0x1]
        %v2134 = vld [vmem:[%s1576 + $0x18] sm:$0xf]
        %v2135 = vld [vmem:[%s1576 + $0x1c] sm:$0x1]
        %v2136 = vld [vmem:[%s1576 + $0x20] sm:$0xf]
        %v2137 = vld [vmem:[%s1576 + $0x24] sm:$0x1]
        %v2138 = vld [vmem:[%s1576 + $0x28] sm:$0xf]
        %v2139 = vld [vmem:[%s1576 + $0x2c] sm:$0x1]
        %v2140 = vld [vmem:[%s1576 + $0x30] sm:$0xf]
        %v2141 = vld [vmem:[%s1576 + $0x34] sm:$0x1]
        %v2142 = vld [vmem:[%s1576 + $0x38] sm:$0xf]
        %v2143 = vld [vmem:[%s1576 + $0x3c] sm:$0x1]
        %v2144 = vld [vmem:[%s1576 + $0x40] sm:$0xf]
        %v2145 = vld [vmem:[%s1576 + $0x44] sm:$0x1]
        %v2146 = vld [vmem:[%s1576 + $0x48] sm:$0xf]
        %v2147 = vld [vmem:[%s1576 + $0x4c] sm:$0x1]
        %v2148 = vld [vmem:[%s1576 + $0x50] sm:$0xf]
        %v2149 = vld [vmem:[%s1576 + $0x54] sm:$0x1]
        %v2150 = vld [vmem:[%s1576 + $0x58] sm:$0xf]
        %v2151 = vld [vmem:[%s1576 + $0x5c] sm:$0x1]
        %v2152 = vld [vmem:[%s1576 + $0x60] sm:$0xf]
        %v2153 = vld [vmem:[%s1576 + $0x64] sm:$0x1]
        %v2154 = vld [vmem:[%s1576 + $0x68] sm:$0xf]
        %v2155 = vld [vmem:[%s1576 + $0x6c] sm:$0x1]
        %v2156 = vld [vmem:[%s1576 + $0x70] sm:$0xf]
        %v2157 = vld [vmem:[%s1576 + $0x74] sm:$0x1]
        %v2158 = vld [vmem:[%s1576 + $0x78] sm:$0xf]
        %v2159 = vld [vmem:[%s1576 + $0x7c] sm:$0x1]
        %v2161 = vshrl.u32 %v2128, 16
        %v2163 = vrot.slane %v2161, 4
        %v2164 = vshll.u32 %v2128, 16
        %v2166 = vrot.slane %v2164, 5
        %v2167 = vor.u32 %v2163, %v2166
        %v2168 = vrot.slane %v2167, 4
        %v2170 = vshll.u32 %v2129, 16
        %v2172 = vrot.slane %v2170, 5
        %v2173 = vsel %vm1106, %v2168, %v2172
        %v2175 = vshrl.u32 %v2130, 16
        %v2177 = vrot.slane %v2175, 4
        %v2178 = vshll.u32 %v2130, 16
        %v2180 = vrot.slane %v2178, 5
        %v2181 = vor.u32 %v2177, %v2180
        %v2182 = vrot.slane %v2181, 4
        %v2184 = vshll.u32 %v2131, 16
        %v2186 = vrot.slane %v2184, 5
        %v2187 = vsel %vm1106, %v2182, %v2186
        %v2189 = vshrl.u32 %v2132, 16
        %v2191 = vrot.slane %v2189, 4
        %v2192 = vshll.u32 %v2132, 16
        %v2194 = vrot.slane %v2192, 5
        %v2195 = vor.u32 %v2191, %v2194
        %v2196 = vrot.slane %v2195, 4
        %v2198 = vshll.u32 %v2133, 16
        %v2200 = vrot.slane %v2198, 5
        %v2201 = vsel %vm1106, %v2196, %v2200
        %v2203 = vshrl.u32 %v2134, 16
        %v2205 = vrot.slane %v2203, 4
        %v2206 = vshll.u32 %v2134, 16
        %v2208 = vrot.slane %v2206, 5
        %v2209 = vor.u32 %v2205, %v2208
        %v2210 = vrot.slane %v2209, 4
        %v2212 = vshll.u32 %v2135, 16
        %v2214 = vrot.slane %v2212, 5
        %v2215 = vsel %vm1106, %v2210, %v2214
        %v2217 = vshrl.u32 %v2136, 16
        %v2219 = vrot.slane %v2217, 4
        %v2220 = vshll.u32 %v2136, 16
        %v2222 = vrot.slane %v2220, 5
        %v2223 = vor.u32 %v2219, %v2222
        %v2224 = vrot.slane %v2223, 4
        %v2226 = vshll.u32 %v2137, 16
        %v2228 = vrot.slane %v2226, 5
        %v2229 = vsel %vm1106, %v2224, %v2228
        %v2231 = vshrl.u32 %v2138, 16
        %v2233 = vrot.slane %v2231, 4
        %v2234 = vshll.u32 %v2138, 16
        %v2236 = vrot.slane %v2234, 5
        %v2237 = vor.u32 %v2233, %v2236
        %v2238 = vrot.slane %v2237, 4
        %v2240 = vshll.u32 %v2139, 16
        %v2242 = vrot.slane %v2240, 5
        %v2243 = vsel %vm1106, %v2238, %v2242
        %v2245 = vshrl.u32 %v2140, 16
        %v2247 = vrot.slane %v2245, 4
        %v2248 = vshll.u32 %v2140, 16
        %v2250 = vrot.slane %v2248, 5
        %v2251 = vor.u32 %v2247, %v2250
        %v2252 = vrot.slane %v2251, 4
        %v2254 = vshll.u32 %v2141, 16
        %v2256 = vrot.slane %v2254, 5
        %v2257 = vsel %vm1106, %v2252, %v2256
        %v2259 = vshrl.u32 %v2142, 16
        %v2261 = vrot.slane %v2259, 4
        %v2262 = vshll.u32 %v2142, 16
        %v2264 = vrot.slane %v2262, 5
        %v2265 = vor.u32 %v2261, %v2264
        %v2266 = vrot.slane %v2265, 4
        %v2268 = vshll.u32 %v2143, 16
        %v2270 = vrot.slane %v2268, 5
        %v2271 = vsel %vm1106, %v2266, %v2270
        %v2273 = vshrl.u32 %v2144, 16
        %v2275 = vrot.slane %v2273, 4
        %v2276 = vshll.u32 %v2144, 16
        %v2278 = vrot.slane %v2276, 5
        %v2279 = vor.u32 %v2275, %v2278
        %v2280 = vrot.slane %v2279, 4
        %v2282 = vshll.u32 %v2145, 16
        %v2284 = vrot.slane %v2282, 5
        %v2285 = vsel %vm1106, %v2280, %v2284
        %v2287 = vshrl.u32 %v2146, 16
        %v2289 = vrot.slane %v2287, 4
        %v2290 = vshll.u32 %v2146, 16
        %v2292 = vrot.slane %v2290, 5
        %v2293 = vor.u32 %v2289, %v2292
        %v2294 = vrot.slane %v2293, 4
        %v2296 = vshll.u32 %v2147, 16
        %v2298 = vrot.slane %v2296, 5
        %v2299 = vsel %vm1106, %v2294, %v2298
        %v2301 = vshrl.u32 %v2148, 16
        %v2303 = vrot.slane %v2301, 4
        %v2304 = vshll.u32 %v2148, 16
        %v2306 = vrot.slane %v2304, 5
        %v2307 = vor.u32 %v2303, %v2306
        %v2308 = vrot.slane %v2307, 4
        %v2310 = vshll.u32 %v2149, 16
        %v2312 = vrot.slane %v2310, 5
        %v2313 = vsel %vm1106, %v2308, %v2312
        %v2315 = vshrl.u32 %v2150, 16
        %v2317 = vrot.slane %v2315, 4
        %v2318 = vshll.u32 %v2150, 16
        %v2320 = vrot.slane %v2318, 5
        %v2321 = vor.u32 %v2317, %v2320
        %v2322 = vrot.slane %v2321, 4
        %v2324 = vshll.u32 %v2151, 16
        %v2326 = vrot.slane %v2324, 5
        %v2327 = vsel %vm1106, %v2322, %v2326
        %v2329 = vshrl.u32 %v2152, 16
        %v2331 = vrot.slane %v2329, 4
        %v2332 = vshll.u32 %v2152, 16
        %v2334 = vrot.slane %v2332, 5
        %v2335 = vor.u32 %v2331, %v2334
        %v2336 = vrot.slane %v2335, 4
        %v2338 = vshll.u32 %v2153, 16
        %v2340 = vrot.slane %v2338, 5
        %v2341 = vsel %vm1106, %v2336, %v2340
        %v2343 = vshrl.u32 %v2154, 16
        %v2345 = vrot.slane %v2343, 4
        %v2346 = vshll.u32 %v2154, 16
        %v2348 = vrot.slane %v2346, 5
        %v2349 = vor.u32 %v2345, %v2348
        %v2350 = vrot.slane %v2349, 4
        %v2352 = vshll.u32 %v2155, 16
        %v2354 = vrot.slane %v2352, 5
        %v2355 = vsel %vm1106, %v2350, %v2354
        %v2357 = vshrl.u32 %v2156, 16
        %v2359 = vrot.slane %v2357, 4
        %v2360 = vshll.u32 %v2156, 16
        %v2362 = vrot.slane %v2360, 5
        %v2363 = vor.u32 %v2359, %v2362
        %v2364 = vrot.slane %v2363, 4
        %v2366 = vshll.u32 %v2157, 16
        %v2368 = vrot.slane %v2366, 5
        %v2369 = vsel %vm1106, %v2364, %v2368
        %v2371 = vshrl.u32 %v2158, 16
        %v2373 = vrot.slane %v2371, 4
        %v2374 = vshll.u32 %v2158, 16
        %v2376 = vrot.slane %v2374, 5
        %v2377 = vor.u32 %v2373, %v2376
        %v2378 = vrot.slane %v2377, 4
        %v2380 = vshll.u32 %v2159, 16
        %v2382 = vrot.slane %v2380, 5
        %v2383 = vsel %vm1106, %v2378, %v2382
        %s2384 = scalar_lea.vmem %s1, 320
        %v2385 = vld [vmem:[%s2384] sm:$0xff]
        %v2386 = vld [vmem:[%s2384 + $0x8] sm:$0xff]
        %v2387 = vld [vmem:[%s2384 + $0x10] sm:$0xff]
        %v2388 = vld [vmem:[%s2384 + $0x18] sm:$0xff]
        %v2389 = vld [vmem:[%s2384 + $0x20] sm:$0xff]
        %v2390 = vld [vmem:[%s2384 + $0x28] sm:$0xff]
        %v2391 = vld [vmem:[%s2384 + $0x30] sm:$0xff]
        %v2392 = vld [vmem:[%s2384 + $0x38] sm:$0xff]
        %v2393 = vunpack.c.l.b16 %v2173
        %v2394 = vunpack.c.l.b16 %v2187
        %v2395 = vunpack.c.l.b16 %v2201
        %v2396 = vunpack.c.l.b16 %v2215
        %v2397 = vunpack.c.l.b16 %v2229
        %v2398 = vunpack.c.l.b16 %v2243
        %v2399 = vunpack.c.l.b16 %v2257
        %v2400 = vunpack.c.l.b16 %v2271
        %v2401 = vunpack.c.l.b16 %v2285
        %v2402 = vunpack.c.l.b16 %v2299
        %v2403 = vunpack.c.l.b16 %v2313
        %v2404 = vunpack.c.l.b16 %v2327
        %v2405 = vunpack.c.l.b16 %v2341
        %v2406 = vunpack.c.l.b16 %v2355
        %v2407 = vunpack.c.l.b16 %v2369
        %v2408 = vunpack.c.l.b16 %v2383
        %v2409 = vpack.c.b16 %v2394, %v2393
        %v2410 = vpack.c.b16 %v2396, %v2395
        %v2411 = vpack.c.b16 %v2398, %v2397
        %v2412 = vpack.c.b16 %v2400, %v2399
        %v2413 = vpack.c.b16 %v2402, %v2401
        %v2414 = vpack.c.b16 %v2404, %v2403
        %v2415 = vpack.c.b16 %v2406, %v2405
        %v2416 = vpack.c.b16 %v2408, %v2407
        %v2425 = vunpack.c.l.b16 %v2385
        %v2426 = vunpack.c.h.b16 %v2385
        %v2427 = vunpack.c.l.b16 %v2386
        %v2428 = vunpack.c.h.b16 %v2386
        %v2429 = vunpack.c.l.b16 %v2387
        %v2430 = vunpack.c.h.b16 %v2387
        %v2431 = vunpack.c.l.b16 %v2388
        %v2432 = vunpack.c.h.b16 %v2388
        %v2433 = vunpack.c.l.b16 %v2389
        %v2434 = vunpack.c.h.b16 %v2389
        %v2435 = vunpack.c.l.b16 %v2390
        %v2436 = vunpack.c.h.b16 %v2390
        %v2437 = vunpack.c.l.b16 %v2391
        %v2438 = vunpack.c.h.b16 %v2391
        %v2439 = vunpack.c.l.b16 %v2392
        %v2440 = vunpack.c.h.b16 %v2392
        %v2441 = vpack.c.b16 %v2427, %v2425
        %v2442 = vpack.c.b16 %v2428, %v2426
        %v2443 = vpack.c.b16 %v2431, %v2429
        %v2444 = vpack.c.b16 %v2432, %v2430
        %v2445 = vpack.c.b16 %v2435, %v2433
        %v2446 = vpack.c.b16 %v2436, %v2434
        %v2447 = vpack.c.b16 %v2439, %v2437
        %v2448 = vpack.c.b16 %v2440, %v2438
        %v2458 = vsel %vm717, %v2409, 0
        %v2461 = vsel %vm717, %v2410, 0
        %v2464 = vsel %vm717, %v2411, 0
        %v2467 = vsel %vm717, %v2412, 0
        %v2470 = vsel %vm717, %v2413, 0
        %v2473 = vsel %vm717, %v2414, 0
        %v2476 = vsel %vm717, %v2415, 0
        %v2479 = vsel %vm717, %v2416, 0
        %2481 = vmatprep.subr.bf16.mxu0 %v2442
        %2482 = vmatpush1.bf16.msra.mxu0 %v2441
        %2483 = vmatprep.subr.bf16.mxu0 %v2444
        %2484 = vmatpush1.bf16.msra.mxu0 %v2443
        %2485 = vmatprep.subr.bf16.mxu0 %v2446
        %2486 = vmatpush1.bf16.msra.mxu0 %v2445
        %2487 = vmatprep.subr.bf16.mxu0 %v2448
        %2488 = vmatpush1.bf16.msra.mxu0 %v2447
        %2489 = vmatprep.subr.bf16.mxu0 0
        %2490 = vmatpush1.bf16.msra.mxu0 0
        %2491 = vmatprep.subr.bf16.mxu0 0
        %2492 = vmatpush1.bf16.msra.mxu0 0
        %2493 = vmatprep.subr.bf16.mxu0 0
        %2494 = vmatpush1.bf16.msra.mxu0 0
        %2495 = vmatprep.subr.bf16.mxu0 0
        %2496 = vmatpush1.bf16.msra.mxu0 0
        %2497 = vmatprep.subr.bf16.mxu0 0
        %2498 = vmatpush1.bf16.msra.mxu0 0
        %2499 = vmatprep.subr.bf16.mxu0 0
        %2500 = vmatpush1.bf16.msra.mxu0 0
        %2501 = vmatprep.subr.bf16.mxu0 0
        %2502 = vmatpush1.bf16.msra.mxu0 0
        %2503 = vmatprep.subr.bf16.mxu0 0
        %2504 = vmatpush1.bf16.msra.mxu0 0
        %2505 = vmatprep.subr.bf16.mxu0 0
        %2506 = vmatpush1.bf16.msra.mxu0 0
        %2507 = vmatprep.subr.bf16.mxu0 0
        %2508 = vmatpush1.bf16.msra.mxu0 0
        %2509 = vmatprep.subr.bf16.mxu0 0
        %2510 = vmatpush1.bf16.msra.mxu0 0
        %2511 = vmatprep.subr.bf16.mxu0 0
        %2512 = vmatpush1.bf16.msra.mxu0 0
        %2513 = vmatprep.mubr.bf16.mxu0 0
        %2514 = vmatmul.mubr.bf16.gmra.mrb[0].mxu0 %v2458
        %v2515 = vpop.f32.mrb[0].mxu0
        %v2516 = vadd.f32 0.0, %v2515
        %v2517 = vpop.f32.mrb[0].mxu0
        %v2518 = vadd.f32 0.0, %v2517
        %v2519 = vpop.f32.mrb[0].mxu0
        %v2520 = vadd.f32 0.0, %v2519
        %v2521 = vpop.f32.mrb[0].mxu0
        %v2522 = vadd.f32 0.0, %v2521
        %2523 = vmatprep.mubr.bf16.mxu0 0
        %2524 = vmatmul.mubr.bf16.gmra.mrb[0].mxu0 %v2461
        %v2525 = vpop.f32.mrb[0].mxu0
        %v2526 = vadd.f32 0.0, %v2525
        %v2527 = vpop.f32.mrb[0].mxu0
        %v2528 = vadd.f32 0.0, %v2527
        %v2529 = vpop.f32.mrb[0].mxu0
        %v2530 = vadd.f32 0.0, %v2529
        %v2531 = vpop.f32.mrb[0].mxu0
        %v2532 = vadd.f32 0.0, %v2531
        %2533 = vmatprep.mubr.bf16.mxu0 0
        %2534 = vmatmul.mubr.bf16.gmra.mrb[0].mxu0 %v2464
        %v2535 = vpop.f32.mrb[0].mxu0
        %v2536 = vadd.f32 0.0, %v2535
        %v2537 = vpop.f32.mrb[0].mxu0
        %v2538 = vadd.f32 0.0, %v2537
        %v2539 = vpop.f32.mrb[0].mxu0
        %v2540 = vadd.f32 0.0, %v2539
        %v2541 = vpop.f32.mrb[0].mxu0
        %v2542 = vadd.f32 0.0, %v2541
        %2543 = vmatprep.mubr.bf16.mxu0 0
        %2544 = vmatmul.mubr.bf16.gmra.mrb[0].mxu0 %v2467
        %v2545 = vpop.f32.mrb[0].mxu0
        %v2546 = vadd.f32 0.0, %v2545
        %v2547 = vpop.f32.mrb[0].mxu0
        %v2548 = vadd.f32 0.0, %v2547
        %v2549 = vpop.f32.mrb[0].mxu0
        %v2550 = vadd.f32 0.0, %v2549
        %v2551 = vpop.f32.mrb[0].mxu0
        %v2552 = vadd.f32 0.0, %v2551
        %2553 = vmatprep.mubr.bf16.mxu0 0
        %2554 = vmatmul.mubr.bf16.gmra.mrb[0].mxu0 %v2470
        %v2555 = vpop.f32.mrb[0].mxu0
        %v2556 = vadd.f32 0.0, %v2555
        %v2557 = vpop.f32.mrb[0].mxu0
        %v2558 = vadd.f32 0.0, %v2557
        %v2559 = vpop.f32.mrb[0].mxu0
        %v2560 = vadd.f32 0.0, %v2559
        %v2561 = vpop.f32.mrb[0].mxu0
        %v2562 = vadd.f32 0.0, %v2561
        %2563 = vmatprep.mubr.bf16.mxu0 0
        %2564 = vmatmul.mubr.bf16.gmra.mrb[0].mxu0 %v2473
        %v2565 = vpop.f32.mrb[0].mxu0
        %v2566 = vadd.f32 0.0, %v2565
        %v2567 = vpop.f32.mrb[0].mxu0
        %v2568 = vadd.f32 0.0, %v2567
        %v2569 = vpop.f32.mrb[0].mxu0
        %v2570 = vadd.f32 0.0, %v2569
        %v2571 = vpop.f32.mrb[0].mxu0
        %v2572 = vadd.f32 0.0, %v2571
        %2573 = vmatprep.mubr.bf16.mxu0 0
        %2574 = vmatmul.mubr.bf16.gmra.mrb[0].mxu0 %v2476
        %v2575 = vpop.f32.mrb[0].mxu0
        %v2576 = vadd.f32 0.0, %v2575
        %v2577 = vpop.f32.mrb[0].mxu0
        %v2578 = vadd.f32 0.0, %v2577
        %v2579 = vpop.f32.mrb[0].mxu0
        %v2580 = vadd.f32 0.0, %v2579
        %v2581 = vpop.f32.mrb[0].mxu0
        %v2582 = vadd.f32 0.0, %v2581
        %2583 = vmatprep.mubr.bf16.mxu0 0
        %2584 = vmatmul.mubr.bf16.gmra.mrb[0].mxu0 %v2479
        %v2585 = vpop.f32.mrb[0].mxu0
        %v2586 = vadd.f32 0.0, %v2585
        %v2587 = vpop.f32.mrb[0].mxu0
        %v2588 = vadd.f32 0.0, %v2587
        %v2589 = vpop.f32.mrb[0].mxu0
        %v2590 = vadd.f32 0.0, %v2589
        %v2591 = vpop.f32.mrb[0].mxu0
        %v2592 = vadd.f32 0.0, %v2591
        %2593 = vdwg.mxu0
        %v2594 = vadd.f32 %v2096, %v2516
        %v2595 = vadd.f32 %v2097, %v2518
        %v2596 = vadd.f32 %v2098, %v2520
        %v2597 = vadd.f32 %v2099, %v2522
        %v2598 = vadd.f32 %v2100, %v2526
        %v2599 = vadd.f32 %v2101, %v2528
        %v2600 = vadd.f32 %v2102, %v2530
        %v2601 = vadd.f32 %v2103, %v2532
        %v2602 = vadd.f32 %v2104, %v2536
        %v2603 = vadd.f32 %v2105, %v2538
        %v2604 = vadd.f32 %v2106, %v2540
        %v2605 = vadd.f32 %v2107, %v2542
        %v2606 = vadd.f32 %v2108, %v2546
        %v2607 = vadd.f32 %v2109, %v2548
        %v2608 = vadd.f32 %v2110, %v2550
        %v2609 = vadd.f32 %v2111, %v2552
        %v2610 = vadd.f32 %v2112, %v2556
        %v2611 = vadd.f32 %v2113, %v2558
        %v2612 = vadd.f32 %v2114, %v2560
        %v2613 = vadd.f32 %v2115, %v2562
        %v2614 = vadd.f32 %v2116, %v2566
        %v2615 = vadd.f32 %v2117, %v2568
        %v2616 = vadd.f32 %v2118, %v2570
        %v2617 = vadd.f32 %v2119, %v2572
        %v2618 = vadd.f32 %v2120, %v2576
        %v2619 = vadd.f32 %v2121, %v2578
        %v2620 = vadd.f32 %v2122, %v2580
        %v2621 = vadd.f32 %v2123, %v2582
        %v2622 = vadd.f32 %v2124, %v2586
        %v2623 = vadd.f32 %v2125, %v2588
        %v2624 = vadd.f32 %v2126, %v2590
        %v2625 = vadd.f32 %v2127, %v2592
        %s2626 = sadd.s32 %s581, 2
        %s2627 = smul.u32 %s2626, 2
        %s2628 = smul.addr %s2627, 4
        %s2629 = scalar_lea.vmem %s524, %s2628 [#allocation2]
        %v2630 = vld [vmem:[%s2629] sm:$0xf]
        %v2631 = vld [vmem:[%s2629 + $0x8] sm:$0xf]
        %v2632 = vld [vmem:[%s2629 + $0x10] sm:$0xf]
        %v2633 = vld [vmem:[%s2629 + $0x18] sm:$0xf]
        %v2634 = vld [vmem:[%s2629 + $0x20] sm:$0xf]
        %v2635 = vld [vmem:[%s2629 + $0x28] sm:$0xf]
        %v2636 = vld [vmem:[%s2629 + $0x30] sm:$0xf]
        %v2637 = vld [vmem:[%s2629 + $0x38] sm:$0xf]
        %v2638 = vld [vmem:[%s2629 + $0x40] sm:$0xf]
        %v2639 = vld [vmem:[%s2629 + $0x48] sm:$0xf]
        %v2640 = vld [vmem:[%s2629 + $0x50] sm:$0xf]
        %v2641 = vld [vmem:[%s2629 + $0x58] sm:$0xf]
        %v2642 = vld [vmem:[%s2629 + $0x60] sm:$0xf]
        %v2643 = vld [vmem:[%s2629 + $0x68] sm:$0xf]
        %v2644 = vld [vmem:[%s2629 + $0x70] sm:$0xf]
        %v2645 = vld [vmem:[%s2629 + $0x78] sm:$0xf]
        %s2646 = scalar_lea.vmem %s1, 384
        %v2647 = vld [vmem:[%s2646] sm:$0xff]
        %v2648 = vld [vmem:[%s2646 + $0x8] sm:$0xff]
        %v2649 = vld [vmem:[%s2646 + $0x10] sm:$0xff]
        %v2650 = vld [vmem:[%s2646 + $0x18] sm:$0xff]
        %v2651 = vld [vmem:[%s2646 + $0x20] sm:$0xff]
        %v2652 = vld [vmem:[%s2646 + $0x28] sm:$0xff]
        %v2653 = vld [vmem:[%s2646 + $0x30] sm:$0xff]
        %v2654 = vld [vmem:[%s2646 + $0x38] sm:$0xff]
        %v2671 = vunpack.c.l.b16 %v2630
        %v2672 = vunpack.c.l.b16 %v2631
        %v2673 = vunpack.c.l.b16 %v2632
        %v2674 = vunpack.c.l.b16 %v2633
        %v2675 = vunpack.c.l.b16 %v2634
        %v2676 = vunpack.c.l.b16 %v2635
        %v2677 = vunpack.c.l.b16 %v2636
        %v2678 = vunpack.c.l.b16 %v2637
        %v2679 = vunpack.c.l.b16 %v2638
        %v2680 = vunpack.c.l.b16 %v2639
        %v2681 = vunpack.c.l.b16 %v2640
        %v2682 = vunpack.c.l.b16 %v2641
        %v2683 = vunpack.c.l.b16 %v2642
        %v2684 = vunpack.c.l.b16 %v2643
        %v2685 = vunpack.c.l.b16 %v2644
        %v2686 = vunpack.c.l.b16 %v2645
        %v2687 = vpack.c.b16 %v2672, %v2671
        %v2688 = vpack.c.b16 %v2674, %v2673
        %v2689 = vpack.c.b16 %v2676, %v2675
        %v2690 = vpack.c.b16 %v2678, %v2677
        %v2691 = vpack.c.b16 %v2680, %v2679
        %v2692 = vpack.c.b16 %v2682, %v2681
        %v2693 = vpack.c.b16 %v2684, %v2683
        %v2694 = vpack.c.b16 %v2686, %v2685
        %v2703 = vunpack.c.l.b16 %v2647
        %v2704 = vunpack.c.h.b16 %v2647
        %v2705 = vunpack.c.l.b16 %v2648
        %v2706 = vunpack.c.h.b16 %v2648
        %v2707 = vunpack.c.l.b16 %v2649
        %v2708 = vunpack.c.h.b16 %v2649
        %v2709 = vunpack.c.l.b16 %v2650
        %v2710 = vunpack.c.h.b16 %v2650
        %v2711 = vunpack.c.l.b16 %v2651
        %v2712 = vunpack.c.h.b16 %v2651
        %v2713 = vunpack.c.l.b16 %v2652
        %v2714 = vunpack.c.h.b16 %v2652
        %v2715 = vunpack.c.l.b16 %v2653
        %v2716 = vunpack.c.h.b16 %v2653
        %v2717 = vunpack.c.l.b16 %v2654
        %v2718 = vunpack.c.h.b16 %v2654
        %v2719 = vpack.c.b16 %v2705, %v2703
        %v2720 = vpack.c.b16 %v2706, %v2704
        %v2721 = vpack.c.b16 %v2709, %v2707
        %v2722 = vpack.c.b16 %v2710, %v2708
        %v2723 = vpack.c.b16 %v2713, %v2711
        %v2724 = vpack.c.b16 %v2714, %v2712
        %v2725 = vpack.c.b16 %v2717, %v2715
        %v2726 = vpack.c.b16 %v2718, %v2716
        %v2736 = vsel %vm717, %v2687, 0
        %v2739 = vsel %vm717, %v2688, 0
        %v2742 = vsel %vm717, %v2689, 0
        %v2745 = vsel %vm717, %v2690, 0
        %v2748 = vsel %vm717, %v2691, 0
        %v2751 = vsel %vm717, %v2692, 0
        %v2754 = vsel %vm717, %v2693, 0
        %v2757 = vsel %vm717, %v2694, 0
        %2759 = vmatprep.subr.bf16.mxu0 %v2720
        %2760 = vmatpush1.bf16.msra.mxu0 %v2719
        %2761 = vmatprep.subr.bf16.mxu0 %v2722
        %2762 = vmatpush1.bf16.msra.mxu0 %v2721
        %2763 = vmatprep.subr.bf16.mxu0 %v2724
        %2764 = vmatpush1.bf16.msra.mxu0 %v2723
        %2765 = vmatprep.subr.bf16.mxu0 %v2726
        %2766 = vmatpush1.bf16.msra.mxu0 %v2725
        %2767 = vmatprep.subr.bf16.mxu0 0
        %2768 = vmatpush1.bf16.msra.mxu0 0
        %2769 = vmatprep.subr.bf16.mxu0 0
        %2770 = vmatpush1.bf16.msra.mxu0 0
        %2771 = vmatprep.subr.bf16.mxu0 0
        %2772 = vmatpush1.bf16.msra.mxu0 0
        %2773 = vmatprep.subr.bf16.mxu0 0
        %2774 = vmatpush1.bf16.msra.mxu0 0
        %2775 = vmatprep.subr.bf16.mxu0 0
        %2776 = vmatpush1.bf16.msra.mxu0 0
        %2777 = vmatprep.subr.bf16.mxu0 0
        %2778 = vmatpush1.bf16.msra.mxu0 0
        %2779 = vmatprep.subr.bf16.mxu0 0
        %2780 = vmatpush1.bf16.msra.mxu0 0
        %2781 = vmatprep.subr.bf16.mxu0 0
        %2782 = vmatpush1.bf16.msra.mxu0 0
        %2783 = vmatprep.subr.bf16.mxu0 0
        %2784 = vmatpush1.bf16.msra.mxu0 0
        %2785 = vmatprep.subr.bf16.mxu0 0
        %2786 = vmatpush1.bf16.msra.mxu0 0
        %2787 = vmatprep.subr.bf16.mxu0 0
        %2788 = vmatpush1.bf16.msra.mxu0 0
        %2789 = vmatprep.subr.bf16.mxu0 0
        %2790 = vmatpush1.bf16.msra.mxu0 0
        %2791 = vmatprep.mubr.bf16.mxu0 0
        %2792 = vmatmul.mubr.bf16.gmra.mrb[0].mxu0 %v2736
        %v2793 = vpop.f32.mrb[0].mxu0
        %v2794 = vadd.f32 0.0, %v2793
        %v2795 = vpop.f32.mrb[0].mxu0
        %v2796 = vadd.f32 0.0, %v2795
        %v2797 = vpop.f32.mrb[0].mxu0
        %v2798 = vadd.f32 0.0, %v2797
        %v2799 = vpop.f32.mrb[0].mxu0
        %v2800 = vadd.f32 0.0, %v2799
        %2801 = vmatprep.mubr.bf16.mxu0 0
        %2802 = vmatmul.mubr.bf16.gmra.mrb[0].mxu0 %v2739
        %v2803 = vpop.f32.mrb[0].mxu0
        %v2804 = vadd.f32 0.0, %v2803
        %v2805 = vpop.f32.mrb[0].mxu0
        %v2806 = vadd.f32 0.0, %v2805
        %v2807 = vpop.f32.mrb[0].mxu0
        %v2808 = vadd.f32 0.0, %v2807
        %v2809 = vpop.f32.mrb[0].mxu0
        %v2810 = vadd.f32 0.0, %v2809
        %2811 = vmatprep.mubr.bf16.mxu0 0
        %2812 = vmatmul.mubr.bf16.gmra.mrb[0].mxu0 %v2742
        %v2813 = vpop.f32.mrb[0].mxu0
        %v2814 = vadd.f32 0.0, %v2813
        %v2815 = vpop.f32.mrb[0].mxu0
        %v2816 = vadd.f32 0.0, %v2815
        %v2817 = vpop.f32.mrb[0].mxu0
        %v2818 = vadd.f32 0.0, %v2817
        %v2819 = vpop.f32.mrb[0].mxu0
        %v2820 = vadd.f32 0.0, %v2819
        %2821 = vmatprep.mubr.bf16.mxu0 0
        %2822 = vmatmul.mubr.bf16.gmra.mrb[0].mxu0 %v2745
        %v2823 = vpop.f32.mrb[0].mxu0
        %v2824 = vadd.f32 0.0, %v2823
        %v2825 = vpop.f32.mrb[0].mxu0
        %v2826 = vadd.f32 0.0, %v2825
        %v2827 = vpop.f32.mrb[0].mxu0
        %v2828 = vadd.f32 0.0, %v2827
        %v2829 = vpop.f32.mrb[0].mxu0
        %v2830 = vadd.f32 0.0, %v2829
        %2831 = vmatprep.mubr.bf16.mxu0 0
        %2832 = vmatmul.mubr.bf16.gmra.mrb[0].mxu0 %v2748
        %v2833 = vpop.f32.mrb[0].mxu0
        %v2834 = vadd.f32 0.0, %v2833
        %v2835 = vpop.f32.mrb[0].mxu0
        %v2836 = vadd.f32 0.0, %v2835
        %v2837 = vpop.f32.mrb[0].mxu0
        %v2838 = vadd.f32 0.0, %v2837
        %v2839 = vpop.f32.mrb[0].mxu0
        %v2840 = vadd.f32 0.0, %v2839
        %2841 = vmatprep.mubr.bf16.mxu0 0
        %2842 = vmatmul.mubr.bf16.gmra.mrb[0].mxu0 %v2751
        %v2843 = vpop.f32.mrb[0].mxu0
        %v2844 = vadd.f32 0.0, %v2843
        %v2845 = vpop.f32.mrb[0].mxu0
        %v2846 = vadd.f32 0.0, %v2845
        %v2847 = vpop.f32.mrb[0].mxu0
        %v2848 = vadd.f32 0.0, %v2847
        %v2849 = vpop.f32.mrb[0].mxu0
        %v2850 = vadd.f32 0.0, %v2849
        %2851 = vmatprep.mubr.bf16.mxu0 0
        %2852 = vmatmul.mubr.bf16.gmra.mrb[0].mxu0 %v2754
        %v2853 = vpop.f32.mrb[0].mxu0
        %v2854 = vadd.f32 0.0, %v2853
        %v2855 = vpop.f32.mrb[0].mxu0
        %v2856 = vadd.f32 0.0, %v2855
        %v2857 = vpop.f32.mrb[0].mxu0
        %v2858 = vadd.f32 0.0, %v2857
        %v2859 = vpop.f32.mrb[0].mxu0
        %v2860 = vadd.f32 0.0, %v2859
        %2861 = vmatprep.mubr.bf16.mxu0 0
        %2862 = vmatmul.mubr.bf16.gmra.mrb[0].mxu0 %v2757
        %v2863 = vpop.f32.mrb[0].mxu0
        %v2864 = vadd.f32 0.0, %v2863
        %v2865 = vpop.f32.mrb[0].mxu0
        %v2866 = vadd.f32 0.0, %v2865
        %v2867 = vpop.f32.mrb[0].mxu0
        %v2868 = vadd.f32 0.0, %v2867
        %v2869 = vpop.f32.mrb[0].mxu0
        %v2870 = vadd.f32 0.0, %v2869
        %2871 = vdwg.mxu0
        %v2872 = vadd.f32 %v2594, %v2794
        %v2873 = vadd.f32 %v2595, %v2796
        %v2874 = vadd.f32 %v2596, %v2798
        %v2875 = vadd.f32 %v2597, %v2800
        %v2876 = vadd.f32 %v2598, %v2804
        %v2877 = vadd.f32 %v2599, %v2806
        %v2878 = vadd.f32 %v2600, %v2808
        %v2879 = vadd.f32 %v2601, %v2810
        %v2880 = vadd.f32 %v2602, %v2814
        %v2881 = vadd.f32 %v2603, %v2816
        %v2882 = vadd.f32 %v2604, %v2818
        %v2883 = vadd.f32 %v2605, %v2820
        %v2884 = vadd.f32 %v2606, %v2824
        %v2885 = vadd.f32 %v2607, %v2826
        %v2886 = vadd.f32 %v2608, %v2828
        %v2887 = vadd.f32 %v2609, %v2830
        %v2888 = vadd.f32 %v2610, %v2834
        %v2889 = vadd.f32 %v2611, %v2836
        %v2890 = vadd.f32 %v2612, %v2838
        %v2891 = vadd.f32 %v2613, %v2840
        %v2892 = vadd.f32 %v2614, %v2844
        %v2893 = vadd.f32 %v2615, %v2846
        %v2894 = vadd.f32 %v2616, %v2848
        %v2895 = vadd.f32 %v2617, %v2850
        %v2896 = vadd.f32 %v2618, %v2854
        %v2897 = vadd.f32 %v2619, %v2856
        %v2898 = vadd.f32 %v2620, %v2858
        %v2899 = vadd.f32 %v2621, %v2860
        %v2900 = vadd.f32 %v2622, %v2864
        %v2901 = vadd.f32 %v2623, %v2866
        %v2902 = vadd.f32 %v2624, %v2868
        %v2903 = vadd.f32 %v2625, %v2870
        %s2904 = sadd.s32 %s2627, 36
        %s2905 = smul.addr %s2904, 4
        %s2906 = scalar_lea.vmem %s524, %s2905 [#allocation2]
        %v2907 = vld [vmem:[%s2906] sm:$0xf]
        %v2908 = vld [vmem:[%s2906 + $0x8] sm:$0xf]
        %v2909 = vld [vmem:[%s2906 + $0x10] sm:$0xf]
        %v2910 = vld [vmem:[%s2906 + $0x18] sm:$0xf]
        %v2911 = vld [vmem:[%s2906 + $0x20] sm:$0xf]
        %v2912 = vld [vmem:[%s2906 + $0x28] sm:$0xf]
        %v2913 = vld [vmem:[%s2906 + $0x30] sm:$0xf]
        %v2914 = vld [vmem:[%s2906 + $0x38] sm:$0xf]
        %v2915 = vld [vmem:[%s2906 + $0x40] sm:$0xf]
        %v2916 = vld [vmem:[%s2906 + $0x48] sm:$0xf]
        %v2917 = vld [vmem:[%s2906 + $0x50] sm:$0xf]
        %v2918 = vld [vmem:[%s2906 + $0x58] sm:$0xf]
        %v2919 = vld [vmem:[%s2906 + $0x60] sm:$0xf]
        %v2920 = vld [vmem:[%s2906 + $0x68] sm:$0xf]
        %v2921 = vld [vmem:[%s2906 + $0x70] sm:$0xf]
        %v2922 = vld [vmem:[%s2906 + $0x78] sm:$0xf]
        %s2923 = scalar_lea.vmem %s1, 448
        %v2924 = vld [vmem:[%s2923] sm:$0xff]
        %v2925 = vld [vmem:[%s2923 + $0x8] sm:$0xff]
        %v2926 = vld [vmem:[%s2923 + $0x10] sm:$0xff]
        %v2927 = vld [vmem:[%s2923 + $0x18] sm:$0xff]
        %v2928 = vld [vmem:[%s2923 + $0x20] sm:$0xff]
        %v2929 = vld [vmem:[%s2923 + $0x28] sm:$0xff]
        %v2930 = vld [vmem:[%s2923 + $0x30] sm:$0xff]
        %v2931 = vld [vmem:[%s2923 + $0x38] sm:$0xff]
        %v2948 = vunpack.c.l.b16 %v2907
        %v2949 = vunpack.c.l.b16 %v2908
        %v2950 = vunpack.c.l.b16 %v2909
        %v2951 = vunpack.c.l.b16 %v2910
        %v2952 = vunpack.c.l.b16 %v2911
        %v2953 = vunpack.c.l.b16 %v2912
        %v2954 = vunpack.c.l.b16 %v2913
        %v2955 = vunpack.c.l.b16 %v2914
        %v2956 = vunpack.c.l.b16 %v2915
        %v2957 = vunpack.c.l.b16 %v2916
        %v2958 = vunpack.c.l.b16 %v2917
        %v2959 = vunpack.c.l.b16 %v2918
        %v2960 = vunpack.c.l.b16 %v2919
        %v2961 = vunpack.c.l.b16 %v2920
        %v2962 = vunpack.c.l.b16 %v2921
        %v2963 = vunpack.c.l.b16 %v2922
        %v2964 = vpack.c.b16 %v2949, %v2948
        %v2965 = vpack.c.b16 %v2951, %v2950
        %v2966 = vpack.c.b16 %v2953, %v2952
        %v2967 = vpack.c.b16 %v2955, %v2954
        %v2968 = vpack.c.b16 %v2957, %v2956
        %v2969 = vpack.c.b16 %v2959, %v2958
        %v2970 = vpack.c.b16 %v2961, %v2960
        %v2971 = vpack.c.b16 %v2963, %v2962
        %v2980 = vunpack.c.l.b16 %v2924
        %v2981 = vunpack.c.h.b16 %v2924
        %v2982 = vunpack.c.l.b16 %v2925
        %v2983 = vunpack.c.h.b16 %v2925
        %v2984 = vunpack.c.l.b16 %v2926
        %v2985 = vunpack.c.h.b16 %v2926
        %v2986 = vunpack.c.l.b16 %v2927
        %v2987 = vunpack.c.h.b16 %v2927
        %v2988 = vunpack.c.l.b16 %v2928
        %v2989 = vunpack.c.h.b16 %v2928
        %v2990 = vunpack.c.l.b16 %v2929
        %v2991 = vunpack.c.h.b16 %v2929
        %v2992 = vunpack.c.l.b16 %v2930
        %v2993 = vunpack.c.h.b16 %v2930
        %v2994 = vunpack.c.l.b16 %v2931
        %v2995 = vunpack.c.h.b16 %v2931
        %v2996 = vpack.c.b16 %v2982, %v2980
        %v2997 = vpack.c.b16 %v2983, %v2981
        %v2998 = vpack.c.b16 %v2986, %v2984
        %v2999 = vpack.c.b16 %v2987, %v2985
        %v3000 = vpack.c.b16 %v2990, %v2988
        %v3001 = vpack.c.b16 %v2991, %v2989
        %v3002 = vpack.c.b16 %v2994, %v2992
        %v3003 = vpack.c.b16 %v2995, %v2993
        %v3013 = vsel %vm717, %v2964, 0
        %v3016 = vsel %vm717, %v2965, 0
        %v3019 = vsel %vm717, %v2966, 0
        %v3022 = vsel %vm717, %v2967, 0
        %v3025 = vsel %vm717, %v2968, 0
        %v3028 = vsel %vm717, %v2969, 0
        %v3031 = vsel %vm717, %v2970, 0
        %v3034 = vsel %vm717, %v2971, 0
        %3036 = vmatprep.subr.bf16.mxu0 %v2997
        %3037 = vmatpush1.bf16.msra.mxu0 %v2996
        %3038 = vmatprep.subr.bf16.mxu0 %v2999
        %3039 = vmatpush1.bf16.msra.mxu0 %v2998
        %3040 = vmatprep.subr.bf16.mxu0 %v3001
        %3041 = vmatpush1.bf16.msra.mxu0 %v3000
        %3042 = vmatprep.subr.bf16.mxu0 %v3003
        %3043 = vmatpush1.bf16.msra.mxu0 %v3002
        %3044 = vmatprep.subr.bf16.mxu0 0
        %3045 = vmatpush1.bf16.msra.mxu0 0
        %3046 = vmatprep.subr.bf16.mxu0 0
        %3047 = vmatpush1.bf16.msra.mxu0 0
        %3048 = vmatprep.subr.bf16.mxu0 0
        %3049 = vmatpush1.bf16.msra.mxu0 0
        %3050 = vmatprep.subr.bf16.mxu0 0
        %3051 = vmatpush1.bf16.msra.mxu0 0
        %3052 = vmatprep.subr.bf16.mxu0 0
        %3053 = vmatpush1.bf16.msra.mxu0 0
        %3054 = vmatprep.subr.bf16.mxu0 0
        %3055 = vmatpush1.bf16.msra.mxu0 0
        %3056 = vmatprep.subr.bf16.mxu0 0
        %3057 = vmatpush1.bf16.msra.mxu0 0
        %3058 = vmatprep.subr.bf16.mxu0 0
        %3059 = vmatpush1.bf16.msra.mxu0 0
        %3060 = vmatprep.subr.bf16.mxu0 0
        %3061 = vmatpush1.bf16.msra.mxu0 0
        %3062 = vmatprep.subr.bf16.mxu0 0
        %3063 = vmatpush1.bf16.msra.mxu0 0
        %3064 = vmatprep.subr.bf16.mxu0 0
        %3065 = vmatpush1.bf16.msra.mxu0 0
        %3066 = vmatprep.subr.bf16.mxu0 0
        %3067 = vmatpush1.bf16.msra.mxu0 0
        %3068 = vmatprep.mubr.bf16.mxu0 0
        %3069 = vmatmul.mubr.bf16.gmra.mrb[0].mxu0 %v3013
        %v3070 = vpop.f32.mrb[0].mxu0
        %v3071 = vadd.f32 0.0, %v3070
        %v3072 = vpop.f32.mrb[0].mxu0
        %v3073 = vadd.f32 0.0, %v3072
        %v3074 = vpop.f32.mrb[0].mxu0
        %v3075 = vadd.f32 0.0, %v3074
        %v3076 = vpop.f32.mrb[0].mxu0
        %v3077 = vadd.f32 0.0, %v3076
        %3078 = vmatprep.mubr.bf16.mxu0 0
        %3079 = vmatmul.mubr.bf16.gmra.mrb[0].mxu0 %v3016
        %v3080 = vpop.f32.mrb[0].mxu0
        %v3081 = vadd.f32 0.0, %v3080
        %v3082 = vpop.f32.mrb[0].mxu0
        %v3083 = vadd.f32 0.0, %v3082
        %v3084 = vpop.f32.mrb[0].mxu0
        %v3085 = vadd.f32 0.0, %v3084
        %v3086 = vpop.f32.mrb[0].mxu0
        %v3087 = vadd.f32 0.0, %v3086
        %3088 = vmatprep.mubr.bf16.mxu0 0
        %3089 = vmatmul.mubr.bf16.gmra.mrb[0].mxu0 %v3019
        %v3090 = vpop.f32.mrb[0].mxu0
        %v3091 = vadd.f32 0.0, %v3090
        %v3092 = vpop.f32.mrb[0].mxu0
        %v3093 = vadd.f32 0.0, %v3092
        %v3094 = vpop.f32.mrb[0].mxu0
        %v3095 = vadd.f32 0.0, %v3094
        %v3096 = vpop.f32.mrb[0].mxu0
        %v3097 = vadd.f32 0.0, %v3096
        %3098 = vmatprep.mubr.bf16.mxu0 0
        %3099 = vmatmul.mubr.bf16.gmra.mrb[0].mxu0 %v3022
        %v3100 = vpop.f32.mrb[0].mxu0
        %v3101 = vadd.f32 0.0, %v3100
        %v3102 = vpop.f32.mrb[0].mxu0
        %v3103 = vadd.f32 0.0, %v3102
        %v3104 = vpop.f32.mrb[0].mxu0
        %v3105 = vadd.f32 0.0, %v3104
        %v3106 = vpop.f32.mrb[0].mxu0
        %v3107 = vadd.f32 0.0, %v3106
        %3108 = vmatprep.mubr.bf16.mxu0 0
        %3109 = vmatmul.mubr.bf16.gmra.mrb[0].mxu0 %v3025
        %v3110 = vpop.f32.mrb[0].mxu0
        %v3111 = vadd.f32 0.0, %v3110
        %v3112 = vpop.f32.mrb[0].mxu0
        %v3113 = vadd.f32 0.0, %v3112
        %v3114 = vpop.f32.mrb[0].mxu0
        %v3115 = vadd.f32 0.0, %v3114
        %v3116 = vpop.f32.mrb[0].mxu0
        %v3117 = vadd.f32 0.0, %v3116
        %3118 = vmatprep.mubr.bf16.mxu0 0
        %3119 = vmatmul.mubr.bf16.gmra.mrb[0].mxu0 %v3028
        %v3120 = vpop.f32.mrb[0].mxu0
        %v3121 = vadd.f32 0.0, %v3120
        %v3122 = vpop.f32.mrb[0].mxu0
        %v3123 = vadd.f32 0.0, %v3122
        %v3124 = vpop.f32.mrb[0].mxu0
        %v3125 = vadd.f32 0.0, %v3124
        %v3126 = vpop.f32.mrb[0].mxu0
        %v3127 = vadd.f32 0.0, %v3126
        %3128 = vmatprep.mubr.bf16.mxu0 0
        %3129 = vmatmul.mubr.bf16.gmra.mrb[0].mxu0 %v3031
        %v3130 = vpop.f32.mrb[0].mxu0
        %v3131 = vadd.f32 0.0, %v3130
        %v3132 = vpop.f32.mrb[0].mxu0
        %v3133 = vadd.f32 0.0, %v3132
        %v3134 = vpop.f32.mrb[0].mxu0
        %v3135 = vadd.f32 0.0, %v3134
        %v3136 = vpop.f32.mrb[0].mxu0
        %v3137 = vadd.f32 0.0, %v3136
        %3138 = vmatprep.mubr.bf16.mxu0 0
        %3139 = vmatmul.mubr.bf16.gmra.mrb[0].mxu0 %v3034
        %v3140 = vpop.f32.mrb[0].mxu0
        %v3141 = vadd.f32 0.0, %v3140
        %v3142 = vpop.f32.mrb[0].mxu0
        %v3143 = vadd.f32 0.0, %v3142
        %v3144 = vpop.f32.mrb[0].mxu0
        %v3145 = vadd.f32 0.0, %v3144
        %v3146 = vpop.f32.mrb[0].mxu0
        %v3147 = vadd.f32 0.0, %v3146
        %3148 = vdwg.mxu0
        %v3149 = vadd.f32 %v2872, %v3071
        %v3150 = vadd.f32 %v2873, %v3073
        %v3151 = vadd.f32 %v2874, %v3075
        %v3152 = vadd.f32 %v2875, %v3077
        %v3153 = vadd.f32 %v2876, %v3081
        %v3154 = vadd.f32 %v2877, %v3083
        %v3155 = vadd.f32 %v2878, %v3085
        %v3156 = vadd.f32 %v2879, %v3087
        %v3157 = vadd.f32 %v2880, %v3091
        %v3158 = vadd.f32 %v2881, %v3093
        %v3159 = vadd.f32 %v2882, %v3095
        %v3160 = vadd.f32 %v2883, %v3097
        %v3161 = vadd.f32 %v2884, %v3101
        %v3162 = vadd.f32 %v2885, %v3103
        %v3163 = vadd.f32 %v2886, %v3105
        %v3164 = vadd.f32 %v2887, %v3107
        %v3165 = vadd.f32 %v2888, %v3111
        %v3166 = vadd.f32 %v2889, %v3113
        %v3167 = vadd.f32 %v2890, %v3115
        %v3168 = vadd.f32 %v2891, %v3117
        %v3169 = vadd.f32 %v2892, %v3121
        %v3170 = vadd.f32 %v2893, %v3123
        %v3171 = vadd.f32 %v2894, %v3125
        %v3172 = vadd.f32 %v2895, %v3127
        %v3173 = vadd.f32 %v2896, %v3131
        %v3174 = vadd.f32 %v2897, %v3133
        %v3175 = vadd.f32 %v2898, %v3135
        %v3176 = vadd.f32 %v2899, %v3137
        %v3177 = vadd.f32 %v2900, %v3141
        %v3178 = vadd.f32 %v2901, %v3143
        %v3179 = vadd.f32 %v2902, %v3145
        %v3180 = vadd.f32 %v2903, %v3147
        %v3181 = vld [vmem:[%s2629] sm:$0xf]
        %v3182 = vld [vmem:[%s2629 + $0x4] sm:$0x1]
        %v3183 = vld [vmem:[%s2629 + $0x8] sm:$0xf]
        %v3184 = vld [vmem:[%s2629 + $0xc] sm:$0x1]
        %v3185 = vld [vmem:[%s2629 + $0x10] sm:$0xf]
        %v3186 = vld [vmem:[%s2629 + $0x14] sm:$0x1]
        %v3187 = vld [vmem:[%s2629 + $0x18] sm:$0xf]
        %v3188 = vld [vmem:[%s2629 + $0x1c] sm:$0x1]
        %v3189 = vld [vmem:[%s2629 + $0x20] sm:$0xf]
        %v3190 = vld [vmem:[%s2629 + $0x24] sm:$0x1]
        %v3191 = vld [vmem:[%s2629 + $0x28] sm:$0xf]
        %v3192 = vld [vmem:[%s2629 + $0x2c] sm:$0x1]
        %v3193 = vld [vmem:[%s2629 + $0x30] sm:$0xf]
        %v3194 = vld [vmem:[%s2629 + $0x34] sm:$0x1]
        %v3195 = vld [vmem:[%s2629 + $0x38] sm:$0xf]
        %v3196 = vld [vmem:[%s2629 + $0x3c] sm:$0x1]
        %v3197 = vld [vmem:[%s2629 + $0x40] sm:$0xf]
        %v3198 = vld [vmem:[%s2629 + $0x44] sm:$0x1]
        %v3199 = vld [vmem:[%s2629 + $0x48] sm:$0xf]
        %v3200 = vld [vmem:[%s2629 + $0x4c] sm:$0x1]
        %v3201 = vld [vmem:[%s2629 + $0x50] sm:$0xf]
        %v3202 = vld [vmem:[%s2629 + $0x54] sm:$0x1]
        %v3203 = vld [vmem:[%s2629 + $0x58] sm:$0xf]
        %v3204 = vld [vmem:[%s2629 + $0x5c] sm:$0x1]
        %v3205 = vld [vmem:[%s2629 + $0x60] sm:$0xf]
        %v3206 = vld [vmem:[%s2629 + $0x64] sm:$0x1]
        %v3207 = vld [vmem:[%s2629 + $0x68] sm:$0xf]
        %v3208 = vld [vmem:[%s2629 + $0x6c] sm:$0x1]
        %v3209 = vld [vmem:[%s2629 + $0x70] sm:$0xf]
        %v3210 = vld [vmem:[%s2629 + $0x74] sm:$0x1]
        %v3211 = vld [vmem:[%s2629 + $0x78] sm:$0xf]
        %v3212 = vld [vmem:[%s2629 + $0x7c] sm:$0x1]
        %v3214 = vshrl.u32 %v3181, 16
        %v3216 = vrot.slane %v3214, 4
        %v3217 = vshll.u32 %v3181, 16
        %v3219 = vrot.slane %v3217, 5
        %v3220 = vor.u32 %v3216, %v3219
        %v3221 = vrot.slane %v3220, 4
        %v3223 = vshll.u32 %v3182, 16
        %v3225 = vrot.slane %v3223, 5
        %v3226 = vsel %vm1106, %v3221, %v3225
        %v3228 = vshrl.u32 %v3183, 16
        %v3230 = vrot.slane %v3228, 4
        %v3231 = vshll.u32 %v3183, 16
        %v3233 = vrot.slane %v3231, 5
        %v3234 = vor.u32 %v3230, %v3233
        %v3235 = vrot.slane %v3234, 4
        %v3237 = vshll.u32 %v3184, 16
        %v3239 = vrot.slane %v3237, 5
        %v3240 = vsel %vm1106, %v3235, %v3239
        %v3242 = vshrl.u32 %v3185, 16
        %v3244 = vrot.slane %v3242, 4
        %v3245 = vshll.u32 %v3185, 16
        %v3247 = vrot.slane %v3245, 5
        %v3248 = vor.u32 %v3244, %v3247
        %v3249 = vrot.slane %v3248, 4
        %v3251 = vshll.u32 %v3186, 16
        %v3253 = vrot.slane %v3251, 5
        %v3254 = vsel %vm1106, %v3249, %v3253
        %v3256 = vshrl.u32 %v3187, 16
        %v3258 = vrot.slane %v3256, 4
        %v3259 = vshll.u32 %v3187, 16
        %v3261 = vrot.slane %v3259, 5
        %v3262 = vor.u32 %v3258, %v3261
        %v3263 = vrot.slane %v3262, 4
        %v3265 = vshll.u32 %v3188, 16
        %v3267 = vrot.slane %v3265, 5
        %v3268 = vsel %vm1106, %v3263, %v3267
        %v3270 = vshrl.u32 %v3189, 16
        %v3272 = vrot.slane %v3270, 4
        %v3273 = vshll.u32 %v3189, 16
        %v3275 = vrot.slane %v3273, 5
        %v3276 = vor.u32 %v3272, %v3275
        %v3277 = vrot.slane %v3276, 4
        %v3279 = vshll.u32 %v3190, 16
        %v3281 = vrot.slane %v3279, 5
        %v3282 = vsel %vm1106, %v3277, %v3281
        %v3284 = vshrl.u32 %v3191, 16
        %v3286 = vrot.slane %v3284, 4
        %v3287 = vshll.u32 %v3191, 16
        %v3289 = vrot.slane %v3287, 5
        %v3290 = vor.u32 %v3286, %v3289
        %v3291 = vrot.slane %v3290, 4
        %v3293 = vshll.u32 %v3192, 16
        %v3295 = vrot.slane %v3293, 5
        %v3296 = vsel %vm1106, %v3291, %v3295
        %v3298 = vshrl.u32 %v3193, 16
        %v3300 = vrot.slane %v3298, 4
        %v3301 = vshll.u32 %v3193, 16
        %v3303 = vrot.slane %v3301, 5
        %v3304 = vor.u32 %v3300, %v3303
        %v3305 = vrot.slane %v3304, 4
        %v3307 = vshll.u32 %v3194, 16
        %v3309 = vrot.slane %v3307, 5
        %v3310 = vsel %vm1106, %v3305, %v3309
        %v3312 = vshrl.u32 %v3195, 16
        %v3314 = vrot.slane %v3312, 4
        %v3315 = vshll.u32 %v3195, 16
        %v3317 = vrot.slane %v3315, 5
        %v3318 = vor.u32 %v3314, %v3317
        %v3319 = vrot.slane %v3318, 4
        %v3321 = vshll.u32 %v3196, 16
        %v3323 = vrot.slane %v3321, 5
        %v3324 = vsel %vm1106, %v3319, %v3323
        %v3326 = vshrl.u32 %v3197, 16
        %v3328 = vrot.slane %v3326, 4
        %v3329 = vshll.u32 %v3197, 16
        %v3331 = vrot.slane %v3329, 5
        %v3332 = vor.u32 %v3328, %v3331
        %v3333 = vrot.slane %v3332, 4
        %v3335 = vshll.u32 %v3198, 16
        %v3337 = vrot.slane %v3335, 5
        %v3338 = vsel %vm1106, %v3333, %v3337
        %v3340 = vshrl.u32 %v3199, 16
        %v3342 = vrot.slane %v3340, 4
        %v3343 = vshll.u32 %v3199, 16
        %v3345 = vrot.slane %v3343, 5
        %v3346 = vor.u32 %v3342, %v3345
        %v3347 = vrot.slane %v3346, 4
        %v3349 = vshll.u32 %v3200, 16
        %v3351 = vrot.slane %v3349, 5
        %v3352 = vsel %vm1106, %v3347, %v3351
        %v3354 = vshrl.u32 %v3201, 16
        %v3356 = vrot.slane %v3354, 4
        %v3357 = vshll.u32 %v3201, 16
        %v3359 = vrot.slane %v3357, 5
        %v3360 = vor.u32 %v3356, %v3359
        %v3361 = vrot.slane %v3360, 4
        %v3363 = vshll.u32 %v3202, 16
        %v3365 = vrot.slane %v3363, 5
        %v3366 = vsel %vm1106, %v3361, %v3365
        %v3368 = vshrl.u32 %v3203, 16
        %v3370 = vrot.slane %v3368, 4
        %v3371 = vshll.u32 %v3203, 16
        %v3373 = vrot.slane %v3371, 5
        %v3374 = vor.u32 %v3370, %v3373
        %v3375 = vrot.slane %v3374, 4
        %v3377 = vshll.u32 %v3204, 16
        %v3379 = vrot.slane %v3377, 5
        %v3380 = vsel %vm1106, %v3375, %v3379
        %v3382 = vshrl.u32 %v3205, 16
        %v3384 = vrot.slane %v3382, 4
        %v3385 = vshll.u32 %v3205, 16
        %v3387 = vrot.slane %v3385, 5
        %v3388 = vor.u32 %v3384, %v3387
        %v3389 = vrot.slane %v3388, 4
        %v3391 = vshll.u32 %v3206, 16
        %v3393 = vrot.slane %v3391, 5
        %v3394 = vsel %vm1106, %v3389, %v3393
        %v3396 = vshrl.u32 %v3207, 16
        %v3398 = vrot.slane %v3396, 4
        %v3399 = vshll.u32 %v3207, 16
        %v3401 = vrot.slane %v3399, 5
        %v3402 = vor.u32 %v3398, %v3401
        %v3403 = vrot.slane %v3402, 4
        %v3405 = vshll.u32 %v3208, 16
        %v3407 = vrot.slane %v3405, 5
        %v3408 = vsel %vm1106, %v3403, %v3407
        %v3410 = vshrl.u32 %v3209, 16
        %v3412 = vrot.slane %v3410, 4
        %v3413 = vshll.u32 %v3209, 16
        %v3415 = vrot.slane %v3413, 5
        %v3416 = vor.u32 %v3412, %v3415
        %v3417 = vrot.slane %v3416, 4
        %v3419 = vshll.u32 %v3210, 16
        %v3421 = vrot.slane %v3419, 5
        %v3422 = vsel %vm1106, %v3417, %v3421
        %v3424 = vshrl.u32 %v3211, 16
        %v3426 = vrot.slane %v3424, 4
        %v3427 = vshll.u32 %v3211, 16
        %v3429 = vrot.slane %v3427, 5
        %v3430 = vor.u32 %v3426, %v3429
        %v3431 = vrot.slane %v3430, 4
        %v3433 = vshll.u32 %v3212, 16
        %v3435 = vrot.slane %v3433, 5
        %v3436 = vsel %vm1106, %v3431, %v3435
        %s3437 = scalar_lea.vmem %s1, 512
        %v3438 = vld [vmem:[%s3437] sm:$0xff]
        %v3439 = vld [vmem:[%s3437 + $0x8] sm:$0xff]
        %v3440 = vld [vmem:[%s3437 + $0x10] sm:$0xff]
        %v3441 = vld [vmem:[%s3437 + $0x18] sm:$0xff]
        %v3442 = vld [vmem:[%s3437 + $0x20] sm:$0xff]
        %v3443 = vld [vmem:[%s3437 + $0x28] sm:$0xff]
        %v3444 = vld [vmem:[%s3437 + $0x30] sm:$0xff]
        %v3445 = vld [vmem:[%s3437 + $0x38] sm:$0xff]
        %v3446 = vunpack.c.l.b16 %v3226
        %v3447 = vunpack.c.l.b16 %v3240
        %v3448 = vunpack.c.l.b16 %v3254
        %v3449 = vunpack.c.l.b16 %v3268
        %v3450 = vunpack.c.l.b16 %v3282
        %v3451 = vunpack.c.l.b16 %v3296
        %v3452 = vunpack.c.l.b16 %v3310
        %v3453 = vunpack.c.l.b16 %v3324
        %v3454 = vunpack.c.l.b16 %v3338
        %v3455 = vunpack.c.l.b16 %v3352
        %v3456 = vunpack.c.l.b16 %v3366
        %v3457 = vunpack.c.l.b16 %v3380
        %v3458 = vunpack.c.l.b16 %v3394
        %v3459 = vunpack.c.l.b16 %v3408
        %v3460 = vunpack.c.l.b16 %v3422
        %v3461 = vunpack.c.l.b16 %v3436
        %v3462 = vpack.c.b16 %v3447, %v3446
        %v3463 = vpack.c.b16 %v3449, %v3448
        %v3464 = vpack.c.b16 %v3451, %v3450
        %v3465 = vpack.c.b16 %v3453, %v3452
        %v3466 = vpack.c.b16 %v3455, %v3454
        %v3467 = vpack.c.b16 %v3457, %v3456
        %v3468 = vpack.c.b16 %v3459, %v3458
        %v3469 = vpack.c.b16 %v3461, %v3460
        %v3478 = vunpack.c.l.b16 %v3438
        %v3479 = vunpack.c.h.b16 %v3438
        %v3480 = vunpack.c.l.b16 %v3439
        %v3481 = vunpack.c.h.b16 %v3439
        %v3482 = vunpack.c.l.b16 %v3440
        %v3483 = vunpack.c.h.b16 %v3440
        %v3484 = vunpack.c.l.b16 %v3441
        %v3485 = vunpack.c.h.b16 %v3441
        %v3486 = vunpack.c.l.b16 %v3442
        %v3487 = vunpack.c.h.b16 %v3442
        %v3488 = vunpack.c.l.b16 %v3443
        %v3489 = vunpack.c.h.b16 %v3443
        %v3490 = vunpack.c.l.b16 %v3444
        %v3491 = vunpack.c.h.b16 %v3444
        %v3492 = vunpack.c.l.b16 %v3445
        %v3493 = vunpack.c.h.b16 %v3445
        %v3494 = vpack.c.b16 %v3480, %v3478
        %v3495 = vpack.c.b16 %v3481, %v3479
        %v3496 = vpack.c.b16 %v3484, %v3482
        %v3497 = vpack.c.b16 %v3485, %v3483
        %v3498 = vpack.c.b16 %v3488, %v3486
        %v3499 = vpack.c.b16 %v3489, %v3487
        %v3500 = vpack.c.b16 %v3492, %v3490
        %v3501 = vpack.c.b16 %v3493, %v3491
        %v3511 = vsel %vm717, %v3462, 0
        %v3514 = vsel %vm717, %v3463, 0
        %v3517 = vsel %vm717, %v3464, 0
        %v3520 = vsel %vm717, %v3465, 0
        %v3523 = vsel %vm717, %v3466, 0
        %v3526 = vsel %vm717, %v3467, 0
        %v3529 = vsel %vm717, %v3468, 0
        %v3532 = vsel %vm717, %v3469, 0
        %3534 = vmatprep.subr.bf16.mxu0 %v3495
        %3535 = vmatpush1.bf16.msra.mxu0 %v3494
        %3536 = vmatprep.subr.bf16.mxu0 %v3497
        %3537 = vmatpush1.bf16.msra.mxu0 %v3496
        %3538 = vmatprep.subr.bf16.mxu0 %v3499
        %3539 = vmatpush1.bf16.msra.mxu0 %v3498
        %3540 = vmatprep.subr.bf16.mxu0 %v3501
        %3541 = vmatpush1.bf16.msra.mxu0 %v3500
        %3542 = vmatprep.subr.bf16.mxu0 0
        %3543 = vmatpush1.bf16.msra.mxu0 0
        %3544 = vmatprep.subr.bf16.mxu0 0
        %3545 = vmatpush1.bf16.msra.mxu0 0
        %3546 = vmatprep.subr.bf16.mxu0 0
        %3547 = vmatpush1.bf16.msra.mxu0 0
        %3548 = vmatprep.subr.bf16.mxu0 0
        %3549 = vmatpush1.bf16.msra.mxu0 0
        %3550 = vmatprep.subr.bf16.mxu0 0
        %3551 = vmatpush1.bf16.msra.mxu0 0
        %3552 = vmatprep.subr.bf16.mxu0 0
        %3553 = vmatpush1.bf16.msra.mxu0 0
        %3554 = vmatprep.subr.bf16.mxu0 0
        %3555 = vmatpush1.bf16.msra.mxu0 0
        %3556 = vmatprep.subr.bf16.mxu0 0
        %3557 = vmatpush1.bf16.msra.mxu0 0
        %3558 = vmatprep.subr.bf16.mxu0 0
        %3559 = vmatpush1.bf16.msra.mxu0 0
        %3560 = vmatprep.subr.bf16.mxu0 0
        %3561 = vmatpush1.bf16.msra.mxu0 0
        %3562 = vmatprep.subr.bf16.mxu0 0
        %3563 = vmatpush1.bf16.msra.mxu0 0
        %3564 = vmatprep.subr.bf16.mxu0 0
        %3565 = vmatpush1.bf16.msra.mxu0 0
        %3566 = vmatprep.mubr.bf16.mxu0 0
        %3567 = vmatmul.mubr.bf16.gmra.mrb[0].mxu0 %v3511
        %v3568 = vpop.f32.mrb[0].mxu0
        %v3569 = vadd.f32 0.0, %v3568
        %v3570 = vpop.f32.mrb[0].mxu0
        %v3571 = vadd.f32 0.0, %v3570
        %v3572 = vpop.f32.mrb[0].mxu0
        %v3573 = vadd.f32 0.0, %v3572
        %v3574 = vpop.f32.mrb[0].mxu0
        %v3575 = vadd.f32 0.0, %v3574
        %3576 = vmatprep.mubr.bf16.mxu0 0
        %3577 = vmatmul.mubr.bf16.gmra.mrb[0].mxu0 %v3514
        %v3578 = vpop.f32.mrb[0].mxu0
        %v3579 = vadd.f32 0.0, %v3578
        %v3580 = vpop.f32.mrb[0].mxu0
        %v3581 = vadd.f32 0.0, %v3580
        %v3582 = vpop.f32.mrb[0].mxu0
        %v3583 = vadd.f32 0.0, %v3582
        %v3584 = vpop.f32.mrb[0].mxu0
        %v3585 = vadd.f32 0.0, %v3584
        %3586 = vmatprep.mubr.bf16.mxu0 0
        %3587 = vmatmul.mubr.bf16.gmra.mrb[0].mxu0 %v3517
        %v3588 = vpop.f32.mrb[0].mxu0
        %v3589 = vadd.f32 0.0, %v3588
        %v3590 = vpop.f32.mrb[0].mxu0
        %v3591 = vadd.f32 0.0, %v3590
        %v3592 = vpop.f32.mrb[0].mxu0
        %v3593 = vadd.f32 0.0, %v3592
        %v3594 = vpop.f32.mrb[0].mxu0
        %v3595 = vadd.f32 0.0, %v3594
        %3596 = vmatprep.mubr.bf16.mxu0 0
        %3597 = vmatmul.mubr.bf16.gmra.mrb[0].mxu0 %v3520
        %v3598 = vpop.f32.mrb[0].mxu0
        %v3599 = vadd.f32 0.0, %v3598
        %v3600 = vpop.f32.mrb[0].mxu0
        %v3601 = vadd.f32 0.0, %v3600
        %v3602 = vpop.f32.mrb[0].mxu0
        %v3603 = vadd.f32 0.0, %v3602
        %v3604 = vpop.f32.mrb[0].mxu0
        %v3605 = vadd.f32 0.0, %v3604
        %3606 = vmatprep.mubr.bf16.mxu0 0
        %3607 = vmatmul.mubr.bf16.gmra.mrb[0].mxu0 %v3523
        %v3608 = vpop.f32.mrb[0].mxu0
        %v3609 = vadd.f32 0.0, %v3608
        %v3610 = vpop.f32.mrb[0].mxu0
        %v3611 = vadd.f32 0.0, %v3610
        %v3612 = vpop.f32.mrb[0].mxu0
        %v3613 = vadd.f32 0.0, %v3612
        %v3614 = vpop.f32.mrb[0].mxu0
        %v3615 = vadd.f32 0.0, %v3614
        %3616 = vmatprep.mubr.bf16.mxu0 0
        %3617 = vmatmul.mubr.bf16.gmra.mrb[0].mxu0 %v3526
        %v3618 = vpop.f32.mrb[0].mxu0
        %v3619 = vadd.f32 0.0, %v3618
        %v3620 = vpop.f32.mrb[0].mxu0
        %v3621 = vadd.f32 0.0, %v3620
        %v3622 = vpop.f32.mrb[0].mxu0
        %v3623 = vadd.f32 0.0, %v3622
        %v3624 = vpop.f32.mrb[0].mxu0
        %v3625 = vadd.f32 0.0, %v3624
        %3626 = vmatprep.mubr.bf16.mxu0 0
        %3627 = vmatmul.mubr.bf16.gmra.mrb[0].mxu0 %v3529
        %v3628 = vpop.f32.mrb[0].mxu0
        %v3629 = vadd.f32 0.0, %v3628
        %v3630 = vpop.f32.mrb[0].mxu0
        %v3631 = vadd.f32 0.0, %v3630
        %v3632 = vpop.f32.mrb[0].mxu0
        %v3633 = vadd.f32 0.0, %v3632
        %v3634 = vpop.f32.mrb[0].mxu0
        %v3635 = vadd.f32 0.0, %v3634
        %3636 = vmatprep.mubr.bf16.mxu0 0
        %3637 = vmatmul.mubr.bf16.gmra.mrb[0].mxu0 %v3532
        %v3638 = vpop.f32.mrb[0].mxu0
        %v3639 = vadd.f32 0.0, %v3638
        %v3640 = vpop.f32.mrb[0].mxu0
        %v3641 = vadd.f32 0.0, %v3640
        %v3642 = vpop.f32.mrb[0].mxu0
        %v3643 = vadd.f32 0.0, %v3642
        %v3644 = vpop.f32.mrb[0].mxu0
        %v3645 = vadd.f32 0.0, %v3644
        %3646 = vdwg.mxu0
        %v3647 = vadd.f32 %v3149, %v3569
        %v3648 = vadd.f32 %v3150, %v3571
        %v3649 = vadd.f32 %v3151, %v3573
        %v3650 = vadd.f32 %v3152, %v3575
        %v3651 = vadd.f32 %v3153, %v3579
        %v3652 = vadd.f32 %v3154, %v3581
        %v3653 = vadd.f32 %v3155, %v3583
        %v3654 = vadd.f32 %v3156, %v3585
        %v3655 = vadd.f32 %v3157, %v3589
        %v3656 = vadd.f32 %v3158, %v3591
        %v3657 = vadd.f32 %v3159, %v3593
        %v3658 = vadd.f32 %v3160, %v3595
        %v3659 = vadd.f32 %v3161, %v3599
        %v3660 = vadd.f32 %v3162, %v3601
        %v3661 = vadd.f32 %v3163, %v3603
        %v3662 = vadd.f32 %v3164, %v3605
        %v3663 = vadd.f32 %v3165, %v3609
        %v3664 = vadd.f32 %v3166, %v3611
        %v3665 = vadd.f32 %v3167, %v3613
        %v3666 = vadd.f32 %v3168, %v3615
        %v3667 = vadd.f32 %v3169, %v3619
        %v3668 = vadd.f32 %v3170, %v3621
        %v3669 = vadd.f32 %v3171, %v3623
        %v3670 = vadd.f32 %v3172, %v3625
        %v3671 = vadd.f32 %v3173, %v3629
        %v3672 = vadd.f32 %v3174, %v3631
        %v3673 = vadd.f32 %v3175, %v3633
        %v3674 = vadd.f32 %v3176, %v3635
        %v3675 = vadd.f32 %v3177, %v3639
        %v3676 = vadd.f32 %v3178, %v3641
        %v3677 = vadd.f32 %v3179, %v3643
        %v3678 = vadd.f32 %v3180, %v3645
        %v3679 = vld [vmem:[#allocation3] sm:$0x3]
        %v3681 = vlaneseq
        %v3682 = vshrl.u32 %v3681, 7
        %v3683 = vsub.s32 0, %v3682
        %v3684 = vrot.slane %v3679, %v3683
        %v3685 = vlaneseq
        %v3686 = vshrl.u32 %v3685, 7
        %v3687 = vsub.s32 1, %v3686
        %v3688 = vrot.slane %v3679, %v3687
        %v3691 = vadd.f32 %v3647, %v3684
        %v3692 = vadd.f32 %v3648, %v3688
        %v3693 = vadd.f32 %v3649, %v3684
        %v3694 = vadd.f32 %v3650, %v3688
        %v3695 = vadd.f32 %v3651, %v3684
        %v3696 = vadd.f32 %v3652, %v3688
        %v3697 = vadd.f32 %v3653, %v3684
        %v3698 = vadd.f32 %v3654, %v3688
        %v3699 = vadd.f32 %v3655, %v3684
        %v3700 = vadd.f32 %v3656, %v3688
        %v3701 = vadd.f32 %v3657, %v3684
        %v3702 = vadd.f32 %v3658, %v3688
        %v3703 = vadd.f32 %v3659, %v3684
        %v3704 = vadd.f32 %v3660, %v3688
        %v3705 = vadd.f32 %v3661, %v3684
        %v3706 = vadd.f32 %v3662, %v3688
        %v3707 = vadd.f32 %v3663, %v3684
        %v3708 = vadd.f32 %v3664, %v3688
        %v3709 = vadd.f32 %v3665, %v3684
        %v3710 = vadd.f32 %v3666, %v3688
        %v3711 = vadd.f32 %v3667, %v3684
        %v3712 = vadd.f32 %v3668, %v3688
        %v3713 = vadd.f32 %v3669, %v3684
        %v3714 = vadd.f32 %v3670, %v3688
        %v3715 = vadd.f32 %v3671, %v3684
        %v3716 = vadd.f32 %v3672, %v3688
        %v3717 = vadd.f32 %v3673, %v3684
        %v3718 = vadd.f32 %v3674, %v3688
        %v3719 = vadd.f32 %v3675, %v3684
        %v3720 = vadd.f32 %v3676, %v3688
        %v3721 = vadd.f32 %v3677, %v3684
        %v3722 = vadd.f32 %v3678, %v3688
        %3723 = vst [vmem:[%s568] sm:$0xff] %v3691
        %3724 = vst [vmem:[%s568 + $0x8] sm:$0xff] %v3692
        %3725 = vst [vmem:[%s568 + $0x10] sm:$0xff] %v3693
        %3726 = vst [vmem:[%s568 + $0x18] sm:$0xff] %v3694
        %3727 = vst [vmem:[%s568 + $0x20] sm:$0xff] %v3695
        %3728 = vst [vmem:[%s568 + $0x28] sm:$0xff] %v3696
        %3729 = vst [vmem:[%s568 + $0x30] sm:$0xff] %v3697
        %3730 = vst [vmem:[%s568 + $0x38] sm:$0xff] %v3698
        %3731 = vst [vmem:[%s568 + $0x40] sm:$0xff] %v3699
        %3732 = vst [vmem:[%s568 + $0x48] sm:$0xff] %v3700
        %3733 = vst [vmem:[%s568 + $0x50] sm:$0xff] %v3701
        %3734 = vst [vmem:[%s568 + $0x58] sm:$0xff] %v3702
        %3735 = vst [vmem:[%s568 + $0x60] sm:$0xff] %v3703
        %3736 = vst [vmem:[%s568 + $0x68] sm:$0xff] %v3704
        %3737 = vst [vmem:[%s568 + $0x70] sm:$0xff] %v3705
        %3738 = vst [vmem:[%s568 + $0x78] sm:$0xff] %v3706
        %3739 = vst [vmem:[%s568 + $0x80] sm:$0xff] %v3707
        %3740 = vst [vmem:[%s568 + $0x88] sm:$0xff] %v3708
        %3741 = vst [vmem:[%s568 + $0x90] sm:$0xff] %v3709
        %3742 = vst [vmem:[%s568 + $0x98] sm:$0xff] %v3710
        %3743 = vst [vmem:[%s568 + $0xa0] sm:$0xff] %v3711
        %3744 = vst [vmem:[%s568 + $0xa8] sm:$0xff] %v3712
        %3745 = vst [vmem:[%s568 + $0xb0] sm:$0xff] %v3713
        %3746 = vst [vmem:[%s568 + $0xb8] sm:$0xff] %v3714
        %3747 = vst [vmem:[%s568 + $0xc0] sm:$0xff] %v3715
        %3748 = vst [vmem:[%s568 + $0xc8] sm:$0xff] %v3716
        %3749 = vst [vmem:[%s568 + $0xd0] sm:$0xff] %v3717
        %3750 = vst [vmem:[%s568 + $0xd8] sm:$0xff] %v3718
        %3751 = vst [vmem:[%s568 + $0xe0] sm:$0xff] %v3719
        %3752 = vst [vmem:[%s568 + $0xe8] sm:$0xff] %v3720
        %3753 = vst [vmem:[%s568 + $0xf0] sm:$0xff] %v3721
        %3754 = vst [vmem:[%s568 + $0xf8] sm:$0xff] %v3722
        %v3755 = vadd.f32 %v3691, %v3693
        %v3756 = vadd.f32 %v3755, %v3695
        %v3757 = vadd.f32 %v3756, %v3697
        %v3758 = vadd.f32 %v3757, %v3699
        %v3759 = vadd.f32 %v3758, %v3701
        %v3760 = vadd.f32 %v3759, %v3703
        %v3761 = vadd.f32 %v3760, %v3705
        %v3762 = vadd.f32 %v3761, %v3707
        %v3763 = vadd.f32 %v3762, %v3709
        %v3764 = vadd.f32 %v3763, %v3711
        %v3765 = vadd.f32 %v3764, %v3713
        %v3766 = vadd.f32 %v3765, %v3715
        %v3767 = vadd.f32 %v3766, %v3717
        %v3768 = vadd.f32 %v3767, %v3719
        %v3769 = vadd.f32 %v3768, %v3721
        %v3770 = vrot.slane %v3769, 4
        %v3771 = vadd.f32 %v3769, %v3770
        %v3772 = vrot.slane %v3771, 2
        %v3773 = vadd.f32 %v3771, %v3772
        %v3774 = vrot.slane %v3773, 1
        %v3775 = vadd.f32 %v3773, %v3774
        %v3776 = vadd.f32 %v3692, %v3694
        %v3777 = vadd.f32 %v3776, %v3696
        %v3778 = vadd.f32 %v3777, %v3698
        %v3779 = vadd.f32 %v3778, %v3700
        %v3780 = vadd.f32 %v3779, %v3702
        %v3781 = vadd.f32 %v3780, %v3704
        %v3782 = vadd.f32 %v3781, %v3706
        %v3783 = vadd.f32 %v3782, %v3708
        %v3784 = vadd.f32 %v3783, %v3710
        %v3785 = vadd.f32 %v3784, %v3712
        %v3786 = vadd.f32 %v3785, %v3714
        %v3787 = vadd.f32 %v3786, %v3716
        %v3788 = vadd.f32 %v3787, %v3718
        %v3789 = vadd.f32 %v3788, %v3720
        %v3790 = vadd.f32 %v3789, %v3722
        %v3791 = vrot.slane %v3790, 4
        %v3792 = vadd.f32 %v3790, %v3791
        %v3793 = vrot.slane %v3792, 2
        %v3794 = vadd.f32 %v3792, %v3793
        %v3795 = vrot.slane %v3794, 1
        %v3796 = vadd.f32 %v3794, %v3795
        %v3797 = vmul.f32 %v3691, %v3691
        %v3798 = vmul.f32 %v3692, %v3692
        %v3799 = vmul.f32 %v3693, %v3693
        %v3800 = vmul.f32 %v3694, %v3694
        %v3801 = vmul.f32 %v3695, %v3695
        %v3802 = vmul.f32 %v3696, %v3696
        %v3803 = vmul.f32 %v3697, %v3697
        %v3804 = vmul.f32 %v3698, %v3698
        %v3805 = vmul.f32 %v3699, %v3699
        %v3806 = vmul.f32 %v3700, %v3700
        %v3807 = vmul.f32 %v3701, %v3701
        %v3808 = vmul.f32 %v3702, %v3702
        %v3809 = vmul.f32 %v3703, %v3703
        %v3810 = vmul.f32 %v3704, %v3704
        %v3811 = vmul.f32 %v3705, %v3705
        %v3812 = vmul.f32 %v3706, %v3706
        %v3813 = vmul.f32 %v3707, %v3707
        %v3814 = vmul.f32 %v3708, %v3708
        %v3815 = vmul.f32 %v3709, %v3709
        %v3816 = vmul.f32 %v3710, %v3710
        %v3817 = vmul.f32 %v3711, %v3711
        %v3818 = vmul.f32 %v3712, %v3712
        %v3819 = vmul.f32 %v3713, %v3713
        %v3820 = vmul.f32 %v3714, %v3714
        %v3821 = vmul.f32 %v3715, %v3715
        %v3822 = vmul.f32 %v3716, %v3716
        %v3823 = vmul.f32 %v3717, %v3717
        %v3824 = vmul.f32 %v3718, %v3718
        %v3825 = vmul.f32 %v3719, %v3719
        %v3826 = vmul.f32 %v3720, %v3720
        %v3827 = vmul.f32 %v3721, %v3721
        %v3828 = vmul.f32 %v3722, %v3722
        %v3829 = vadd.f32 %v3797, %v3799
        %v3830 = vadd.f32 %v3829, %v3801
        %v3831 = vadd.f32 %v3830, %v3803
        %v3832 = vadd.f32 %v3831, %v3805
        %v3833 = vadd.f32 %v3832, %v3807
        %v3834 = vadd.f32 %v3833, %v3809
        %v3835 = vadd.f32 %v3834, %v3811
        %v3836 = vadd.f32 %v3835, %v3813
        %v3837 = vadd.f32 %v3836, %v3815
        %v3838 = vadd.f32 %v3837, %v3817
        %v3839 = vadd.f32 %v3838, %v3819
        %v3840 = vadd.f32 %v3839, %v3821
        %v3841 = vadd.f32 %v3840, %v3823
        %v3842 = vadd.f32 %v3841, %v3825
        %v3843 = vadd.f32 %v3842, %v3827
        %v3844 = vrot.slane %v3843, 4
        %v3845 = vadd.f32 %v3843, %v3844
        %v3846 = vrot.slane %v3845, 2
        %v3847 = vadd.f32 %v3845, %v3846
        %v3848 = vrot.slane %v3847, 1
        %v3849 = vadd.f32 %v3847, %v3848
        %v3850 = vadd.f32 %v3798, %v3800
        %v3851 = vadd.f32 %v3850, %v3802
        %v3852 = vadd.f32 %v3851, %v3804
        %v3853 = vadd.f32 %v3852, %v3806
        %v3854 = vadd.f32 %v3853, %v3808
        %v3855 = vadd.f32 %v3854, %v3810
        %v3856 = vadd.f32 %v3855, %v3812
        %v3857 = vadd.f32 %v3856, %v3814
        %v3858 = vadd.f32 %v3857, %v3816
        %v3859 = vadd.f32 %v3858, %v3818
        %v3860 = vadd.f32 %v3859, %v3820
        %v3861 = vadd.f32 %v3860, %v3822
        %v3862 = vadd.f32 %v3861, %v3824
        %v3863 = vadd.f32 %v3862, %v3826
        %v3864 = vadd.f32 %v3863, %v3828
        %v3865 = vrot.slane %v3864, 4
        %v3866 = vadd.f32 %v3864, %v3865
        %v3867 = vrot.slane %v3866, 2
        %v3868 = vadd.f32 %v3866, %v3867
        %v3869 = vrot.slane %v3868, 1
        %v3870 = vadd.f32 %v3868, %v3869
        %vm3871 = vcmask 1040384
        %v3872 = vsel %vm3871, %v3775, %v3849
        %v3873 = vsel %vm3871, %v3796, %v3870
        %v3876 = vcombine.low %v3872, %v3873
        %v3878 = vunpack.c.l.s4 1983009808
        %v3879 = vunpack.c.0.s8 %v3878
        %v3880 = vlaneseq
        %v3881 = vshrl.u32 %v3880, 7
        %v3882 = vsub.s32 %v3879, %v3881
        %v3883 = vrot.slane %v3876, %v3882
        %3885 = vst [vmem:[%s579] sm:$0xf] %v3883
        %s3886 = sadd.s32 %s21, %s22
        %s3887 = smul.u32 16, %s3886
        %p3888 = scmp.lt.s32.totalorder %s3887, 31
        %s3889 = scalar_select %p3888, %s3887, 31
        %s3890 = smul.addr %s3889, 2
        %s3891 = smul.addr %s3890, 8
        %s3892 = scalar_lea.vmem %s3, %s3891
        %p3893 = scmp.lt.s32.totalorder %s21, 1
        %s3894 = scalar_select %p3893, %s21, 1
        %p3895 = scmp.lt.s32.totalorder %s22, 0
        %s3896 = scalar_select %p3895, %s22, 0
        %s3897 = smul.addr %s3896, 2
        %s3898 = smul.addr %s3894, 2
        %s3899 = sadd.s32 %s3897, %s3898
        %s3900 = smul.addr %s3899, 2
        %s3901 = scalar_lea.vmem %s4, %s3900
        // Predicated region
        $region78: #{subpixel_conv_block.2} parent=68 // pred_check
          %p3902 = pneg %p117
        $region79: #{subpixel_conv_block.2} parent=68 // pred_check_branch
          %3904 = sbr.rel (%p3902) target = $region81
        $region80: #{subpixel_conv_block.2} parent=68 // pred_region
          %s3905 = sadd.s32 %s21, %s22
          %s3906 = smul.u32 16, %s3905
        $region81: #{subpixel_conv_block.2} parent=68 // pred_fallthru
          _
        // Predicated region
        $region82: #{subpixel_conv_block.2} parent=68 // pred_check
          %p3907 = pneg %p145
        $region83: #{subpixel_conv_block.2} parent=68 // pred_check_branch
          %3909 = sbr.rel (%p3907) target = $region85
        $region84: #{subpixel_conv_block.2} parent=68 // pred_region
          _
        $region85: #{subpixel_conv_block.2} parent=68 // pred_fallthru
          _
      $region69: #{subpixel_conv_block.2} parent=5 // pred_fallthru
        _
      %p3910 = scmp.le.s32.totalorder 2, %s12
      // Predicated region
      $region86: #{subpixel_conv_block.2} parent=5 // pred_check
        %p3911 = pneg %p3910
      $region87: #{subpixel_conv_block.2} parent=5 // pred_check_branch
        %3913 = sbr.rel (%p3911) target = $region89
      $region88: #{subpixel_conv_block.2} parent=5 // pred_region
        %s3914 = ssub.s32 %s12, 2
        // Predicated region
        $region90: #{subpixel_conv_block.2} parent=88 // pred_check
          %p3915 = pneg %p123
        $region91: #{subpixel_conv_block.2} parent=88 // pred_check_branch
          %3917 = sbr.rel (%p3915) target = $region93
        $region92: #{subpixel_conv_block.2} parent=88 // pred_region
          %s3918 = sadd.s32 %s23, %s24
          %s3919 = smul.u32 16, %s3918
          %p3920 = scmp.lt.s32.totalorder %s3919, 31
          %s3921 = scalar_select %p3920, %s3919, 31
          %s3922 = smul.addr %s3921, 2
          %s3923 = smul.addr %s3922, 8
          %s3924 = scalar_lea.vmem %s3, %s3923
        $region93: #{subpixel_conv_block.2} parent=88 // pred_fallthru
          _
        // Predicated region
        $region94: #{subpixel_conv_block.2} parent=88 // pred_check
          %p3925 = pneg %p151
        $region95: #{subpixel_conv_block.2} parent=88 // pred_check_branch
          %3927 = sbr.rel (%p3925) target = $region97
        $region96: #{subpixel_conv_block.2} parent=88 // pred_region
          %p3928 = scmp.lt.s32.totalorder %s23, 1
          %s3929 = scalar_select %p3928, %s23, 1
          %p3930 = scmp.lt.s32.totalorder %s24, 0
          %s3931 = scalar_select %p3930, %s24, 0
          %s3932 = smul.addr %s3931, 2
          %s3933 = smul.addr %s3929, 2
          %s3934 = sadd.s32 %s3932, %s3933
          %s3935 = smul.addr %s3934, 2
          %s3936 = scalar_lea.vmem %s4, %s3935
        $region97: #{subpixel_conv_block.2} parent=88 // pred_fallthru
          _
      $region89: #{subpixel_conv_block.2} parent=5 // pred_fallthru
        _
    $region6: #{subpixel_conv_block.2} parent=1 // loop_footer
      %s16 = sadd.s32 1, %s12
    $region7: #{subpixel_conv_block.2} parent=1 // loop_footer_branch
      %11 = sbr.rel target = $region3
    $region8: #{subpixel_conv_block.2} parent=1 // loop_exit
      _
    %3937 = vsyncpa [#allocation4], 1
    %s3938 = scalar_lea.sflag [#allocation4], 1
    %3939 = vsyncpa %s3938, 1

</llo_original>
